<compile_context>
chip_gen: v5e
topology: v5e:2x2
jax: 0.10.0
libtpu: 0.0.40
codegen_flags: <defaults>
</compile_context>

<pallas_src>
import functools

import jax
import jax.numpy as jnp
import numpy as np
from jax import lax
from jax.experimental import pallas as pl
from jax.experimental.pallas import tpu as pltpu

UPDATE_LR = 0.01     # args['update_lr']
CLIP_NORM = 10.0     # clip_grad(norm=10)


def _align8(n):
    return ((n + 7) // 8) * 8


# ------------------------------------------------------------ kernel pieces ---

def _mlp_forward(x, w1, b1, w2, b2, w3, b3):
    """Din -> H -> H -> 1 ReLU MLP.  w1/w2 are (in, out); w3 is a (1, H) row."""
    z1 = jnp.dot(x, w1, preferred_element_type=jnp.float32) + b1     # (N, H)
    h1 = jnp.maximum(z1, 0.0)
    z2 = jnp.dot(h1, w2, preferred_element_type=jnp.float32) + b2    # (N, H)
    h2 = jnp.maximum(z2, 0.0)
    pred = jnp.sum(h2 * w3, axis=-1, keepdims=True) + b3             # (N, 1)
    return z1, h1, z2, h2, pred


def _mse11(pred, y):
    """F.mse_loss (mean reduction), returned as a (1, 1) array."""
    diff = pred - y
    inv_n = 1.0 / float(pred.shape[0] * pred.shape[1])
    return jnp.sum(diff * diff, keepdims=True) * inv_n


def _clip(g):
    # MetaLearnerRegression.clip_grad as two nested selects, preserving the
    # masked-multiply quirk |g| == CLIP_NORM -> 0 of the original source.
    g = jnp.where(g < CLIP_NORM, g, jnp.where(g > CLIP_NORM, CLIP_NORM, 0.0))
    g = jnp.where(g > -CLIP_NORM, g, jnp.where(g < -CLIP_NORM, -CLIP_NORM, 0.0))
    return g


def _inner_step(x, y, params):
    """Forward + MSE + manual backprop + clip_grad + SGD inner_update."""
    w1, b1, w2, b2, w3, b3 = params
    z1, h1, z2, h2, pred = _mlp_forward(x, w1, b1, w2, b2, w3, b3)

    diff = pred - y                                              # (N, 1)
    dpred = (2.0 / float(pred.shape[0] * pred.shape[1])) * diff  # d mean-MSE

    dW3 = jnp.sum(dpred * h2, axis=0, keepdims=True)             # (1, H)
    db3 = jnp.sum(dpred, axis=0, keepdims=True)                  # (1, 1)
    dh2 = dpred * w3                                             # (N, H)
    dz2 = jnp.where(z2 > 0.0, dh2, 0.0)
    dW2 = lax.dot_general(h1, dz2, (((0,), (0,)), ((), ())),
                          preferred_element_type=jnp.float32)    # (H, H) (in,out)
    db2 = jnp.sum(dz2, axis=0, keepdims=True)                    # (1, H)
    dh1 = lax.dot_general(dz2, w2, (((1,), (1,)), ((), ())),
                          preferred_element_type=jnp.float32)    # (N, H)
    dz1 = jnp.where(z1 > 0.0, dh1, 0.0)
    dW1 = lax.dot_general(x, dz1, (((0,), (0,)), ((), ())),
                          preferred_element_type=jnp.float32)    # (Din, H) (in,out)
    db1 = jnp.sum(dz1, axis=0, keepdims=True)                    # (1, H)

    # inner_update: p - update_lr * clipped_grad
    return (w1 - UPDATE_LR * _clip(dW1),
            b1 - UPDATE_LR * _clip(db1),
            w2 - UPDATE_LR * _clip(dW2),
            b2 - UPDATE_LR * _clip(db2),
            w3 - UPDATE_LR * _clip(dW3),
            b3 - UPDATE_LR * _clip(db3))


# --------------------------------------------------------------- fused kernel ---

def meta_forward_kernel(params_ref, data_ref, first_ref, final_ref, *,
                        n_steps, n_sup, n_qry, din, hidden,
                        off_b1, off_w2, off_b2, off_w3, off_b3):
    """One task per grid step: K fused inner SGD steps + both query evals.

    params_ref : (ROWS, H) packed slow weights, (in, out) layout, 8-row aligned.
    data_ref   : (1, K*N + M, Din+1) packed [x | y] rows for this task.
    first_ref, final_ref : (1, 1, 1) per-task loss outputs.
    """
    # ---- unpack slow weights (small aligned loads from one packed slab) -----
    w1 = params_ref[0:din, :]                          # (Din, H)
    b1 = params_ref[off_b1:off_b1 + 1, :]              # (1, H)
    w2 = params_ref[off_w2:off_w2 + hidden, :]         # (H, H)
    b2 = params_ref[off_b2:off_b2 + 1, :]              # (1, H)
    w3 = params_ref[off_w3:off_w3 + 1, :]              # (1, H)
    b3 = params_ref[off_b3:off_b3 + 1, 0:1]            # (1, 1)

    q0 = n_steps * n_sup
    xq = data_ref[0, q0:q0 + n_qry, 0:din]             # (M, Din)
    yq = data_ref[0, q0:q0 + n_qry, din:din + 1]       # (M, 1) == y_rand[0,:,0:1]

    # first_loss: query MSE with the slow weights (the torch.no_grad branch).
    pred_q0 = _mlp_forward(xq, w1, b1, w2, b2, w3, b3)[-1]
    first_ref[0] = _mse11(pred_q0, yq)

    # K inner SGD steps; fast weights stay resident in vregs/VMEM for the whole
    # trajectory (K is small & static -> trace-time unroll).
    # TODO(synk): switch to lax.fori_loop carrying the params tuple if K grows
    # beyond a handful of steps (vreg pressure / compile time).
    fast = (w1, b1, w2, b2, w3, b3)
    for k in range(n_steps):
        xk = data_ref[0, k * n_sup:(k + 1) * n_sup, 0:din]
        yk = data_ref[0, k * n_sup:(k + 1) * n_sup, din:din + 1]
        fast = _inner_step(xk, yk, fast)

    # final meta loss on the query set with the final fast weights.
    pred_qf = _mlp_forward(xq, *fast)[-1]
    final_ref[0] = _mse11(pred_qf, yq)


# ------------------------------------------------------------------- wrapper ---

def _pack_params(params, din, hidden):
    """Pack the 6 PyTorch-layout tensors into one (ROWS, H) slab.

    Weights are pre-transposed to (in, out) layout so every forward matmul uses
    the MXU-natural contraction; each tensor starts at an 8-row-aligned offset.
    """
    w1, b1, w2, b2, w3, b3 = params
    off_b1 = _align8(din)
    off_w2 = off_b1 + 8
    off_b2 = off_w2 + _align8(hidden)
    off_w3 = off_b2 + 8
    off_b3 = off_w3 + 8
    rows = off_b3 + 8

    slab = jnp.zeros((rows, hidden), jnp.float32)
    slab = slab.at[0:din, :].set(w1.T.astype(jnp.float32))                 # (Din, H)
    slab = slab.at[off_b1, :].set(b1.reshape(hidden).astype(jnp.float32))
    slab = slab.at[off_w2:off_w2 + hidden, :].set(w2.T.astype(jnp.float32))
    slab = slab.at[off_b2, :].set(b2.reshape(hidden).astype(jnp.float32))
    slab = slab.at[off_w3, :].set(w3.reshape(hidden).astype(jnp.float32))
    slab = slab.at[off_b3, 0].set(b3.reshape(()).astype(jnp.float32))
    return slab, (off_b1, off_w2, off_b2, off_w3, off_b3, rows)


def _pack_data(x_traj, y_traj, x_rand, y_rand):
    """Per task: K*N support rows then M query rows, each row = [x | y]."""
    B, K, N, Din = x_traj.shape
    M = x_rand.shape[2]
    sup = jnp.concatenate(
        [x_traj.reshape(B, K * N, Din),
         y_traj[..., 0:1].reshape(B, K * N, 1)], axis=-1)
    qry = jnp.concatenate(
        [x_rand.reshape(B, M, Din),
         y_rand[..., 0:1].reshape(B, M, 1)], axis=-1)
    return jnp.concatenate([sup, qry], axis=1).astype(jnp.float32)  # (B, K*N+M, Din+1)


def _batched_forward(x_traj, y_traj, x_rand, y_rand, params):
    B, K, N, Din = x_traj.shape
    M = x_rand.shape[2]
    H = params[0].shape[0]
    T = K * N + M

    params_slab, offs = _pack_params(params, Din, H)
    off_b1, off_w2, off_b2, off_w3, off_b3, rows = offs
    data_slab = _pack_data(x_traj, y_traj, x_rand, y_rand)

    kernel = functools.partial(
        meta_forward_kernel,
        n_steps=K, n_sup=N, n_qry=M, din=Din, hidden=H,
        off_b1=off_b1, off_w2=off_w2, off_b2=off_b2,
        off_w3=off_w3, off_b3=off_b3)

    # Rough-but-useful scheduling hint for XLA around this micro-kernel.
    fwd = 2 * N * Din * H + 2 * N * H * H + 4 * N * H
    bwd = 4 * N * H * H + 2 * N * Din * H + 10 * N * H
    cost = pl.CostEstimate(
        flops=B * ((K + 2) * fwd + K * bwd),
        transcendentals=0,
        bytes_accessed=4 * (rows * H + B * T * (Din + 1) + 2 * B))

    loss_spec = pl.BlockSpec((1, 1, 1), lambda b: (b, 0, 0))
    first, final = pl.pallas_call(
        kernel,
        grid=(B,),
        in_specs=[
            # Slow weights: constant block index -> fetched into VMEM once.
            pl.BlockSpec((rows, H), lambda b: (0, 0)),
            # Per-task packed data: one small DMA per grid step.
            pl.BlockSpec((1, T, Din + 1), lambda b: (b, 0, 0)),
        ],
        out_specs=(loss_spec, loss_spec),
        out_shape=(jax.ShapeDtypeStruct((B, 1, 1), jnp.float32),
                   jax.ShapeDtypeStruct((B, 1, 1), jnp.float32)),
        compiler_params=pltpu.CompilerParams(
            dimension_semantics=("parallel",)),   # v7x: shard tasks over 2 TCs
        cost_estimate=cost,
    )(params_slab, data_slab)
    return first[:, 0, 0], final[:, 0, 0]


@jax.jit
def meta_learner_regression_forward(x_traj, y_traj, x_rand, y_rand, params):
    """MetaLearnerRegression.forward -> (first_loss, final_meta_loss).

    Single task (original signature): x_traj (K,N,Din), y_traj (K,N,Dy),
    x_rand (1,M,Din), y_rand (1,M,Dy) -> two scalars.
    Batched: add a leading task dim B to all four tensors -> two (B,) arrays.
    """
    if x_traj.ndim == 3:
        first, final = _batched_forward(
            x_traj[None], y_traj[None], x_rand[None], y_rand[None], params)
        return first[0], final[0]
    return _batched_forward(x_traj, y_traj, x_rand, y_rand, params)


# --------------------------------------------------------------- reference ----

def _reference_forward_single(x_traj, y_traj, x_rand, y_rand, params):
    """Pure-JAX/autodiff reference of MetaLearnerRegression.forward (one task)."""
    def net(p, x):
        w1, b1, w2, b2, w3, b3 = p
        h1 = jnp.maximum(x @ w1.T + b1, 0.0)
        h2 = jnp.maximum(h1 @ w2.T + b2, 0.0)
        return h2 @ w3.T + b3

    def loss_fn(p, x, y):
        return jnp.mean((net(p, x) - y) ** 2)

    def clip(g):
        g = g * (g < CLIP_NORM).astype(jnp.float32) \
            + (g > CLIP_NORM).astype(jnp.float32) * CLIP_NORM
        g = g * (g > -CLIP_NORM).astype(jnp.float32) \
            - (g < -CLIP_NORM).astype(jnp.float32) * CLIP_NORM
        return g

    xq, yq = x_rand[0], y_rand[0, :, 0:1]
    first_loss = loss_fn(params, xq, yq)
    fast = params
    for k in range(x_traj.shape[0]):
        grads = jax.grad(loss_fn)(fast, x_traj[k], y_traj[k, :, 0:1])
        fast = tuple(p - UPDATE_LR * clip(g) for p, g in zip(fast, grads))
    final_loss = loss_fn(fast, xq, yq)
    return first_loss, final_loss


def init_params(key, din, hidden):
    """PyTorch nn.Linear-layout parameters: W is (out_features, in_features)."""
    k1, k2, k3 = jax.random.split(key, 3)
    w1 = jax.random.normal(k1, (hidden, din), jnp.float32) * jnp.sqrt(2.0 / din)
    b1 = jnp.zeros((1, hidden), jnp.float32)
    w2 = jax.random.normal(k2, (hidden, hidden), jnp.float32) * jnp.sqrt(2.0 / hidden)
    b2 = jnp.zeros((1, hidden), jnp.float32)
    w3 = jax.random.normal(k3, (1, hidden), jnp.float32) * jnp.sqrt(2.0 / hidden)
    b3 = jnp.zeros((1, 1), jnp.float32)
    return (w1, b1, w2, b2, w3, b3)


# ---------------------------------------------------------------------- main ---

if __name__ == "__main__":
    B, K, N, DIN, H, M = 8, 4, 8, 16, 32, 8

    key = jax.random.PRNGKey(0)
    kp, kx, ky, kqx, kqy = jax.random.split(key, 5)

    params = init_params(kp, DIN, H)
    x_traj = jax.random.normal(kx, (B, K, N, DIN), jnp.float32)
    y_traj = jax.random.normal(ky, (B, K, N, 1), jnp.float32)
    x_rand = jax.random.normal(kqx, (B, 1, M, DIN), jnp.float32)
    y_rand = jax.random.normal(kqy, (B, 1, M, 1), jnp.float32)

    first, final = meta_learner_regression_forward(
        x_traj, y_traj, x_rand, y_rand, params)
    jax.block_until_ready((first, final))

    # Tolerance-based check against a pure-JAX autodiff reference.
    ref_first, ref_final = jax.jit(jax.vmap(
        _reference_forward_single, in_axes=(0, 0, 0, 0, None)))(
        x_traj, y_traj, x_rand, y_rand, params)
    np.testing.assert_allclose(np.asarray(first), np.asarray(ref_first),
                               rtol=1e-2, atol=1e-3)
    np.testing.assert_allclose(np.asarray(final), np.asarray(ref_final),
                               rtol=1e-2, atol=1e-3)

    print("KERNEL_OK")
</pallas_src>

<mosaic_0001>
module attributes {stable_mosaic.version = 11 : i64} {
  func.func @meta_forward_kernel(%arg0: i32, %arg1: memref<80x32xf32, #tpu.memory_space<vmem>>, %arg2: memref<1x40x17xf32, #tpu.memory_space<vmem>>, %arg3: memref<1x1x1xf32, #tpu.memory_space<vmem>>, %arg4: memref<1x1x1xf32, #tpu.memory_space<vmem>>) attributes {dimension_semantics = [#tpu.dimension_semantics<parallel>], iteration_bounds = array<i64: 8>, scalar_prefetch = 0 : i64, scratch_operands = 0 : i64, tpu.core_type = #tpu.core_type<tc>, window_params = [{pipeline_mode = #tpu.pipeline_mode<synchronous>, transform_indices = @transform_0, window_bounds = array<i64: 80, 32>}, {transform_indices = @transform_1, window_bounds = array<i64: 1, 40, 17>}, {transform_indices = @transform_2, window_bounds = array<i64: 1, 1, 1>}, {transform_indices = @transform_3, window_bounds = array<i64: 1, 1, 1>}]} {
    %c0 = arith.constant 0 : index
    %c0_0 = arith.constant 0 : index
    %0 = vector.load %arg1[%c0, %c0_0] : memref<80x32xf32, #tpu.memory_space<vmem>>, vector<16x32xf32>
    %c16 = arith.constant 16 : index
    %c0_1 = arith.constant 0 : index
    %1 = vector.load %arg1[%c16, %c0_1] : memref<80x32xf32, #tpu.memory_space<vmem>>, vector<1x32xf32>
    %c24 = arith.constant 24 : index
    %c0_2 = arith.constant 0 : index
    %2 = vector.load %arg1[%c24, %c0_2] : memref<80x32xf32, #tpu.memory_space<vmem>>, vector<32x32xf32>
    %c56 = arith.constant 56 : index
    %c0_3 = arith.constant 0 : index
    %3 = vector.load %arg1[%c56, %c0_3] : memref<80x32xf32, #tpu.memory_space<vmem>>, vector<1x32xf32>
    %c64 = arith.constant 64 : index
    %c0_4 = arith.constant 0 : index
    %4 = vector.load %arg1[%c64, %c0_4] : memref<80x32xf32, #tpu.memory_space<vmem>>, vector<1x32xf32>
    %c72 = arith.constant 72 : index
    %c0_5 = arith.constant 0 : index
    %5 = vector.load %arg1[%c72, %c0_5] : memref<80x32xf32, #tpu.memory_space<vmem>>, vector<1x1xf32>
    %c0_6 = arith.constant 0 : index
    %c32 = arith.constant 32 : index
    %c0_7 = arith.constant 0 : index
    %6 = vector.load %arg2[%c0_6, %c32, %c0_7] : memref<1x40x17xf32, #tpu.memory_space<vmem>>, vector<1x8x16xf32>
    %7 = vector.shape_cast %6 : vector<1x8x16xf32> to vector<8x16xf32>
    %c0_8 = arith.constant 0 : index
    %c32_9 = arith.constant 32 : index
    %c16_10 = arith.constant 16 : index
    %8 = vector.load %arg2[%c0_8, %c32_9, %c16_10] : memref<1x40x17xf32, #tpu.memory_space<vmem>>, vector<1x8x1xf32>
    %9 = vector.shape_cast %8 : vector<1x8x1xf32> to vector<8x1xf32>
    %cst = arith.constant dense<0.000000e+00> : vector<8x32xf32>
    %10 = tpu.matmul %7, %0, %cst {dimension_numbers = #tpu.dot_dimension_numbers<[1], [0], [0], [1], [0, 0, 1, 1], [], []>} : vector<8x16xf32>, vector<16x32xf32>, vector<8x32xf32> -> vector<8x32xf32>
    %11 = vector.broadcast %1 : vector<1x32xf32> to vector<8x32xf32>
    %12 = arith.addf %10, %11 : vector<8x32xf32>
    %cst_11 = arith.constant 0.000000e+00 : f32
    %13 = vector.broadcast %cst_11 : f32 to vector<8x32xf32>
    %14 = arith.maximumf %12, %13 : vector<8x32xf32>
    %cst_12 = arith.constant dense<0.000000e+00> : vector<8x32xf32>
    %15 = tpu.matmul %14, %2, %cst_12 {dimension_numbers = #tpu.dot_dimension_numbers<[1], [0], [0], [1], [0, 0, 1, 1], [], []>} : vector<8x32xf32>, vector<32x32xf32>, vector<8x32xf32> -> vector<8x32xf32>
    %16 = vector.broadcast %3 : vector<1x32xf32> to vector<8x32xf32>
    %17 = arith.addf %15, %16 : vector<8x32xf32>
    %cst_13 = arith.constant 0.000000e+00 : f32
    %18 = vector.broadcast %cst_13 : f32 to vector<8x32xf32>
    %19 = arith.maximumf %17, %18 : vector<8x32xf32>
    %20 = vector.broadcast %4 : vector<1x32xf32> to vector<8x32xf32>
    %21 = arith.mulf %19, %20 : vector<8x32xf32>
    %cst_14 = arith.constant dense<0.000000e+00> : vector<8xf32>
    %22 = vector.multi_reduction <add>, %21, %cst_14 [1] : vector<8x32xf32> to vector<8xf32>
    %23 = vector.shape_cast %22 : vector<8xf32> to vector<8x1xf32>
    %24 = vector.broadcast %5 : vector<1x1xf32> to vector<8x1xf32>
    %25 = arith.addf %23, %24 : vector<8x1xf32>
    %26 = arith.subf %25, %9 : vector<8x1xf32>
    %27 = arith.mulf %26, %26 : vector<8x1xf32>
    %28 = vector.shape_cast %27 : vector<8x1xf32> to vector<1x8x1xf32>
    %cst_15 = arith.constant dense<0.000000e+00> : vector<1xf32>
    %29 = vector.multi_reduction <add>, %28, %cst_15 [1, 2] : vector<1x8x1xf32> to vector<1xf32>
    %30 = vector.shape_cast %29 : vector<1xf32> to vector<1x1x1xf32>
    %31 = vector.extract %30[0, 0, 0] : f32 from vector<1x1x1xf32>
    %32 = vector.broadcast %31 : f32 to vector<1x1xf32>
    %cst_16 = arith.constant 1.250000e-01 : f32
    %33 = vector.broadcast %cst_16 : f32 to vector<1x1xf32>
    %34 = arith.mulf %32, %33 : vector<1x1xf32>
    %c0_17 = arith.constant 0 : index
    %c0_18 = arith.constant 0 : index
    %c0_19 = arith.constant 0 : index
    %35 = vector.load %arg3[%c0_17, %c0_18, %c0_19] : memref<1x1x1xf32, #tpu.memory_space<vmem>>, vector<1x1x1xf32>
    %36 = vector.shape_cast %35 : vector<1x1x1xf32> to vector<1x1xf32>
    %37 = vector.shape_cast %34 : vector<1x1xf32> to vector<1x1x1xf32>
    tpu.vector_store %arg3[%c0_17, %c0_18, %c0_19], %37 {strides = array<i32>} : memref<1x1x1xf32, #tpu.memory_space<vmem>>, vector<1x1x1xf32>,
    %c0_20 = arith.constant 0 : index
    %c0_21 = arith.constant 0 : index
    %c0_22 = arith.constant 0 : index
    %38 = vector.load %arg2[%c0_20, %c0_21, %c0_22] : memref<1x40x17xf32, #tpu.memory_space<vmem>>, vector<1x8x16xf32>
    %39 = vector.shape_cast %38 : vector<1x8x16xf32> to vector<8x16xf32>
    %c0_23 = arith.constant 0 : index
    %c0_24 = arith.constant 0 : index
    %c16_25 = arith.constant 16 : index
    %40 = vector.load %arg2[%c0_23, %c0_24, %c16_25] : memref<1x40x17xf32, #tpu.memory_space<vmem>>, vector<1x8x1xf32>
    %41 = vector.shape_cast %40 : vector<1x8x1xf32> to vector<8x1xf32>
    %cst_26 = arith.constant dense<0.000000e+00> : vector<8x32xf32>
    %42 = tpu.matmul %39, %0, %cst_26 {dimension_numbers = #tpu.dot_dimension_numbers<[1], [0], [0], [1], [0, 0, 1, 1], [], []>} : vector<8x16xf32>, vector<16x32xf32>, vector<8x32xf32> -> vector<8x32xf32>
    %43 = vector.broadcast %1 : vector<1x32xf32> to vector<8x32xf32>
    %44 = arith.addf %42, %43 : vector<8x32xf32>
    %cst_27 = arith.constant 0.000000e+00 : f32
    %45 = vector.broadcast %cst_27 : f32 to vector<8x32xf32>
    %46 = arith.maximumf %44, %45 : vector<8x32xf32>
    %cst_28 = arith.constant dense<0.000000e+00> : vector<8x32xf32>
    %47 = tpu.matmul %46, %2, %cst_28 {dimension_numbers = #tpu.dot_dimension_numbers<[1], [0], [0], [1], [0, 0, 1, 1], [], []>} : vector<8x32xf32>, vector<32x32xf32>, vector<8x32xf32> -> vector<8x32xf32>
    %48 = vector.broadcast %3 : vector<1x32xf32> to vector<8x32xf32>
    %49 = arith.addf %47, %48 : vector<8x32xf32>
    %cst_29 = arith.constant 0.000000e+00 : f32
    %50 = vector.broadcast %cst_29 : f32 to vector<8x32xf32>
    %51 = arith.maximumf %49, %50 : vector<8x32xf32>
    %52 = vector.broadcast %4 : vector<1x32xf32> to vector<8x32xf32>
    %53 = arith.mulf %51, %52 : vector<8x32xf32>
    %cst_30 = arith.constant dense<0.000000e+00> : vector<8xf32>
    %54 = vector.multi_reduction <add>, %53, %cst_30 [1] : vector<8x32xf32> to vector<8xf32>
    %55 = vector.shape_cast %54 : vector<8xf32> to vector<8x1xf32>
    %56 = vector.broadcast %5 : vector<1x1xf32> to vector<8x1xf32>
    %57 = arith.addf %55, %56 : vector<8x1xf32>
    %58 = arith.subf %57, %41 : vector<8x1xf32>
    %cst_31 = arith.constant 2.500000e-01 : f32
    %59 = vector.broadcast %cst_31 : f32 to vector<8x1xf32>
    %60 = arith.mulf %59, %58 : vector<8x1xf32>
    %61 = vector.broadcast %60 : vector<8x1xf32> to vector<8x32xf32>
    %62 = arith.mulf %61, %51 : vector<8x32xf32>
    %cst_32 = arith.constant dense<0.000000e+00> : vector<32xf32>
    %63 = vector.multi_reduction <add>, %62, %cst_32 [0] : vector<8x32xf32> to vector<32xf32>
    %64 = vector.shape_cast %63 : vector<32xf32> to vector<1x32xf32>
    %cst_33 = arith.constant dense<0.000000e+00> : vector<1xf32>
    %65 = vector.multi_reduction <add>, %60, %cst_33 [0] : vector<8x1xf32> to vector<1xf32>
    %66 = vector.shape_cast %65 : vector<1xf32> to vector<1x1xf32>
    %67 = vector.broadcast %60 : vector<8x1xf32> to vector<8x32xf32>
    %68 = vector.broadcast %4 : vector<1x32xf32> to vector<8x32xf32>
    %69 = arith.mulf %67, %68 : vector<8x32xf32>
    %cst_34 = arith.constant 0.000000e+00 : f32
    %70 = vector.broadcast %cst_34 : f32 to vector<8x32xf32>
    %71 = arith.cmpf ogt, %49, %70 : vector<8x32xf32>
    %cst_35 = arith.constant 0.000000e+00 : f32
    %72 = vector.broadcast %cst_35 : f32 to vector<8x32xf32>
    %73 = arith.select %71, %69, %72 : vector<8x32xi1>, vector<8x32xf32>
    %cst_36 = arith.constant dense<0.000000e+00> : vector<32x32xf32>
    %74 = tpu.matmul %46, %73, %cst_36 {dimension_numbers = #tpu.dot_dimension_numbers<[0], [0], [1], [1], [0, 1, 1, 1], [], []>} : vector<8x32xf32>, vector<8x32xf32>, vector<32x32xf32> -> vector<32x32xf32>
    %cst_37 = arith.constant dense<0.000000e+00> : vector<32xf32>
    %75 = vector.multi_reduction <add>, %73, %cst_37 [0] : vector<8x32xf32> to vector<32xf32>
    %76 = vector.shape_cast %75 : vector<32xf32> to vector<1x32xf32>
    %cst_38 = arith.constant dense<0.000000e+00> : vector<8x32xf32>
    %77 = tpu.matmul %73, %2, %cst_38 {dimension_numbers = #tpu.dot_dimension_numbers<[1], [1], [0], [0], [0, 0, 1, 0], [], []>} : vector<8x32xf32>, vector<32x32xf32>, vector<8x32xf32> -> vector<8x32xf32>
    %cst_39 = arith.constant 0.000000e+00 : f32
    %78 = vector.broadcast %cst_39 : f32 to vector<8x32xf32>
    %79 = arith.cmpf ogt, %44, %78 : vector<8x32xf32>
    %cst_40 = arith.constant 0.000000e+00 : f32
    %80 = vector.broadcast %cst_40 : f32 to vector<8x32xf32>
    %81 = arith.select %79, %77, %80 : vector<8x32xi1>, vector<8x32xf32>
    %cst_41 = arith.constant dense<0.000000e+00> : vector<16x32xf32>
    %82 = tpu.matmul %39, %81, %cst_41 {dimension_numbers = #tpu.dot_dimension_numbers<[0], [0], [1], [1], [0, 1, 1, 1], [], []>} : vector<8x16xf32>, vector<8x32xf32>, vector<16x32xf32> -> vector<16x32xf32>
    %cst_42 = arith.constant dense<0.000000e+00> : vector<32xf32>
    %83 = vector.multi_reduction <add>, %81, %cst_42 [0] : vector<8x32xf32> to vector<32xf32>
    %84 = vector.shape_cast %83 : vector<32xf32> to vector<1x32xf32>
    %cst_43 = arith.constant 1.000000e+01 : f32
    %85 = vector.broadcast %cst_43 : f32 to vector<16x32xf32>
    %86 = arith.cmpf olt, %82, %85 : vector<16x32xf32>
    %cst_44 = arith.constant 1.000000e+01 : f32
    %87 = vector.broadcast %cst_44 : f32 to vector<16x32xf32>
    %88 = arith.cmpf ogt, %82, %87 : vector<16x32xf32>
    %cst_45 = arith.constant 1.000000e+01 : f32
    %cst_46 = arith.constant 0.000000e+00 : f32
    %89 = vector.broadcast %cst_45 : f32 to vector<16x32xf32>
    %90 = vector.broadcast %cst_46 : f32 to vector<16x32xf32>
    %91 = arith.select %88, %89, %90 : vector<16x32xi1>, vector<16x32xf32>
    %92 = arith.select %86, %82, %91 : vector<16x32xi1>, vector<16x32xf32>
    %cst_47 = arith.constant -1.000000e+01 : f32
    %93 = vector.broadcast %cst_47 : f32 to vector<16x32xf32>
    %94 = arith.cmpf ogt, %92, %93 : vector<16x32xf32>
    %cst_48 = arith.constant -1.000000e+01 : f32
    %95 = vector.broadcast %cst_48 : f32 to vector<16x32xf32>
    %96 = arith.cmpf olt, %92, %95 : vector<16x32xf32>
    %cst_49 = arith.constant -1.000000e+01 : f32
    %cst_50 = arith.constant 0.000000e+00 : f32
    %97 = vector.broadcast %cst_49 : f32 to vector<16x32xf32>
    %98 = vector.broadcast %cst_50 : f32 to vector<16x32xf32>
    %99 = arith.select %96, %97, %98 : vector<16x32xi1>, vector<16x32xf32>
    %100 = arith.select %94, %92, %99 : vector<16x32xi1>, vector<16x32xf32>
    %cst_51 = arith.constant 0.00999999977 : f32
    %101 = vector.broadcast %cst_51 : f32 to vector<16x32xf32>
    %102 = arith.mulf %101, %100 : vector<16x32xf32>
    %103 = arith.subf %0, %102 : vector<16x32xf32>
    %cst_52 = arith.constant 1.000000e+01 : f32
    %104 = vector.broadcast %cst_52 : f32 to vector<1x32xf32>
    %105 = arith.cmpf olt, %84, %104 : vector<1x32xf32>
    %cst_53 = arith.constant 1.000000e+01 : f32
    %106 = vector.broadcast %cst_53 : f32 to vector<1x32xf32>
    %107 = arith.cmpf ogt, %84, %106 : vector<1x32xf32>
    %cst_54 = arith.constant 1.000000e+01 : f32
    %cst_55 = arith.constant 0.000000e+00 : f32
    %108 = vector.broadcast %cst_54 : f32 to vector<1x32xf32>
    %109 = vector.broadcast %cst_55 : f32 to vector<1x32xf32>
    %110 = arith.select %107, %108, %109 : vector<1x32xi1>, vector<1x32xf32>
    %111 = arith.select %105, %84, %110 : vector<1x32xi1>, vector<1x32xf32>
    %cst_56 = arith.constant -1.000000e+01 : f32
    %112 = vector.broadcast %cst_56 : f32 to vector<1x32xf32>
    %113 = arith.cmpf ogt, %111, %112 : vector<1x32xf32>
    %cst_57 = arith.constant -1.000000e+01 : f32
    %114 = vector.broadcast %cst_57 : f32 to vector<1x32xf32>
    %115 = arith.cmpf olt, %111, %114 : vector<1x32xf32>
    %cst_58 = arith.constant -1.000000e+01 : f32
    %cst_59 = arith.constant 0.000000e+00 : f32
    %116 = vector.broadcast %cst_58 : f32 to vector<1x32xf32>
    %117 = vector.broadcast %cst_59 : f32 to vector<1x32xf32>
    %118 = arith.select %115, %116, %117 : vector<1x32xi1>, vector<1x32xf32>
    %119 = arith.select %113, %111, %118 : vector<1x32xi1>, vector<1x32xf32>
    %cst_60 = arith.constant 0.00999999977 : f32
    %120 = vector.broadcast %cst_60 : f32 to vector<1x32xf32>
    %121 = arith.mulf %120, %119 : vector<1x32xf32>
    %122 = arith.subf %1, %121 : vector<1x32xf32>
    %cst_61 = arith.constant 1.000000e+01 : f32
    %123 = vector.broadcast %cst_61 : f32 to vector<32x32xf32>
    %124 = arith.cmpf olt, %74, %123 : vector<32x32xf32>
    %cst_62 = arith.constant 1.000000e+01 : f32
    %125 = vector.broadcast %cst_62 : f32 to vector<32x32xf32>
    %126 = arith.cmpf ogt, %74, %125 : vector<32x32xf32>
    %cst_63 = arith.constant 1.000000e+01 : f32
    %cst_64 = arith.constant 0.000000e+00 : f32
    %127 = vector.broadcast %cst_63 : f32 to vector<32x32xf32>
    %128 = vector.broadcast %cst_64 : f32 to vector<32x32xf32>
    %129 = arith.select %126, %127, %128 : vector<32x32xi1>, vector<32x32xf32>
    %130 = arith.select %124, %74, %129 : vector<32x32xi1>, vector<32x32xf32>
    %cst_65 = arith.constant -1.000000e+01 : f32
    %131 = vector.broadcast %cst_65 : f32 to vector<32x32xf32>
    %132 = arith.cmpf ogt, %130, %131 : vector<32x32xf32>
    %cst_66 = arith.constant -1.000000e+01 : f32
    %133 = vector.broadcast %cst_66 : f32 to vector<32x32xf32>
    %134 = arith.cmpf olt, %130, %133 : vector<32x32xf32>
    %cst_67 = arith.constant -1.000000e+01 : f32
    %cst_68 = arith.constant 0.000000e+00 : f32
    %135 = vector.broadcast %cst_67 : f32 to vector<32x32xf32>
    %136 = vector.broadcast %cst_68 : f32 to vector<32x32xf32>
    %137 = arith.select %134, %135, %136 : vector<32x32xi1>, vector<32x32xf32>
    %138 = arith.select %132, %130, %137 : vector<32x32xi1>, vector<32x32xf32>
    %cst_69 = arith.constant 0.00999999977 : f32
    %139 = vector.broadcast %cst_69 : f32 to vector<32x32xf32>
    %140 = arith.mulf %139, %138 : vector<32x32xf32>
    %141 = arith.subf %2, %140 : vector<32x32xf32>
    %cst_70 = arith.constant 1.000000e+01 : f32
    %142 = vector.broadcast %cst_70 : f32 to vector<1x32xf32>
    %143 = arith.cmpf olt, %76, %142 : vector<1x32xf32>
    %cst_71 = arith.constant 1.000000e+01 : f32
    %144 = vector.broadcast %cst_71 : f32 to vector<1x32xf32>
    %145 = arith.cmpf ogt, %76, %144 : vector<1x32xf32>
    %cst_72 = arith.constant 1.000000e+01 : f32
    %cst_73 = arith.constant 0.000000e+00 : f32
    %146 = vector.broadcast %cst_72 : f32 to vector<1x32xf32>
    %147 = vector.broadcast %cst_73 : f32 to vector<1x32xf32>
    %148 = arith.select %145, %146, %147 : vector<1x32xi1>, vector<1x32xf32>
    %149 = arith.select %143, %76, %148 : vector<1x32xi1>, vector<1x32xf32>
    %cst_74 = arith.constant -1.000000e+01 : f32
    %150 = vector.broadcast %cst_74 : f32 to vector<1x32xf32>
    %151 = arith.cmpf ogt, %149, %150 : vector<1x32xf32>
    %cst_75 = arith.constant -1.000000e+01 : f32
    %152 = vector.broadcast %cst_75 : f32 to vector<1x32xf32>
    %153 = arith.cmpf olt, %149, %152 : vector<1x32xf32>
    %cst_76 = arith.constant -1.000000e+01 : f32
    %cst_77 = arith.constant 0.000000e+00 : f32
    %154 = vector.broadcast %cst_76 : f32 to vector<1x32xf32>
    %155 = vector.broadcast %cst_77 : f32 to vector<1x32xf32>
    %156 = arith.select %153, %154, %155 : vector<1x32xi1>, vector<1x32xf32>
    %157 = arith.select %151, %149, %156 : vector<1x32xi1>, vector<1x32xf32>
    %cst_78 = arith.constant 0.00999999977 : f32
    %158 = vector.broadcast %cst_78 : f32 to vector<1x32xf32>
    %159 = arith.mulf %158, %157 : vector<1x32xf32>
    %160 = arith.subf %3, %159 : vector<1x32xf32>
    %cst_79 = arith.constant 1.000000e+01 : f32
    %161 = vector.broadcast %cst_79 : f32 to vector<1x32xf32>
    %162 = arith.cmpf olt, %64, %161 : vector<1x32xf32>
    %cst_80 = arith.constant 1.000000e+01 : f32
    %163 = vector.broadcast %cst_80 : f32 to vector<1x32xf32>
    %164 = arith.cmpf ogt, %64, %163 : vector<1x32xf32>
    %cst_81 = arith.constant 1.000000e+01 : f32
    %cst_82 = arith.constant 0.000000e+00 : f32
    %165 = vector.broadcast %cst_81 : f32 to vector<1x32xf32>
    %166 = vector.broadcast %cst_82 : f32 to vector<1x32xf32>
    %167 = arith.select %164, %165, %166 : vector<1x32xi1>, vector<1x32xf32>
    %168 = arith.select %162, %64, %167 : vector<1x32xi1>, vector<1x32xf32>
    %cst_83 = arith.constant -1.000000e+01 : f32
    %169 = vector.broadcast %cst_83 : f32 to vector<1x32xf32>
    %170 = arith.cmpf ogt, %168, %169 : vector<1x32xf32>
    %cst_84 = arith.constant -1.000000e+01 : f32
    %171 = vector.broadcast %cst_84 : f32 to vector<1x32xf32>
    %172 = arith.cmpf olt, %168, %171 : vector<1x32xf32>
    %cst_85 = arith.constant -1.000000e+01 : f32
    %cst_86 = arith.constant 0.000000e+00 : f32
    %173 = vector.broadcast %cst_85 : f32 to vector<1x32xf32>
    %174 = vector.broadcast %cst_86 : f32 to vector<1x32xf32>
    %175 = arith.select %172, %173, %174 : vector<1x32xi1>, vector<1x32xf32>
    %176 = arith.select %170, %168, %175 : vector<1x32xi1>, vector<1x32xf32>
    %cst_87 = arith.constant 0.00999999977 : f32
    %177 = vector.broadcast %cst_87 : f32 to vector<1x32xf32>
    %178 = arith.mulf %177, %176 : vector<1x32xf32>
    %179 = arith.subf %4, %178 : vector<1x32xf32>
    %cst_88 = arith.constant 1.000000e+01 : f32
    %180 = vector.broadcast %cst_88 : f32 to vector<1x1xf32>
    %181 = arith.cmpf olt, %66, %180 : vector<1x1xf32>
    %cst_89 = arith.constant 1.000000e+01 : f32
    %182 = vector.broadcast %cst_89 : f32 to vector<1x1xf32>
    %183 = arith.cmpf ogt, %66, %182 : vector<1x1xf32>
    %cst_90 = arith.constant 1.000000e+01 : f32
    %cst_91 = arith.constant 0.000000e+00 : f32
    %184 = vector.broadcast %cst_90 : f32 to vector<1x1xf32>
    %185 = vector.broadcast %cst_91 : f32 to vector<1x1xf32>
    %186 = arith.select %183, %184, %185 : vector<1x1xi1>, vector<1x1xf32>
    %187 = arith.select %181, %66, %186 : vector<1x1xi1>, vector<1x1xf32>
    %cst_92 = arith.constant -1.000000e+01 : f32
    %188 = vector.broadcast %cst_92 : f32 to vector<1x1xf32>
    %189 = arith.cmpf ogt, %187, %188 : vector<1x1xf32>
    %cst_93 = arith.constant -1.000000e+01 : f32
    %190 = vector.broadcast %cst_93 : f32 to vector<1x1xf32>
    %191 = arith.cmpf olt, %187, %190 : vector<1x1xf32>
    %cst_94 = arith.constant -1.000000e+01 : f32
    %cst_95 = arith.constant 0.000000e+00 : f32
    %192 = vector.broadcast %cst_94 : f32 to vector<1x1xf32>
    %193 = vector.broadcast %cst_95 : f32 to vector<1x1xf32>
    %194 = arith.select %191, %192, %193 : vector<1x1xi1>, vector<1x1xf32>
    %195 = arith.select %189, %187, %194 : vector<1x1xi1>, vector<1x1xf32>
    %cst_96 = arith.constant 0.00999999977 : f32
    %196 = vector.broadcast %cst_96 : f32 to vector<1x1xf32>
    %197 = arith.mulf %196, %195 : vector<1x1xf32>
    %198 = arith.subf %5, %197 : vector<1x1xf32>
    %c0_97 = arith.constant 0 : index
    %c8 = arith.constant 8 : index
    %c0_98 = arith.constant 0 : index
    %199 = vector.load %arg2[%c0_97, %c8, %c0_98] : memref<1x40x17xf32, #tpu.memory_space<vmem>>, vector<1x8x16xf32>
    %200 = vector.shape_cast %199 : vector<1x8x16xf32> to vector<8x16xf32>
    %c0_99 = arith.constant 0 : index
    %c8_100 = arith.constant 8 : index
    %c16_101 = arith.constant 16 : index
    %201 = vector.load %arg2[%c0_99, %c8_100, %c16_101] : memref<1x40x17xf32, #tpu.memory_space<vmem>>, vector<1x8x1xf32>
    %202 = vector.shape_cast %201 : vector<1x8x1xf32> to vector<8x1xf32>
    %cst_102 = arith.constant dense<0.000000e+00> : vector<8x32xf32>
    %203 = tpu.matmul %200, %103, %cst_102 {dimension_numbers = #tpu.dot_dimension_numbers<[1], [0], [0], [1], [0, 0, 1, 1], [], []>} : vector<8x16xf32>, vector<16x32xf32>, vector<8x32xf32> -> vector<8x32xf32>
    %204 = vector.broadcast %122 : vector<1x32xf32> to vector<8x32xf32>
    %205 = arith.addf %203, %204 : vector<8x32xf32>
    %cst_103 = arith.constant 0.000000e+00 : f32
    %206 = vector.broadcast %cst_103 : f32 to vector<8x32xf32>
    %207 = arith.maximumf %205, %206 : vector<8x32xf32>
    %cst_104 = arith.constant dense<0.000000e+00> : vector<8x32xf32>
    %208 = tpu.matmul %207, %141, %cst_104 {dimension_numbers = #tpu.dot_dimension_numbers<[1], [0], [0], [1], [0, 0, 1, 1], [], []>} : vector<8x32xf32>, vector<32x32xf32>, vector<8x32xf32> -> vector<8x32xf32>
    %209 = vector.broadcast %160 : vector<1x32xf32> to vector<8x32xf32>
    %210 = arith.addf %208, %209 : vector<8x32xf32>
    %cst_105 = arith.constant 0.000000e+00 : f32
    %211 = vector.broadcast %cst_105 : f32 to vector<8x32xf32>
    %212 = arith.maximumf %210, %211 : vector<8x32xf32>
    %213 = vector.broadcast %179 : vector<1x32xf32> to vector<8x32xf32>
    %214 = arith.mulf %212, %213 : vector<8x32xf32>
    %cst_106 = arith.constant dense<0.000000e+00> : vector<8xf32>
    %215 = vector.multi_reduction <add>, %214, %cst_106 [1] : vector<8x32xf32> to vector<8xf32>
    %216 = vector.shape_cast %215 : vector<8xf32> to vector<8x1xf32>
    %217 = vector.broadcast %198 : vector<1x1xf32> to vector<8x1xf32>
    %218 = arith.addf %216, %217 : vector<8x1xf32>
    %219 = arith.subf %218, %202 : vector<8x1xf32>
    %cst_107 = arith.constant 2.500000e-01 : f32
    %220 = vector.broadcast %cst_107 : f32 to vector<8x1xf32>
    %221 = arith.mulf %220, %219 : vector<8x1xf32>
    %222 = vector.broadcast %221 : vector<8x1xf32> to vector<8x32xf32>
    %223 = arith.mulf %222, %212 : vector<8x32xf32>
    %cst_108 = arith.constant dense<0.000000e+00> : vector<32xf32>
    %224 = vector.multi_reduction <add>, %223, %cst_108 [0] : vector<8x32xf32> to vector<32xf32>
    %225 = vector.shape_cast %224 : vector<32xf32> to vector<1x32xf32>
    %cst_109 = arith.constant dense<0.000000e+00> : vector<1xf32>
    %226 = vector.multi_reduction <add>, %221, %cst_109 [0] : vector<8x1xf32> to vector<1xf32>
    %227 = vector.shape_cast %226 : vector<1xf32> to vector<1x1xf32>
    %228 = vector.broadcast %221 : vector<8x1xf32> to vector<8x32xf32>
    %229 = vector.broadcast %179 : vector<1x32xf32> to vector<8x32xf32>
    %230 = arith.mulf %228, %229 : vector<8x32xf32>
    %cst_110 = arith.constant 0.000000e+00 : f32
    %231 = vector.broadcast %cst_110 : f32 to vector<8x32xf32>
    %232 = arith.cmpf ogt, %210, %231 : vector<8x32xf32>
    %cst_111 = arith.constant 0.000000e+00 : f32
    %233 = vector.broadcast %cst_111 : f32 to vector<8x32xf32>
    %234 = arith.select %232, %230, %233 : vector<8x32xi1>, vector<8x32xf32>
    %cst_112 = arith.constant dense<0.000000e+00> : vector<32x32xf32>
    %235 = tpu.matmul %207, %234, %cst_112 {dimension_numbers = #tpu.dot_dimension_numbers<[0], [0], [1], [1], [0, 1, 1, 1], [], []>} : vector<8x32xf32>, vector<8x32xf32>, vector<32x32xf32> -> vector<32x32xf32>
    %cst_113 = arith.constant dense<0.000000e+00> : vector<32xf32>
    %236 = vector.multi_reduction <add>, %234, %cst_113 [0] : vector<8x32xf32> to vector<32xf32>
    %237 = vector.shape_cast %236 : vector<32xf32> to vector<1x32xf32>
    %cst_114 = arith.constant dense<0.000000e+00> : vector<8x32xf32>
    %238 = tpu.matmul %234, %141, %cst_114 {dimension_numbers = #tpu.dot_dimension_numbers<[1], [1], [0], [0], [0, 0, 1, 0], [], []>} : vector<8x32xf32>, vector<32x32xf32>, vector<8x32xf32> -> vector<8x32xf32>
    %cst_115 = arith.constant 0.000000e+00 : f32
    %239 = vector.broadcast %cst_115 : f32 to vector<8x32xf32>
    %240 = arith.cmpf ogt, %205, %239 : vector<8x32xf32>
    %cst_116 = arith.constant 0.000000e+00 : f32
    %241 = vector.broadcast %cst_116 : f32 to vector<8x32xf32>
    %242 = arith.select %240, %238, %241 : vector<8x32xi1>, vector<8x32xf32>
    %cst_117 = arith.constant dense<0.000000e+00> : vector<16x32xf32>
    %243 = tpu.matmul %200, %242, %cst_117 {dimension_numbers = #tpu.dot_dimension_numbers<[0], [0], [1], [1], [0, 1, 1, 1], [], []>} : vector<8x16xf32>, vector<8x32xf32>, vector<16x32xf32> -> vector<16x32xf32>
    %cst_118 = arith.constant dense<0.000000e+00> : vector<32xf32>
    %244 = vector.multi_reduction <add>, %242, %cst_118 [0] : vector<8x32xf32> to vector<32xf32>
    %245 = vector.shape_cast %244 : vector<32xf32> to vector<1x32xf32>
    %cst_119 = arith.constant 1.000000e+01 : f32
    %246 = vector.broadcast %cst_119 : f32 to vector<16x32xf32>
    %247 = arith.cmpf olt, %243, %246 : vector<16x32xf32>
    %cst_120 = arith.constant 1.000000e+01 : f32
    %248 = vector.broadcast %cst_120 : f32 to vector<16x32xf32>
    %249 = arith.cmpf ogt, %243, %248 : vector<16x32xf32>
    %cst_121 = arith.constant 1.000000e+01 : f32
    %cst_122 = arith.constant 0.000000e+00 : f32
    %250 = vector.broadcast %cst_121 : f32 to vector<16x32xf32>
    %251 = vector.broadcast %cst_122 : f32 to vector<16x32xf32>
    %252 = arith.select %249, %250, %251 : vector<16x32xi1>, vector<16x32xf32>
    %253 = arith.select %247, %243, %252 : vector<16x32xi1>, vector<16x32xf32>
    %cst_123 = arith.constant -1.000000e+01 : f32
    %254 = vector.broadcast %cst_123 : f32 to vector<16x32xf32>
    %255 = arith.cmpf ogt, %253, %254 : vector<16x32xf32>
    %cst_124 = arith.constant -1.000000e+01 : f32
    %256 = vector.broadcast %cst_124 : f32 to vector<16x32xf32>
    %257 = arith.cmpf olt, %253, %256 : vector<16x32xf32>
    %cst_125 = arith.constant -1.000000e+01 : f32
    %cst_126 = arith.constant 0.000000e+00 : f32
    %258 = vector.broadcast %cst_125 : f32 to vector<16x32xf32>
    %259 = vector.broadcast %cst_126 : f32 to vector<16x32xf32>
    %260 = arith.select %257, %258, %259 : vector<16x32xi1>, vector<16x32xf32>
    %261 = arith.select %255, %253, %260 : vector<16x32xi1>, vector<16x32xf32>
    %cst_127 = arith.constant 0.00999999977 : f32
    %262 = vector.broadcast %cst_127 : f32 to vector<16x32xf32>
    %263 = arith.mulf %262, %261 : vector<16x32xf32>
    %264 = arith.subf %103, %263 : vector<16x32xf32>
    %cst_128 = arith.constant 1.000000e+01 : f32
    %265 = vector.broadcast %cst_128 : f32 to vector<1x32xf32>
    %266 = arith.cmpf olt, %245, %265 : vector<1x32xf32>
    %cst_129 = arith.constant 1.000000e+01 : f32
    %267 = vector.broadcast %cst_129 : f32 to vector<1x32xf32>
    %268 = arith.cmpf ogt, %245, %267 : vector<1x32xf32>
    %cst_130 = arith.constant 1.000000e+01 : f32
    %cst_131 = arith.constant 0.000000e+00 : f32
    %269 = vector.broadcast %cst_130 : f32 to vector<1x32xf32>
    %270 = vector.broadcast %cst_131 : f32 to vector<1x32xf32>
    %271 = arith.select %268, %269, %270 : vector<1x32xi1>, vector<1x32xf32>
    %272 = arith.select %266, %245, %271 : vector<1x32xi1>, vector<1x32xf32>
    %cst_132 = arith.constant -1.000000e+01 : f32
    %273 = vector.broadcast %cst_132 : f32 to vector<1x32xf32>
    %274 = arith.cmpf ogt, %272, %273 : vector<1x32xf32>
    %cst_133 = arith.constant -1.000000e+01 : f32
    %275 = vector.broadcast %cst_133 : f32 to vector<1x32xf32>
    %276 = arith.cmpf olt, %272, %275 : vector<1x32xf32>
    %cst_134 = arith.constant -1.000000e+01 : f32
    %cst_135 = arith.constant 0.000000e+00 : f32
    %277 = vector.broadcast %cst_134 : f32 to vector<1x32xf32>
    %278 = vector.broadcast %cst_135 : f32 to vector<1x32xf32>
    %279 = arith.select %276, %277, %278 : vector<1x32xi1>, vector<1x32xf32>
    %280 = arith.select %274, %272, %279 : vector<1x32xi1>, vector<1x32xf32>
    %cst_136 = arith.constant 0.00999999977 : f32
    %281 = vector.broadcast %cst_136 : f32 to vector<1x32xf32>
    %282 = arith.mulf %281, %280 : vector<1x32xf32>
    %283 = arith.subf %122, %282 : vector<1x32xf32>
    %cst_137 = arith.constant 1.000000e+01 : f32
    %284 = vector.broadcast %cst_137 : f32 to vector<32x32xf32>
    %285 = arith.cmpf olt, %235, %284 : vector<32x32xf32>
    %cst_138 = arith.constant 1.000000e+01 : f32
    %286 = vector.broadcast %cst_138 : f32 to vector<32x32xf32>
    %287 = arith.cmpf ogt, %235, %286 : vector<32x32xf32>
    %cst_139 = arith.constant 1.000000e+01 : f32
    %cst_140 = arith.constant 0.000000e+00 : f32
    %288 = vector.broadcast %cst_139 : f32 to vector<32x32xf32>
    %289 = vector.broadcast %cst_140 : f32 to vector<32x32xf32>
    %290 = arith.select %287, %288, %289 : vector<32x32xi1>, vector<32x32xf32>
    %291 = arith.select %285, %235, %290 : vector<32x32xi1>, vector<32x32xf32>
    %cst_141 = arith.constant -1.000000e+01 : f32
    %292 = vector.broadcast %cst_141 : f32 to vector<32x32xf32>
    %293 = arith.cmpf ogt, %291, %292 : vector<32x32xf32>
    %cst_142 = arith.constant -1.000000e+01 : f32
    %294 = vector.broadcast %cst_142 : f32 to vector<32x32xf32>
    %295 = arith.cmpf olt, %291, %294 : vector<32x32xf32>
    %cst_143 = arith.constant -1.000000e+01 : f32
    %cst_144 = arith.constant 0.000000e+00 : f32
    %296 = vector.broadcast %cst_143 : f32 to vector<32x32xf32>
    %297 = vector.broadcast %cst_144 : f32 to vector<32x32xf32>
    %298 = arith.select %295, %296, %297 : vector<32x32xi1>, vector<32x32xf32>
    %299 = arith.select %293, %291, %298 : vector<32x32xi1>, vector<32x32xf32>
    %cst_145 = arith.constant 0.00999999977 : f32
    %300 = vector.broadcast %cst_145 : f32 to vector<32x32xf32>
    %301 = arith.mulf %300, %299 : vector<32x32xf32>
    %302 = arith.subf %141, %301 : vector<32x32xf32>
    %cst_146 = arith.constant 1.000000e+01 : f32
    %303 = vector.broadcast %cst_146 : f32 to vector<1x32xf32>
    %304 = arith.cmpf olt, %237, %303 : vector<1x32xf32>
    %cst_147 = arith.constant 1.000000e+01 : f32
    %305 = vector.broadcast %cst_147 : f32 to vector<1x32xf32>
    %306 = arith.cmpf ogt, %237, %305 : vector<1x32xf32>
    %cst_148 = arith.constant 1.000000e+01 : f32
    %cst_149 = arith.constant 0.000000e+00 : f32
    %307 = vector.broadcast %cst_148 : f32 to vector<1x32xf32>
    %308 = vector.broadcast %cst_149 : f32 to vector<1x32xf32>
    %309 = arith.select %306, %307, %308 : vector<1x32xi1>, vector<1x32xf32>
    %310 = arith.select %304, %237, %309 : vector<1x32xi1>, vector<1x32xf32>
    %cst_150 = arith.constant -1.000000e+01 : f32
    %311 = vector.broadcast %cst_150 : f32 to vector<1x32xf32>
    %312 = arith.cmpf ogt, %310, %311 : vector<1x32xf32>
    %cst_151 = arith.constant -1.000000e+01 : f32
    %313 = vector.broadcast %cst_151 : f32 to vector<1x32xf32>
    %314 = arith.cmpf olt, %310, %313 : vector<1x32xf32>
    %cst_152 = arith.constant -1.000000e+01 : f32
    %cst_153 = arith.constant 0.000000e+00 : f32
    %315 = vector.broadcast %cst_152 : f32 to vector<1x32xf32>
    %316 = vector.broadcast %cst_153 : f32 to vector<1x32xf32>
    %317 = arith.select %314, %315, %316 : vector<1x32xi1>, vector<1x32xf32>
    %318 = arith.select %312, %310, %317 : vector<1x32xi1>, vector<1x32xf32>
    %cst_154 = arith.constant 0.00999999977 : f32
    %319 = vector.broadcast %cst_154 : f32 to vector<1x32xf32>
    %320 = arith.mulf %319, %318 : vector<1x32xf32>
    %321 = arith.subf %160, %320 : vector<1x32xf32>
    %cst_155 = arith.constant 1.000000e+01 : f32
    %322 = vector.broadcast %cst_155 : f32 to vector<1x32xf32>
    %323 = arith.cmpf olt, %225, %322 : vector<1x32xf32>
    %cst_156 = arith.constant 1.000000e+01 : f32
    %324 = vector.broadcast %cst_156 : f32 to vector<1x32xf32>
    %325 = arith.cmpf ogt, %225, %324 : vector<1x32xf32>
    %cst_157 = arith.constant 1.000000e+01 : f32
    %cst_158 = arith.constant 0.000000e+00 : f32
    %326 = vector.broadcast %cst_157 : f32 to vector<1x32xf32>
    %327 = vector.broadcast %cst_158 : f32 to vector<1x32xf32>
    %328 = arith.select %325, %326, %327 : vector<1x32xi1>, vector<1x32xf32>
    %329 = arith.select %323, %225, %328 : vector<1x32xi1>, vector<1x32xf32>
    %cst_159 = arith.constant -1.000000e+01 : f32
    %330 = vector.broadcast %cst_159 : f32 to vector<1x32xf32>
    %331 = arith.cmpf ogt, %329, %330 : vector<1x32xf32>
    %cst_160 = arith.constant -1.000000e+01 : f32
    %332 = vector.broadcast %cst_160 : f32 to vector<1x32xf32>
    %333 = arith.cmpf olt, %329, %332 : vector<1x32xf32>
    %cst_161 = arith.constant -1.000000e+01 : f32
    %cst_162 = arith.constant 0.000000e+00 : f32
    %334 = vector.broadcast %cst_161 : f32 to vector<1x32xf32>
    %335 = vector.broadcast %cst_162 : f32 to vector<1x32xf32>
    %336 = arith.select %333, %334, %335 : vector<1x32xi1>, vector<1x32xf32>
    %337 = arith.select %331, %329, %336 : vector<1x32xi1>, vector<1x32xf32>
    %cst_163 = arith.constant 0.00999999977 : f32
    %338 = vector.broadcast %cst_163 : f32 to vector<1x32xf32>
    %339 = arith.mulf %338, %337 : vector<1x32xf32>
    %340 = arith.subf %179, %339 : vector<1x32xf32>
    %cst_164 = arith.constant 1.000000e+01 : f32
    %341 = vector.broadcast %cst_164 : f32 to vector<1x1xf32>
    %342 = arith.cmpf olt, %227, %341 : vector<1x1xf32>
    %cst_165 = arith.constant 1.000000e+01 : f32
    %343 = vector.broadcast %cst_165 : f32 to vector<1x1xf32>
    %344 = arith.cmpf ogt, %227, %343 : vector<1x1xf32>
    %cst_166 = arith.constant 1.000000e+01 : f32
    %cst_167 = arith.constant 0.000000e+00 : f32
    %345 = vector.broadcast %cst_166 : f32 to vector<1x1xf32>
    %346 = vector.broadcast %cst_167 : f32 to vector<1x1xf32>
    %347 = arith.select %344, %345, %346 : vector<1x1xi1>, vector<1x1xf32>
    %348 = arith.select %342, %227, %347 : vector<1x1xi1>, vector<1x1xf32>
    %cst_168 = arith.constant -1.000000e+01 : f32
    %349 = vector.broadcast %cst_168 : f32 to vector<1x1xf32>
    %350 = arith.cmpf ogt, %348, %349 : vector<1x1xf32>
    %cst_169 = arith.constant -1.000000e+01 : f32
    %351 = vector.broadcast %cst_169 : f32 to vector<1x1xf32>
    %352 = arith.cmpf olt, %348, %351 : vector<1x1xf32>
    %cst_170 = arith.constant -1.000000e+01 : f32
    %cst_171 = arith.constant 0.000000e+00 : f32
    %353 = vector.broadcast %cst_170 : f32 to vector<1x1xf32>
    %354 = vector.broadcast %cst_171 : f32 to vector<1x1xf32>
    %355 = arith.select %352, %353, %354 : vector<1x1xi1>, vector<1x1xf32>
    %356 = arith.select %350, %348, %355 : vector<1x1xi1>, vector<1x1xf32>
    %cst_172 = arith.constant 0.00999999977 : f32
    %357 = vector.broadcast %cst_172 : f32 to vector<1x1xf32>
    %358 = arith.mulf %357, %356 : vector<1x1xf32>
    %359 = arith.subf %198, %358 : vector<1x1xf32>
    %c0_173 = arith.constant 0 : index
    %c16_174 = arith.constant 16 : index
    %c0_175 = arith.constant 0 : index
    %360 = vector.load %arg2[%c0_173, %c16_174, %c0_175] : memref<1x40x17xf32, #tpu.memory_space<vmem>>, vector<1x8x16xf32>
    %361 = vector.shape_cast %360 : vector<1x8x16xf32> to vector<8x16xf32>
    %c0_176 = arith.constant 0 : index
    %c16_177 = arith.constant 16 : index
    %c16_178 = arith.constant 16 : index
    %362 = vector.load %arg2[%c0_176, %c16_177, %c16_178] : memref<1x40x17xf32, #tpu.memory_space<vmem>>, vector<1x8x1xf32>
    %363 = vector.shape_cast %362 : vector<1x8x1xf32> to vector<8x1xf32>
    %cst_179 = arith.constant dense<0.000000e+00> : vector<8x32xf32>
    %364 = tpu.matmul %361, %264, %cst_179 {dimension_numbers = #tpu.dot_dimension_numbers<[1], [0], [0], [1], [0, 0, 1, 1], [], []>} : vector<8x16xf32>, vector<16x32xf32>, vector<8x32xf32> -> vector<8x32xf32>
    %365 = vector.broadcast %283 : vector<1x32xf32> to vector<8x32xf32>
    %366 = arith.addf %364, %365 : vector<8x32xf32>
    %cst_180 = arith.constant 0.000000e+00 : f32
    %367 = vector.broadcast %cst_180 : f32 to vector<8x32xf32>
    %368 = arith.maximumf %366, %367 : vector<8x32xf32>
    %cst_181 = arith.constant dense<0.000000e+00> : vector<8x32xf32>
    %369 = tpu.matmul %368, %302, %cst_181 {dimension_numbers = #tpu.dot_dimension_numbers<[1], [0], [0], [1], [0, 0, 1, 1], [], []>} : vector<8x32xf32>, vector<32x32xf32>, vector<8x32xf32> -> vector<8x32xf32>
    %370 = vector.broadcast %321 : vector<1x32xf32> to vector<8x32xf32>
    %371 = arith.addf %369, %370 : vector<8x32xf32>
    %cst_182 = arith.constant 0.000000e+00 : f32
    %372 = vector.broadcast %cst_182 : f32 to vector<8x32xf32>
    %373 = arith.maximumf %371, %372 : vector<8x32xf32>
    %374 = vector.broadcast %340 : vector<1x32xf32> to vector<8x32xf32>
    %375 = arith.mulf %373, %374 : vector<8x32xf32>
    %cst_183 = arith.constant dense<0.000000e+00> : vector<8xf32>
    %376 = vector.multi_reduction <add>, %375, %cst_183 [1] : vector<8x32xf32> to vector<8xf32>
    %377 = vector.shape_cast %376 : vector<8xf32> to vector<8x1xf32>
    %378 = vector.broadcast %359 : vector<1x1xf32> to vector<8x1xf32>
    %379 = arith.addf %377, %378 : vector<8x1xf32>
    %380 = arith.subf %379, %363 : vector<8x1xf32>
    %cst_184 = arith.constant 2.500000e-01 : f32
    %381 = vector.broadcast %cst_184 : f32 to vector<8x1xf32>
    %382 = arith.mulf %381, %380 : vector<8x1xf32>
    %383 = vector.broadcast %382 : vector<8x1xf32> to vector<8x32xf32>
    %384 = arith.mulf %383, %373 : vector<8x32xf32>
    %cst_185 = arith.constant dense<0.000000e+00> : vector<32xf32>
    %385 = vector.multi_reduction <add>, %384, %cst_185 [0] : vector<8x32xf32> to vector<32xf32>
    %386 = vector.shape_cast %385 : vector<32xf32> to vector<1x32xf32>
    %cst_186 = arith.constant dense<0.000000e+00> : vector<1xf32>
    %387 = vector.multi_reduction <add>, %382, %cst_186 [0] : vector<8x1xf32> to vector<1xf32>
    %388 = vector.shape_cast %387 : vector<1xf32> to vector<1x1xf32>
    %389 = vector.broadcast %382 : vector<8x1xf32> to vector<8x32xf32>
    %390 = vector.broadcast %340 : vector<1x32xf32> to vector<8x32xf32>
    %391 = arith.mulf %389, %390 : vector<8x32xf32>
    %cst_187 = arith.constant 0.000000e+00 : f32
    %392 = vector.broadcast %cst_187 : f32 to vector<8x32xf32>
    %393 = arith.cmpf ogt, %371, %392 : vector<8x32xf32>
    %cst_188 = arith.constant 0.000000e+00 : f32
    %394 = vector.broadcast %cst_188 : f32 to vector<8x32xf32>
    %395 = arith.select %393, %391, %394 : vector<8x32xi1>, vector<8x32xf32>
    %cst_189 = arith.constant dense<0.000000e+00> : vector<32x32xf32>
    %396 = tpu.matmul %368, %395, %cst_189 {dimension_numbers = #tpu.dot_dimension_numbers<[0], [0], [1], [1], [0, 1, 1, 1], [], []>} : vector<8x32xf32>, vector<8x32xf32>, vector<32x32xf32> -> vector<32x32xf32>
    %cst_190 = arith.constant dense<0.000000e+00> : vector<32xf32>
    %397 = vector.multi_reduction <add>, %395, %cst_190 [0] : vector<8x32xf32> to vector<32xf32>
    %398 = vector.shape_cast %397 : vector<32xf32> to vector<1x32xf32>
    %cst_191 = arith.constant dense<0.000000e+00> : vector<8x32xf32>
    %399 = tpu.matmul %395, %302, %cst_191 {dimension_numbers = #tpu.dot_dimension_numbers<[1], [1], [0], [0], [0, 0, 1, 0], [], []>} : vector<8x32xf32>, vector<32x32xf32>, vector<8x32xf32> -> vector<8x32xf32>
    %cst_192 = arith.constant 0.000000e+00 : f32
    %400 = vector.broadcast %cst_192 : f32 to vector<8x32xf32>
    %401 = arith.cmpf ogt, %366, %400 : vector<8x32xf32>
    %cst_193 = arith.constant 0.000000e+00 : f32
    %402 = vector.broadcast %cst_193 : f32 to vector<8x32xf32>
    %403 = arith.select %401, %399, %402 : vector<8x32xi1>, vector<8x32xf32>
    %cst_194 = arith.constant dense<0.000000e+00> : vector<16x32xf32>
    %404 = tpu.matmul %361, %403, %cst_194 {dimension_numbers = #tpu.dot_dimension_numbers<[0], [0], [1], [1], [0, 1, 1, 1], [], []>} : vector<8x16xf32>, vector<8x32xf32>, vector<16x32xf32> -> vector<16x32xf32>
    %cst_195 = arith.constant dense<0.000000e+00> : vector<32xf32>
    %405 = vector.multi_reduction <add>, %403, %cst_195 [0] : vector<8x32xf32> to vector<32xf32>
    %406 = vector.shape_cast %405 : vector<32xf32> to vector<1x32xf32>
    %cst_196 = arith.constant 1.000000e+01 : f32
    %407 = vector.broadcast %cst_196 : f32 to vector<16x32xf32>
    %408 = arith.cmpf olt, %404, %407 : vector<16x32xf32>
    %cst_197 = arith.constant 1.000000e+01 : f32
    %409 = vector.broadcast %cst_197 : f32 to vector<16x32xf32>
    %410 = arith.cmpf ogt, %404, %409 : vector<16x32xf32>
    %cst_198 = arith.constant 1.000000e+01 : f32
    %cst_199 = arith.constant 0.000000e+00 : f32
    %411 = vector.broadcast %cst_198 : f32 to vector<16x32xf32>
    %412 = vector.broadcast %cst_199 : f32 to vector<16x32xf32>
    %413 = arith.select %410, %411, %412 : vector<16x32xi1>, vector<16x32xf32>
    %414 = arith.select %408, %404, %413 : vector<16x32xi1>, vector<16x32xf32>
    %cst_200 = arith.constant -1.000000e+01 : f32
    %415 = vector.broadcast %cst_200 : f32 to vector<16x32xf32>
    %416 = arith.cmpf ogt, %414, %415 : vector<16x32xf32>
    %cst_201 = arith.constant -1.000000e+01 : f32
    %417 = vector.broadcast %cst_201 : f32 to vector<16x32xf32>
    %418 = arith.cmpf olt, %414, %417 : vector<16x32xf32>
    %cst_202 = arith.constant -1.000000e+01 : f32
    %cst_203 = arith.constant 0.000000e+00 : f32
    %419 = vector.broadcast %cst_202 : f32 to vector<16x32xf32>
    %420 = vector.broadcast %cst_203 : f32 to vector<16x32xf32>
    %421 = arith.select %418, %419, %420 : vector<16x32xi1>, vector<16x32xf32>
    %422 = arith.select %416, %414, %421 : vector<16x32xi1>, vector<16x32xf32>
    %cst_204 = arith.constant 0.00999999977 : f32
    %423 = vector.broadcast %cst_204 : f32 to vector<16x32xf32>
    %424 = arith.mulf %423, %422 : vector<16x32xf32>
    %425 = arith.subf %264, %424 : vector<16x32xf32>
    %cst_205 = arith.constant 1.000000e+01 : f32
    %426 = vector.broadcast %cst_205 : f32 to vector<1x32xf32>
    %427 = arith.cmpf olt, %406, %426 : vector<1x32xf32>
    %cst_206 = arith.constant 1.000000e+01 : f32
    %428 = vector.broadcast %cst_206 : f32 to vector<1x32xf32>
    %429 = arith.cmpf ogt, %406, %428 : vector<1x32xf32>
    %cst_207 = arith.constant 1.000000e+01 : f32
    %cst_208 = arith.constant 0.000000e+00 : f32
    %430 = vector.broadcast %cst_207 : f32 to vector<1x32xf32>
    %431 = vector.broadcast %cst_208 : f32 to vector<1x32xf32>
    %432 = arith.select %429, %430, %431 : vector<1x32xi1>, vector<1x32xf32>
    %433 = arith.select %427, %406, %432 : vector<1x32xi1>, vector<1x32xf32>
    %cst_209 = arith.constant -1.000000e+01 : f32
    %434 = vector.broadcast %cst_209 : f32 to vector<1x32xf32>
    %435 = arith.cmpf ogt, %433, %434 : vector<1x32xf32>
    %cst_210 = arith.constant -1.000000e+01 : f32
    %436 = vector.broadcast %cst_210 : f32 to vector<1x32xf32>
    %437 = arith.cmpf olt, %433, %436 : vector<1x32xf32>
    %cst_211 = arith.constant -1.000000e+01 : f32
    %cst_212 = arith.constant 0.000000e+00 : f32
    %438 = vector.broadcast %cst_211 : f32 to vector<1x32xf32>
    %439 = vector.broadcast %cst_212 : f32 to vector<1x32xf32>
    %440 = arith.select %437, %438, %439 : vector<1x32xi1>, vector<1x32xf32>
    %441 = arith.select %435, %433, %440 : vector<1x32xi1>, vector<1x32xf32>
    %cst_213 = arith.constant 0.00999999977 : f32
    %442 = vector.broadcast %cst_213 : f32 to vector<1x32xf32>
    %443 = arith.mulf %442, %441 : vector<1x32xf32>
    %444 = arith.subf %283, %443 : vector<1x32xf32>
    %cst_214 = arith.constant 1.000000e+01 : f32
    %445 = vector.broadcast %cst_214 : f32 to vector<32x32xf32>
    %446 = arith.cmpf olt, %396, %445 : vector<32x32xf32>
    %cst_215 = arith.constant 1.000000e+01 : f32
    %447 = vector.broadcast %cst_215 : f32 to vector<32x32xf32>
    %448 = arith.cmpf ogt, %396, %447 : vector<32x32xf32>
    %cst_216 = arith.constant 1.000000e+01 : f32
    %cst_217 = arith.constant 0.000000e+00 : f32
    %449 = vector.broadcast %cst_216 : f32 to vector<32x32xf32>
    %450 = vector.broadcast %cst_217 : f32 to vector<32x32xf32>
    %451 = arith.select %448, %449, %450 : vector<32x32xi1>, vector<32x32xf32>
    %452 = arith.select %446, %396, %451 : vector<32x32xi1>, vector<32x32xf32>
    %cst_218 = arith.constant -1.000000e+01 : f32
    %453 = vector.broadcast %cst_218 : f32 to vector<32x32xf32>
    %454 = arith.cmpf ogt, %452, %453 : vector<32x32xf32>
    %cst_219 = arith.constant -1.000000e+01 : f32
    %455 = vector.broadcast %cst_219 : f32 to vector<32x32xf32>
    %456 = arith.cmpf olt, %452, %455 : vector<32x32xf32>
    %cst_220 = arith.constant -1.000000e+01 : f32
    %cst_221 = arith.constant 0.000000e+00 : f32
    %457 = vector.broadcast %cst_220 : f32 to vector<32x32xf32>
    %458 = vector.broadcast %cst_221 : f32 to vector<32x32xf32>
    %459 = arith.select %456, %457, %458 : vector<32x32xi1>, vector<32x32xf32>
    %460 = arith.select %454, %452, %459 : vector<32x32xi1>, vector<32x32xf32>
    %cst_222 = arith.constant 0.00999999977 : f32
    %461 = vector.broadcast %cst_222 : f32 to vector<32x32xf32>
    %462 = arith.mulf %461, %460 : vector<32x32xf32>
    %463 = arith.subf %302, %462 : vector<32x32xf32>
    %cst_223 = arith.constant 1.000000e+01 : f32
    %464 = vector.broadcast %cst_223 : f32 to vector<1x32xf32>
    %465 = arith.cmpf olt, %398, %464 : vector<1x32xf32>
    %cst_224 = arith.constant 1.000000e+01 : f32
    %466 = vector.broadcast %cst_224 : f32 to vector<1x32xf32>
    %467 = arith.cmpf ogt, %398, %466 : vector<1x32xf32>
    %cst_225 = arith.constant 1.000000e+01 : f32
    %cst_226 = arith.constant 0.000000e+00 : f32
    %468 = vector.broadcast %cst_225 : f32 to vector<1x32xf32>
    %469 = vector.broadcast %cst_226 : f32 to vector<1x32xf32>
    %470 = arith.select %467, %468, %469 : vector<1x32xi1>, vector<1x32xf32>
    %471 = arith.select %465, %398, %470 : vector<1x32xi1>, vector<1x32xf32>
    %cst_227 = arith.constant -1.000000e+01 : f32
    %472 = vector.broadcast %cst_227 : f32 to vector<1x32xf32>
    %473 = arith.cmpf ogt, %471, %472 : vector<1x32xf32>
    %cst_228 = arith.constant -1.000000e+01 : f32
    %474 = vector.broadcast %cst_228 : f32 to vector<1x32xf32>
    %475 = arith.cmpf olt, %471, %474 : vector<1x32xf32>
    %cst_229 = arith.constant -1.000000e+01 : f32
    %cst_230 = arith.constant 0.000000e+00 : f32
    %476 = vector.broadcast %cst_229 : f32 to vector<1x32xf32>
    %477 = vector.broadcast %cst_230 : f32 to vector<1x32xf32>
    %478 = arith.select %475, %476, %477 : vector<1x32xi1>, vector<1x32xf32>
    %479 = arith.select %473, %471, %478 : vector<1x32xi1>, vector<1x32xf32>
    %cst_231 = arith.constant 0.00999999977 : f32
    %480 = vector.broadcast %cst_231 : f32 to vector<1x32xf32>
    %481 = arith.mulf %480, %479 : vector<1x32xf32>
    %482 = arith.subf %321, %481 : vector<1x32xf32>
    %cst_232 = arith.constant 1.000000e+01 : f32
    %483 = vector.broadcast %cst_232 : f32 to vector<1x32xf32>
    %484 = arith.cmpf olt, %386, %483 : vector<1x32xf32>
    %cst_233 = arith.constant 1.000000e+01 : f32
    %485 = vector.broadcast %cst_233 : f32 to vector<1x32xf32>
    %486 = arith.cmpf ogt, %386, %485 : vector<1x32xf32>
    %cst_234 = arith.constant 1.000000e+01 : f32
    %cst_235 = arith.constant 0.000000e+00 : f32
    %487 = vector.broadcast %cst_234 : f32 to vector<1x32xf32>
    %488 = vector.broadcast %cst_235 : f32 to vector<1x32xf32>
    %489 = arith.select %486, %487, %488 : vector<1x32xi1>, vector<1x32xf32>
    %490 = arith.select %484, %386, %489 : vector<1x32xi1>, vector<1x32xf32>
    %cst_236 = arith.constant -1.000000e+01 : f32
    %491 = vector.broadcast %cst_236 : f32 to vector<1x32xf32>
    %492 = arith.cmpf ogt, %490, %491 : vector<1x32xf32>
    %cst_237 = arith.constant -1.000000e+01 : f32
    %493 = vector.broadcast %cst_237 : f32 to vector<1x32xf32>
    %494 = arith.cmpf olt, %490, %493 : vector<1x32xf32>
    %cst_238 = arith.constant -1.000000e+01 : f32
    %cst_239 = arith.constant 0.000000e+00 : f32
    %495 = vector.broadcast %cst_238 : f32 to vector<1x32xf32>
    %496 = vector.broadcast %cst_239 : f32 to vector<1x32xf32>
    %497 = arith.select %494, %495, %496 : vector<1x32xi1>, vector<1x32xf32>
    %498 = arith.select %492, %490, %497 : vector<1x32xi1>, vector<1x32xf32>
    %cst_240 = arith.constant 0.00999999977 : f32
    %499 = vector.broadcast %cst_240 : f32 to vector<1x32xf32>
    %500 = arith.mulf %499, %498 : vector<1x32xf32>
    %501 = arith.subf %340, %500 : vector<1x32xf32>
    %cst_241 = arith.constant 1.000000e+01 : f32
    %502 = vector.broadcast %cst_241 : f32 to vector<1x1xf32>
    %503 = arith.cmpf olt, %388, %502 : vector<1x1xf32>
    %cst_242 = arith.constant 1.000000e+01 : f32
    %504 = vector.broadcast %cst_242 : f32 to vector<1x1xf32>
    %505 = arith.cmpf ogt, %388, %504 : vector<1x1xf32>
    %cst_243 = arith.constant 1.000000e+01 : f32
    %cst_244 = arith.constant 0.000000e+00 : f32
    %506 = vector.broadcast %cst_243 : f32 to vector<1x1xf32>
    %507 = vector.broadcast %cst_244 : f32 to vector<1x1xf32>
    %508 = arith.select %505, %506, %507 : vector<1x1xi1>, vector<1x1xf32>
    %509 = arith.select %503, %388, %508 : vector<1x1xi1>, vector<1x1xf32>
    %cst_245 = arith.constant -1.000000e+01 : f32
    %510 = vector.broadcast %cst_245 : f32 to vector<1x1xf32>
    %511 = arith.cmpf ogt, %509, %510 : vector<1x1xf32>
    %cst_246 = arith.constant -1.000000e+01 : f32
    %512 = vector.broadcast %cst_246 : f32 to vector<1x1xf32>
    %513 = arith.cmpf olt, %509, %512 : vector<1x1xf32>
    %cst_247 = arith.constant -1.000000e+01 : f32
    %cst_248 = arith.constant 0.000000e+00 : f32
    %514 = vector.broadcast %cst_247 : f32 to vector<1x1xf32>
    %515 = vector.broadcast %cst_248 : f32 to vector<1x1xf32>
    %516 = arith.select %513, %514, %515 : vector<1x1xi1>, vector<1x1xf32>
    %517 = arith.select %511, %509, %516 : vector<1x1xi1>, vector<1x1xf32>
    %cst_249 = arith.constant 0.00999999977 : f32
    %518 = vector.broadcast %cst_249 : f32 to vector<1x1xf32>
    %519 = arith.mulf %518, %517 : vector<1x1xf32>
    %520 = arith.subf %359, %519 : vector<1x1xf32>
    %c0_250 = arith.constant 0 : index
    %c24_251 = arith.constant 24 : index
    %c0_252 = arith.constant 0 : index
    %521 = vector.load %arg2[%c0_250, %c24_251, %c0_252] : memref<1x40x17xf32, #tpu.memory_space<vmem>>, vector<1x8x16xf32>
    %522 = vector.shape_cast %521 : vector<1x8x16xf32> to vector<8x16xf32>
    %c0_253 = arith.constant 0 : index
    %c24_254 = arith.constant 24 : index
    %c16_255 = arith.constant 16 : index
    %523 = vector.load %arg2[%c0_253, %c24_254, %c16_255] : memref<1x40x17xf32, #tpu.memory_space<vmem>>, vector<1x8x1xf32>
    %524 = vector.shape_cast %523 : vector<1x8x1xf32> to vector<8x1xf32>
    %cst_256 = arith.constant dense<0.000000e+00> : vector<8x32xf32>
    %525 = tpu.matmul %522, %425, %cst_256 {dimension_numbers = #tpu.dot_dimension_numbers<[1], [0], [0], [1], [0, 0, 1, 1], [], []>} : vector<8x16xf32>, vector<16x32xf32>, vector<8x32xf32> -> vector<8x32xf32>
    %526 = vector.broadcast %444 : vector<1x32xf32> to vector<8x32xf32>
    %527 = arith.addf %525, %526 : vector<8x32xf32>
    %cst_257 = arith.constant 0.000000e+00 : f32
    %528 = vector.broadcast %cst_257 : f32 to vector<8x32xf32>
    %529 = arith.maximumf %527, %528 : vector<8x32xf32>
    %cst_258 = arith.constant dense<0.000000e+00> : vector<8x32xf32>
    %530 = tpu.matmul %529, %463, %cst_258 {dimension_numbers = #tpu.dot_dimension_numbers<[1], [0], [0], [1], [0, 0, 1, 1], [], []>} : vector<8x32xf32>, vector<32x32xf32>, vector<8x32xf32> -> vector<8x32xf32>
    %531 = vector.broadcast %482 : vector<1x32xf32> to vector<8x32xf32>
    %532 = arith.addf %530, %531 : vector<8x32xf32>
    %cst_259 = arith.constant 0.000000e+00 : f32
    %533 = vector.broadcast %cst_259 : f32 to vector<8x32xf32>
    %534 = arith.maximumf %532, %533 : vector<8x32xf32>
    %535 = vector.broadcast %501 : vector<1x32xf32> to vector<8x32xf32>
    %536 = arith.mulf %534, %535 : vector<8x32xf32>
    %cst_260 = arith.constant dense<0.000000e+00> : vector<8xf32>
    %537 = vector.multi_reduction <add>, %536, %cst_260 [1] : vector<8x32xf32> to vector<8xf32>
    %538 = vector.shape_cast %537 : vector<8xf32> to vector<8x1xf32>
    %539 = vector.broadcast %520 : vector<1x1xf32> to vector<8x1xf32>
    %540 = arith.addf %538, %539 : vector<8x1xf32>
    %541 = arith.subf %540, %524 : vector<8x1xf32>
    %cst_261 = arith.constant 2.500000e-01 : f32
    %542 = vector.broadcast %cst_261 : f32 to vector<8x1xf32>
    %543 = arith.mulf %542, %541 : vector<8x1xf32>
    %544 = vector.broadcast %543 : vector<8x1xf32> to vector<8x32xf32>
    %545 = arith.mulf %544, %534 : vector<8x32xf32>
    %cst_262 = arith.constant dense<0.000000e+00> : vector<32xf32>
    %546 = vector.multi_reduction <add>, %545, %cst_262 [0] : vector<8x32xf32> to vector<32xf32>
    %547 = vector.shape_cast %546 : vector<32xf32> to vector<1x32xf32>
    %cst_263 = arith.constant dense<0.000000e+00> : vector<1xf32>
    %548 = vector.multi_reduction <add>, %543, %cst_263 [0] : vector<8x1xf32> to vector<1xf32>
    %549 = vector.shape_cast %548 : vector<1xf32> to vector<1x1xf32>
    %550 = vector.broadcast %543 : vector<8x1xf32> to vector<8x32xf32>
    %551 = vector.broadcast %501 : vector<1x32xf32> to vector<8x32xf32>
    %552 = arith.mulf %550, %551 : vector<8x32xf32>
    %cst_264 = arith.constant 0.000000e+00 : f32
    %553 = vector.broadcast %cst_264 : f32 to vector<8x32xf32>
    %554 = arith.cmpf ogt, %532, %553 : vector<8x32xf32>
    %cst_265 = arith.constant 0.000000e+00 : f32
    %555 = vector.broadcast %cst_265 : f32 to vector<8x32xf32>
    %556 = arith.select %554, %552, %555 : vector<8x32xi1>, vector<8x32xf32>
    %cst_266 = arith.constant dense<0.000000e+00> : vector<32x32xf32>
    %557 = tpu.matmul %529, %556, %cst_266 {dimension_numbers = #tpu.dot_dimension_numbers<[0], [0], [1], [1], [0, 1, 1, 1], [], []>} : vector<8x32xf32>, vector<8x32xf32>, vector<32x32xf32> -> vector<32x32xf32>
    %cst_267 = arith.constant dense<0.000000e+00> : vector<32xf32>
    %558 = vector.multi_reduction <add>, %556, %cst_267 [0] : vector<8x32xf32> to vector<32xf32>
    %559 = vector.shape_cast %558 : vector<32xf32> to vector<1x32xf32>
    %cst_268 = arith.constant dense<0.000000e+00> : vector<8x32xf32>
    %560 = tpu.matmul %556, %463, %cst_268 {dimension_numbers = #tpu.dot_dimension_numbers<[1], [1], [0], [0], [0, 0, 1, 0], [], []>} : vector<8x32xf32>, vector<32x32xf32>, vector<8x32xf32> -> vector<8x32xf32>
    %cst_269 = arith.constant 0.000000e+00 : f32
    %561 = vector.broadcast %cst_269 : f32 to vector<8x32xf32>
    %562 = arith.cmpf ogt, %527, %561 : vector<8x32xf32>
    %cst_270 = arith.constant 0.000000e+00 : f32
    %563 = vector.broadcast %cst_270 : f32 to vector<8x32xf32>
    %564 = arith.select %562, %560, %563 : vector<8x32xi1>, vector<8x32xf32>
    %cst_271 = arith.constant dense<0.000000e+00> : vector<16x32xf32>
    %565 = tpu.matmul %522, %564, %cst_271 {dimension_numbers = #tpu.dot_dimension_numbers<[0], [0], [1], [1], [0, 1, 1, 1], [], []>} : vector<8x16xf32>, vector<8x32xf32>, vector<16x32xf32> -> vector<16x32xf32>
    %cst_272 = arith.constant dense<0.000000e+00> : vector<32xf32>
    %566 = vector.multi_reduction <add>, %564, %cst_272 [0] : vector<8x32xf32> to vector<32xf32>
    %567 = vector.shape_cast %566 : vector<32xf32> to vector<1x32xf32>
    %cst_273 = arith.constant 1.000000e+01 : f32
    %568 = vector.broadcast %cst_273 : f32 to vector<16x32xf32>
    %569 = arith.cmpf olt, %565, %568 : vector<16x32xf32>
    %cst_274 = arith.constant 1.000000e+01 : f32
    %570 = vector.broadcast %cst_274 : f32 to vector<16x32xf32>
    %571 = arith.cmpf ogt, %565, %570 : vector<16x32xf32>
    %cst_275 = arith.constant 1.000000e+01 : f32
    %cst_276 = arith.constant 0.000000e+00 : f32
    %572 = vector.broadcast %cst_275 : f32 to vector<16x32xf32>
    %573 = vector.broadcast %cst_276 : f32 to vector<16x32xf32>
    %574 = arith.select %571, %572, %573 : vector<16x32xi1>, vector<16x32xf32>
    %575 = arith.select %569, %565, %574 : vector<16x32xi1>, vector<16x32xf32>
    %cst_277 = arith.constant -1.000000e+01 : f32
    %576 = vector.broadcast %cst_277 : f32 to vector<16x32xf32>
    %577 = arith.cmpf ogt, %575, %576 : vector<16x32xf32>
    %cst_278 = arith.constant -1.000000e+01 : f32
    %578 = vector.broadcast %cst_278 : f32 to vector<16x32xf32>
    %579 = arith.cmpf olt, %575, %578 : vector<16x32xf32>
    %cst_279 = arith.constant -1.000000e+01 : f32
    %cst_280 = arith.constant 0.000000e+00 : f32
    %580 = vector.broadcast %cst_279 : f32 to vector<16x32xf32>
    %581 = vector.broadcast %cst_280 : f32 to vector<16x32xf32>
    %582 = arith.select %579, %580, %581 : vector<16x32xi1>, vector<16x32xf32>
    %583 = arith.select %577, %575, %582 : vector<16x32xi1>, vector<16x32xf32>
    %cst_281 = arith.constant 0.00999999977 : f32
    %584 = vector.broadcast %cst_281 : f32 to vector<16x32xf32>
    %585 = arith.mulf %584, %583 : vector<16x32xf32>
    %586 = arith.subf %425, %585 : vector<16x32xf32>
    %cst_282 = arith.constant 1.000000e+01 : f32
    %587 = vector.broadcast %cst_282 : f32 to vector<1x32xf32>
    %588 = arith.cmpf olt, %567, %587 : vector<1x32xf32>
    %cst_283 = arith.constant 1.000000e+01 : f32
    %589 = vector.broadcast %cst_283 : f32 to vector<1x32xf32>
    %590 = arith.cmpf ogt, %567, %589 : vector<1x32xf32>
    %cst_284 = arith.constant 1.000000e+01 : f32
    %cst_285 = arith.constant 0.000000e+00 : f32
    %591 = vector.broadcast %cst_284 : f32 to vector<1x32xf32>
    %592 = vector.broadcast %cst_285 : f32 to vector<1x32xf32>
    %593 = arith.select %590, %591, %592 : vector<1x32xi1>, vector<1x32xf32>
    %594 = arith.select %588, %567, %593 : vector<1x32xi1>, vector<1x32xf32>
    %cst_286 = arith.constant -1.000000e+01 : f32
    %595 = vector.broadcast %cst_286 : f32 to vector<1x32xf32>
    %596 = arith.cmpf ogt, %594, %595 : vector<1x32xf32>
    %cst_287 = arith.constant -1.000000e+01 : f32
    %597 = vector.broadcast %cst_287 : f32 to vector<1x32xf32>
    %598 = arith.cmpf olt, %594, %597 : vector<1x32xf32>
    %cst_288 = arith.constant -1.000000e+01 : f32
    %cst_289 = arith.constant 0.000000e+00 : f32
    %599 = vector.broadcast %cst_288 : f32 to vector<1x32xf32>
    %600 = vector.broadcast %cst_289 : f32 to vector<1x32xf32>
    %601 = arith.select %598, %599, %600 : vector<1x32xi1>, vector<1x32xf32>
    %602 = arith.select %596, %594, %601 : vector<1x32xi1>, vector<1x32xf32>
    %cst_290 = arith.constant 0.00999999977 : f32
    %603 = vector.broadcast %cst_290 : f32 to vector<1x32xf32>
    %604 = arith.mulf %603, %602 : vector<1x32xf32>
    %605 = arith.subf %444, %604 : vector<1x32xf32>
    %cst_291 = arith.constant 1.000000e+01 : f32
    %606 = vector.broadcast %cst_291 : f32 to vector<32x32xf32>
    %607 = arith.cmpf olt, %557, %606 : vector<32x32xf32>
    %cst_292 = arith.constant 1.000000e+01 : f32
    %608 = vector.broadcast %cst_292 : f32 to vector<32x32xf32>
    %609 = arith.cmpf ogt, %557, %608 : vector<32x32xf32>
    %cst_293 = arith.constant 1.000000e+01 : f32
    %cst_294 = arith.constant 0.000000e+00 : f32
    %610 = vector.broadcast %cst_293 : f32 to vector<32x32xf32>
    %611 = vector.broadcast %cst_294 : f32 to vector<32x32xf32>
    %612 = arith.select %609, %610, %611 : vector<32x32xi1>, vector<32x32xf32>
    %613 = arith.select %607, %557, %612 : vector<32x32xi1>, vector<32x32xf32>
    %cst_295 = arith.constant -1.000000e+01 : f32
    %614 = vector.broadcast %cst_295 : f32 to vector<32x32xf32>
    %615 = arith.cmpf ogt, %613, %614 : vector<32x32xf32>
    %cst_296 = arith.constant -1.000000e+01 : f32
    %616 = vector.broadcast %cst_296 : f32 to vector<32x32xf32>
    %617 = arith.cmpf olt, %613, %616 : vector<32x32xf32>
    %cst_297 = arith.constant -1.000000e+01 : f32
    %cst_298 = arith.constant 0.000000e+00 : f32
    %618 = vector.broadcast %cst_297 : f32 to vector<32x32xf32>
    %619 = vector.broadcast %cst_298 : f32 to vector<32x32xf32>
    %620 = arith.select %617, %618, %619 : vector<32x32xi1>, vector<32x32xf32>
    %621 = arith.select %615, %613, %620 : vector<32x32xi1>, vector<32x32xf32>
    %cst_299 = arith.constant 0.00999999977 : f32
    %622 = vector.broadcast %cst_299 : f32 to vector<32x32xf32>
    %623 = arith.mulf %622, %621 : vector<32x32xf32>
    %624 = arith.subf %463, %623 : vector<32x32xf32>
    %cst_300 = arith.constant 1.000000e+01 : f32
    %625 = vector.broadcast %cst_300 : f32 to vector<1x32xf32>
    %626 = arith.cmpf olt, %559, %625 : vector<1x32xf32>
    %cst_301 = arith.constant 1.000000e+01 : f32
    %627 = vector.broadcast %cst_301 : f32 to vector<1x32xf32>
    %628 = arith.cmpf ogt, %559, %627 : vector<1x32xf32>
    %cst_302 = arith.constant 1.000000e+01 : f32
    %cst_303 = arith.constant 0.000000e+00 : f32
    %629 = vector.broadcast %cst_302 : f32 to vector<1x32xf32>
    %630 = vector.broadcast %cst_303 : f32 to vector<1x32xf32>
    %631 = arith.select %628, %629, %630 : vector<1x32xi1>, vector<1x32xf32>
    %632 = arith.select %626, %559, %631 : vector<1x32xi1>, vector<1x32xf32>
    %cst_304 = arith.constant -1.000000e+01 : f32
    %633 = vector.broadcast %cst_304 : f32 to vector<1x32xf32>
    %634 = arith.cmpf ogt, %632, %633 : vector<1x32xf32>
    %cst_305 = arith.constant -1.000000e+01 : f32
    %635 = vector.broadcast %cst_305 : f32 to vector<1x32xf32>
    %636 = arith.cmpf olt, %632, %635 : vector<1x32xf32>
    %cst_306 = arith.constant -1.000000e+01 : f32
    %cst_307 = arith.constant 0.000000e+00 : f32
    %637 = vector.broadcast %cst_306 : f32 to vector<1x32xf32>
    %638 = vector.broadcast %cst_307 : f32 to vector<1x32xf32>
    %639 = arith.select %636, %637, %638 : vector<1x32xi1>, vector<1x32xf32>
    %640 = arith.select %634, %632, %639 : vector<1x32xi1>, vector<1x32xf32>
    %cst_308 = arith.constant 0.00999999977 : f32
    %641 = vector.broadcast %cst_308 : f32 to vector<1x32xf32>
    %642 = arith.mulf %641, %640 : vector<1x32xf32>
    %643 = arith.subf %482, %642 : vector<1x32xf32>
    %cst_309 = arith.constant 1.000000e+01 : f32
    %644 = vector.broadcast %cst_309 : f32 to vector<1x32xf32>
    %645 = arith.cmpf olt, %547, %644 : vector<1x32xf32>
    %cst_310 = arith.constant 1.000000e+01 : f32
    %646 = vector.broadcast %cst_310 : f32 to vector<1x32xf32>
    %647 = arith.cmpf ogt, %547, %646 : vector<1x32xf32>
    %cst_311 = arith.constant 1.000000e+01 : f32
    %cst_312 = arith.constant 0.000000e+00 : f32
    %648 = vector.broadcast %cst_311 : f32 to vector<1x32xf32>
    %649 = vector.broadcast %cst_312 : f32 to vector<1x32xf32>
    %650 = arith.select %647, %648, %649 : vector<1x32xi1>, vector<1x32xf32>
    %651 = arith.select %645, %547, %650 : vector<1x32xi1>, vector<1x32xf32>
    %cst_313 = arith.constant -1.000000e+01 : f32
    %652 = vector.broadcast %cst_313 : f32 to vector<1x32xf32>
    %653 = arith.cmpf ogt, %651, %652 : vector<1x32xf32>
    %cst_314 = arith.constant -1.000000e+01 : f32
    %654 = vector.broadcast %cst_314 : f32 to vector<1x32xf32>
    %655 = arith.cmpf olt, %651, %654 : vector<1x32xf32>
    %cst_315 = arith.constant -1.000000e+01 : f32
    %cst_316 = arith.constant 0.000000e+00 : f32
    %656 = vector.broadcast %cst_315 : f32 to vector<1x32xf32>
    %657 = vector.broadcast %cst_316 : f32 to vector<1x32xf32>
    %658 = arith.select %655, %656, %657 : vector<1x32xi1>, vector<1x32xf32>
    %659 = arith.select %653, %651, %658 : vector<1x32xi1>, vector<1x32xf32>
    %cst_317 = arith.constant 0.00999999977 : f32
    %660 = vector.broadcast %cst_317 : f32 to vector<1x32xf32>
    %661 = arith.mulf %660, %659 : vector<1x32xf32>
    %662 = arith.subf %501, %661 : vector<1x32xf32>
    %cst_318 = arith.constant 1.000000e+01 : f32
    %663 = vector.broadcast %cst_318 : f32 to vector<1x1xf32>
    %664 = arith.cmpf olt, %549, %663 : vector<1x1xf32>
    %cst_319 = arith.constant 1.000000e+01 : f32
    %665 = vector.broadcast %cst_319 : f32 to vector<1x1xf32>
    %666 = arith.cmpf ogt, %549, %665 : vector<1x1xf32>
    %cst_320 = arith.constant 1.000000e+01 : f32
    %cst_321 = arith.constant 0.000000e+00 : f32
    %667 = vector.broadcast %cst_320 : f32 to vector<1x1xf32>
    %668 = vector.broadcast %cst_321 : f32 to vector<1x1xf32>
    %669 = arith.select %666, %667, %668 : vector<1x1xi1>, vector<1x1xf32>
    %670 = arith.select %664, %549, %669 : vector<1x1xi1>, vector<1x1xf32>
    %cst_322 = arith.constant -1.000000e+01 : f32
    %671 = vector.broadcast %cst_322 : f32 to vector<1x1xf32>
    %672 = arith.cmpf ogt, %670, %671 : vector<1x1xf32>
    %cst_323 = arith.constant -1.000000e+01 : f32
    %673 = vector.broadcast %cst_323 : f32 to vector<1x1xf32>
    %674 = arith.cmpf olt, %670, %673 : vector<1x1xf32>
    %cst_324 = arith.constant -1.000000e+01 : f32
    %cst_325 = arith.constant 0.000000e+00 : f32
    %675 = vector.broadcast %cst_324 : f32 to vector<1x1xf32>
    %676 = vector.broadcast %cst_325 : f32 to vector<1x1xf32>
    %677 = arith.select %674, %675, %676 : vector<1x1xi1>, vector<1x1xf32>
    %678 = arith.select %672, %670, %677 : vector<1x1xi1>, vector<1x1xf32>
    %cst_326 = arith.constant 0.00999999977 : f32
    %679 = vector.broadcast %cst_326 : f32 to vector<1x1xf32>
    %680 = arith.mulf %679, %678 : vector<1x1xf32>
    %681 = arith.subf %520, %680 : vector<1x1xf32>
    %cst_327 = arith.constant dense<0.000000e+00> : vector<8x32xf32>
    %682 = tpu.matmul %7, %586, %cst_327 {dimension_numbers = #tpu.dot_dimension_numbers<[1], [0], [0], [1], [0, 0, 1, 1], [], []>} : vector<8x16xf32>, vector<16x32xf32>, vector<8x32xf32> -> vector<8x32xf32>
    %683 = vector.broadcast %605 : vector<1x32xf32> to vector<8x32xf32>
    %684 = arith.addf %682, %683 : vector<8x32xf32>
    %cst_328 = arith.constant 0.000000e+00 : f32
    %685 = vector.broadcast %cst_328 : f32 to vector<8x32xf32>
    %686 = arith.maximumf %684, %685 : vector<8x32xf32>
    %cst_329 = arith.constant dense<0.000000e+00> : vector<8x32xf32>
    %687 = tpu.matmul %686, %624, %cst_329 {dimension_numbers = #tpu.dot_dimension_numbers<[1], [0], [0], [1], [0, 0, 1, 1], [], []>} : vector<8x32xf32>, vector<32x32xf32>, vector<8x32xf32> -> vector<8x32xf32>
    %688 = vector.broadcast %643 : vector<1x32xf32> to vector<8x32xf32>
    %689 = arith.addf %687, %688 : vector<8x32xf32>
    %cst_330 = arith.constant 0.000000e+00 : f32
    %690 = vector.broadcast %cst_330 : f32 to vector<8x32xf32>
    %691 = arith.maximumf %689, %690 : vector<8x32xf32>
    %692 = vector.broadcast %662 : vector<1x32xf32> to vector<8x32xf32>
    %693 = arith.mulf %691, %692 : vector<8x32xf32>
    %cst_331 = arith.constant dense<0.000000e+00> : vector<8xf32>
    %694 = vector.multi_reduction <add>, %693, %cst_331 [1] : vector<8x32xf32> to vector<8xf32>
    %695 = vector.shape_cast %694 : vector<8xf32> to vector<8x1xf32>
    %696 = vector.broadcast %681 : vector<1x1xf32> to vector<8x1xf32>
    %697 = arith.addf %695, %696 : vector<8x1xf32>
    %698 = arith.subf %697, %9 : vector<8x1xf32>
    %699 = arith.mulf %698, %698 : vector<8x1xf32>
    %700 = vector.shape_cast %699 : vector<8x1xf32> to vector<1x8x1xf32>
    %cst_332 = arith.constant dense<0.000000e+00> : vector<1xf32>
    %701 = vector.multi_reduction <add>, %700, %cst_332 [1, 2] : vector<1x8x1xf32> to vector<1xf32>
    %702 = vector.shape_cast %701 : vector<1xf32> to vector<1x1x1xf32>
    %703 = vector.extract %702[0, 0, 0] : f32 from vector<1x1x1xf32>
    %704 = vector.broadcast %703 : f32 to vector<1x1xf32>
    %cst_333 = arith.constant 1.250000e-01 : f32
    %705 = vector.broadcast %cst_333 : f32 to vector<1x1xf32>
    %706 = arith.mulf %704, %705 : vector<1x1xf32>
    %c0_334 = arith.constant 0 : index
    %c0_335 = arith.constant 0 : index
    %c0_336 = arith.constant 0 : index
    %707 = vector.load %arg4[%c0_334, %c0_335, %c0_336] : memref<1x1x1xf32, #tpu.memory_space<vmem>>, vector<1x1x1xf32>
    %708 = vector.shape_cast %707 : vector<1x1x1xf32> to vector<1x1xf32>
    %709 = vector.shape_cast %706 : vector<1x1xf32> to vector<1x1x1xf32>
    tpu.vector_store %arg4[%c0_334, %c0_335, %c0_336], %709 {strides = array<i32>} : memref<1x1x1xf32, #tpu.memory_space<vmem>>, vector<1x1x1xf32>,
    return
  }
  func.func @transform_0(%arg0: i32) -> (i32, i32) {
    %c0_i32 = arith.constant 0 : i32
    %c0_i32_0 = arith.constant 0 : i32
    %c0_i32_1 = arith.constant 0 : i32
    return %c0_i32, %c0_i32_0 : i32, i32
  }
  func.func @transform_1(%arg0: i32) -> (i32, i32, i32) {
    %c0_i32 = arith.constant 0 : i32
    %c0_i32_0 = arith.constant 0 : i32
    %c0_i32_1 = arith.constant 0 : i32
    return %arg0, %c0_i32, %c0_i32_0 : i32, i32, i32
  }
  func.func @transform_2(%arg0: i32) -> (i32, i32, i32) {
    %c0_i32 = arith.constant 0 : i32
    %c0_i32_0 = arith.constant 0 : i32
    %c0_i32_1 = arith.constant 0 : i32
    return %arg0, %c0_i32, %c0_i32_0 : i32, i32, i32
  }
  func.func @transform_3(%arg0: i32) -> (i32, i32, i32) {
    %c0_i32 = arith.constant 0 : i32
    %c0_i32_0 = arith.constant 0 : i32
    %c0_i32_1 = arith.constant 0 : i32
    return %arg0, %c0_i32, %c0_i32_0 : i32, i32, i32
  }
}

</mosaic_0001>

<llo_original>
// kernel: meta_learner_regression_forward.1
$region0: #{meta_learner_regression_forward.1}
  #allocation0 [shape = 'u32[]', space=smem, size = 0x4, offset = 0x4, fixed_abs, tag = 'smem constant byte address 0x4 - core index']
  #allocation1 [shape = 'u32[72,128]{1,0:T(1,128)}', space=vmem, size = 0x9000, scoped, tag = 'internal scratch']
  %s0 = inlined_call_operand.vmem [shape: f32[80,32], index: 0, kind: input, shape index: {}]
  %s1 = inlined_call_operand.vmem [shape: f32[8,40,17], index: 1, kind: input, shape index: {}]
  %s2 = inlined_call_operand.vmem [shape: f32[8,1,1], index: 2, kind: output, shape index: {0}]
  %s3 = inlined_call_operand.vmem [shape: f32[8,1,1], index: 3, kind: output, shape index: {1}]
  %4 = xla_tuple %s2, %s3
  %s5 = sld [smem:[#allocation0]]
  $region49: #{meta_learner_regression_forward.1} parent=0
    _
  %s7 = ssub.s32 1, %s5
  %s8 = scalar_select 0, %s7, %s5
  loop: start=0, step=1, limit=10
  $region2: #{meta_learner_regression_forward.1} parent=0 // loop_pre_header
    _
  $region3: #{meta_learner_regression_forward.1} parent=0 // loop_header
    %s10 = sphi 0, %s14
    %p11 = scmp.ge.s32.totalorder %s10, 10
    %s18 = sphi 0, %s18
    %s20 = sphi 0, %s18
    %s21 = sphi 0, %s20
    %s35 = sphi 0, %s21
    %s41 = sphi 0, %s43
    %s44 = sphi 0, %s41
    %s45 = sphi 0, %s44
    %s61 = sphi 0, %s45
    %s67 = sphi 0, %s69
    %s70 = sphi 0, %s67
    %s71 = sphi 0, %s70
    %s87 = sphi 0, %s71
    %s93 = sphi 0, %s95
    %s96 = sphi 0, %s93
    %s97 = sphi 0, %s96
    %s113 = sphi 0, %s97
  $region4: #{meta_learner_regression_forward.1} parent=0 // loop_header_branch
    %13 = sbr.rel (%p11) target = $region8
  $region5: #{meta_learner_regression_forward.1} parent=0 // loop_body
    %s15 = ssub.s32 %s10, 1
    %s16 = ssub.s32 %s10, 2
    %s17 = sadd.s32 %s10, 1
    %s19 = sadd.s32 %s18, 1
    %p22 = scmp.eq.s32.totalorder %s10, 7
    %p23 = scmp.ne.s32.totalorder %s18, %s20
    %p24 = scmp.eq.s32.totalorder %s10, 0
    %p25 = por %p23, %p24
    %p26 = scmp.ne.s32.totalorder %s18, %s20
    %p27 = scmp.eq.s32.totalorder %s15, 7
    %p28 = por %p26, %p27
    %p29 = scmp.ne.s32.totalorder %s20, %s21
    %p30 = scmp.eq.s32.totalorder %s15, 0
    %p31 = por %p29, %p30
    %p32 = scmp.ne.s32.totalorder %s20, %s21
    %p33 = scmp.eq.s32.totalorder %s16, 7
    %p34 = por %p32, %p33
    %p36 = scmp.ne.s32.totalorder %s21, %s35
    %p37 = scmp.eq.s32.totalorder %s16, 0
    %p38 = por %p36, %p37
    %s39 = ssub.s32 %s10, %s17
    %p40 = scmp.eq.s32.totalorder %s39, 0
    %s42 = sadd.s32 %s41, 1
    %s43 = scalar_select %p40, %s41, %s42
    %p46 = pneg %p40
    %p47 = scmp.eq.s32.totalorder %s10, 7
    %p48 = por %p46, %p47
    %p49 = scmp.ne.s32.totalorder %s41, %s44
    %p50 = scmp.eq.s32.totalorder %s10, 0
    %p51 = por %p49, %p50
    %p52 = scmp.ne.s32.totalorder %s41, %s44
    %p53 = scmp.eq.s32.totalorder %s15, 7
    %p54 = por %p52, %p53
    %p55 = scmp.ne.s32.totalorder %s44, %s45
    %p56 = scmp.eq.s32.totalorder %s15, 0
    %p57 = por %p55, %p56
    %p58 = scmp.ne.s32.totalorder %s44, %s45
    %p59 = scmp.eq.s32.totalorder %s16, 7
    %p60 = por %p58, %p59
    %p62 = scmp.ne.s32.totalorder %s45, %s61
    %p63 = scmp.eq.s32.totalorder %s16, 0
    %p64 = por %p62, %p63
    %s65 = ssub.s32 %s10, %s17
    %p66 = scmp.eq.s32.totalorder %s65, 0
    %s68 = sadd.s32 %s67, 1
    %s69 = scalar_select %p66, %s67, %s68
    %p72 = pneg %p66
    %p73 = scmp.eq.s32.totalorder %s10, 7
    %p74 = por %p72, %p73
    %p75 = scmp.ne.s32.totalorder %s67, %s70
    %p76 = scmp.eq.s32.totalorder %s10, 0
    %p77 = por %p75, %p76
    %p78 = scmp.ne.s32.totalorder %s67, %s70
    %p79 = scmp.eq.s32.totalorder %s15, 7
    %p80 = por %p78, %p79
    %p81 = scmp.ne.s32.totalorder %s70, %s71
    %p82 = scmp.eq.s32.totalorder %s15, 0
    %p83 = por %p81, %p82
    %p84 = scmp.ne.s32.totalorder %s70, %s71
    %p85 = scmp.eq.s32.totalorder %s16, 7
    %p86 = por %p84, %p85
    %p88 = scmp.ne.s32.totalorder %s71, %s87
    %p89 = scmp.eq.s32.totalorder %s16, 0
    %p90 = por %p88, %p89
    %s91 = ssub.s32 %s10, %s17
    %p92 = scmp.eq.s32.totalorder %s91, 0
    %s94 = sadd.s32 %s93, 1
    %s95 = scalar_select %p92, %s93, %s94
    %p98 = pneg %p92
    %p99 = scmp.eq.s32.totalorder %s10, 7
    %p100 = por %p98, %p99
    %p101 = scmp.ne.s32.totalorder %s93, %s96
    %p102 = scmp.eq.s32.totalorder %s10, 0
    %p103 = por %p101, %p102
    %p104 = scmp.ne.s32.totalorder %s93, %s96
    %p105 = scmp.eq.s32.totalorder %s15, 7
    %p106 = por %p104, %p105
    %p107 = scmp.ne.s32.totalorder %s96, %s97
    %p108 = scmp.eq.s32.totalorder %s15, 0
    %p109 = por %p107, %p108
    %p110 = scmp.ne.s32.totalorder %s96, %s97
    %p111 = scmp.eq.s32.totalorder %s16, 7
    %p112 = por %p110, %p111
    %p114 = scmp.ne.s32.totalorder %s97, %s113
    %p115 = scmp.eq.s32.totalorder %s16, 0
    %p116 = por %p114, %p115
    %p117 = scmp.le.s32.totalorder 1, %s10
    %p118 = scmp.lt.s32.totalorder %s10, 9
    %p119 = pnand %p117, %p118
    %p120 = pneg %p119
    // Predicated region
    $region9: #{meta_learner_regression_forward.1} parent=5 // pred_check
      _
    $region10: #{meta_learner_regression_forward.1} parent=5 // pred_check_branch
      %122 = sbr.rel (%p119) target = $region12
    $region11: #{meta_learner_regression_forward.1} parent=5 // pred_region
      %s123 = ssub.s32 %s10, 1
      // Predicated region
      $region13: #{meta_learner_regression_forward.1} parent=11 // pred_check
        %p124 = pneg %p31
      $region14: #{meta_learner_regression_forward.1} parent=11 // pred_check_branch
        %126 = sbr.rel (%p124) target = $region16
      $region15: #{meta_learner_regression_forward.1} parent=11 // pred_region
        _
      $region16: #{meta_learner_regression_forward.1} parent=11 // pred_fallthru
        _
    $region12: #{meta_learner_regression_forward.1} parent=5 // pred_fallthru
      _
    %p127 = scmp.lt.s32.totalorder %s10, 8
    // Predicated region
    $region17: #{meta_learner_regression_forward.1} parent=5 // pred_check
      %p128 = pneg %p127
    $region18: #{meta_learner_regression_forward.1} parent=5 // pred_check_branch
      %130 = sbr.rel (%p128) target = $region20
    $region19: #{meta_learner_regression_forward.1} parent=5 // pred_region
      // Predicated region
      $region21: #{meta_learner_regression_forward.1} parent=19 // pred_check
        %p131 = pneg %p51
      $region22: #{meta_learner_regression_forward.1} parent=19 // pred_check_branch
        %133 = sbr.rel (%p131) target = $region24
      $region23: #{meta_learner_regression_forward.1} parent=19 // pred_region
        %p134 = scmp.lt.s32.totalorder %s10, 7
        %s135 = scalar_select %p134, %s10, 7
        %s136 = smul.addr %s135, 5
        %s137 = smul.addr %s136, 8
        %s138 = scalar_lea.vmem %s1, %s137
      $region24: #{meta_learner_regression_forward.1} parent=19 // pred_fallthru
        _
    $region20: #{meta_learner_regression_forward.1} parent=5 // pred_fallthru
      _
    %p139 = scmp.le.s32.totalorder 1, %s10
    %p140 = scmp.lt.s32.totalorder %s10, 9
    %p141 = pnand %p139, %p140
    %p142 = pneg %p141
    // Predicated region
    $region25: #{meta_learner_regression_forward.1} parent=5 // pred_check
      _
    $region26: #{meta_learner_regression_forward.1} parent=5 // pred_check_branch
      %144 = sbr.rel (%p141) target = $region28
    $region27: #{meta_learner_regression_forward.1} parent=5 // pred_region
      %s145 = ssub.s32 %s10, 1
      %p146 = pneg %p31
      %p147 = pneg %p28
      %p148 = scmp.lt.s32.totalorder %s15, 7
      %s149 = scalar_select %p148, %s15, 7
      %s150 = smul.addr %s149, 5
      %s151 = smul.addr %s150, 8
      %s152 = scalar_lea.vmem %s1, %s151
      %p153 = pneg %p57
      %p154 = pneg %p54
      %p155 = pneg %p83
      %p156 = pneg %p80
      %p157 = scmp.lt.s32.totalorder %s15, 7
      %s158 = scalar_select %p157, %s15, 7
      %s159 = scalar_lea.vmem %s2, %s158
      %p160 = pneg %p109
      %p161 = pneg %p106
      %p162 = scmp.lt.s32.totalorder %s15, 7
      %s163 = scalar_select %p162, %s15, 7
      %s164 = scalar_lea.vmem %s3, %s163
      %p165 = scmp.lt.s32.totalorder %s15, 7
      %s166 = scalar_select %p165, %s15, 7
      %s167 = smul.addr %s166, 5
      %s168 = smul.addr %s167, 8
      %s169 = scalar_lea.vmem %s1, %s168
      %p170 = scmp.lt.s32.totalorder %s15, 7
      %s171 = scalar_select %p170, %s15, 7
      %s172 = scalar_lea.vmem %s2, %s171
      %p173 = scmp.lt.s32.totalorder %s15, 7
      %s174 = scalar_select %p173, %s15, 7
      %s175 = scalar_lea.vmem %s3, %s174
      %v176 = vld [vmem:[%s0] sm:$0xff]
      %v177 = vld [vmem:[%s0 + $0x8] sm:$0xff]
      %v178 = vld [vmem:[%s0 + $0x10] sm:$0x1]
      %v179 = vld [vmem:[%s0 + $0x18] sm:$0xff]
      %v180 = vld [vmem:[%s0 + $0x20] sm:$0xff]
      %v181 = vld [vmem:[%s0 + $0x28] sm:$0xff]
      %v182 = vld [vmem:[%s0 + $0x30] sm:$0xff]
      %v183 = vld [vmem:[%s0 + $0x38] sm:$0x1]
      %v184 = vld [vmem:[%s0 + $0x40] sm:$0x1]
      %v185 = vld [vmem:[%s0 + $0x48] sm:$0x1]
      %v186 = vld [vmem:[%s169 + $0x20] sm:$0xff]
      %v187 = vperm.slane %v178, 0
      %vm188 = vcmask 130048
      %v190 = vsel %vm188, %v186, 0
      %192 = vmatpush.msra.mxu0 0.0
      %193 = vmatpush.msra.mxu0 0.0
      %194 = vmatpush.msra.mxu0 0.0
      %195 = vmatpush.msra.mxu0 0.0
      %196 = vmatpush.msra.mxu0 0.0
      %197 = vmatpush.msra.mxu0 0.0
      %198 = vmatpush.msra.mxu0 0.0
      %199 = vmatpush.msra.mxu0 0.0
      %200 = vmatpush.msra.mxu0 0.0
      %201 = vmatpush.msra.mxu0 0.0
      %202 = vmatpush.msra.mxu0 0.0
      %203 = vmatpush.msra.mxu0 0.0
      %204 = vmatpush.msra.mxu0 0.0
      %205 = vmatpush.msra.mxu0 0.0
      %206 = vmatpush.msra.mxu0 %v177
      %207 = vmatpush.msra.mxu0 %v176
      %208 = vmatmul.f32.gmra.mxu0 %v190
      %v209 = vpop.f32.mrf.mxu0
      %v210 = vadd.f32 %v187, %v209
      %211 = vdwg.mxu0
      %v212 = vmax.f32 %v210, 0.0
      %v213 = vperm.slane %v183, 0
      %vm214 = vcmask 261120
      %v216 = vsel %vm214, %v212, 0
      %218 = vmatpush.msra.mxu0 0.0
      %219 = vmatpush.msra.mxu0 0.0
      %220 = vmatpush.msra.mxu0 0.0
      %221 = vmatpush.msra.mxu0 0.0
      %222 = vmatpush.msra.mxu0 0.0
      %223 = vmatpush.msra.mxu0 0.0
      %224 = vmatpush.msra.mxu0 0.0
      %225 = vmatpush.msra.mxu0 0.0
      %226 = vmatpush.msra.mxu0 0.0
      %227 = vmatpush.msra.mxu0 0.0
      %228 = vmatpush.msra.mxu0 0.0
      %229 = vmatpush.msra.mxu0 0.0
      %230 = vmatpush.msra.mxu0 %v182
      %231 = vmatpush.msra.mxu0 %v181
      %232 = vmatpush.msra.mxu0 %v180
      %233 = vmatpush.msra.mxu0 %v179
      %234 = vmatmul.f32.gmra.mxu0 %v216
      %v235 = vpop.f32.mrf.mxu0
      %v236 = vadd.f32 %v213, %v235
      %237 = vdwg.mxu0
      %v238 = vmax.f32 %v236, 0.0
      %v239 = vperm.slane %v184, 0
      %v240 = vmul.f32 %v238, %v239
      %v241 = vsel %vm214, %v240, 0.0
      %242 = vadd.xlane.f32.xlu0 %v241
      %v243 = vpop.xlane.xlu0 %242
      %v244 = vperm.slane %v185, 0
      %v245 = vadd.f32 %v243, %v244
      %246 = vrot.lane.b32.xlu0 %v186, 112
      %v247 = vpop.permute.xlu0 %246
      %v249 = vsub.f32 %v245, %v247
      %v250 = vmul.f32 %v249, %v249
      %vm251 = vcmask 7168
      %v252 = vsel %vm251, %v250, 0.0
      %253 = vadd.xlane.f32.xlu0 %v252
      %v254 = vpop.xlane.xlu0 %253
      %v255 = vrot.slane %v254, 4
      %v256 = vadd.f32 %v254, %v255
      %v257 = vrot.slane %v256, 2
      %v258 = vadd.f32 %v256, %v257
      %v259 = vrot.slane %v258, 1
      %v260 = vadd.f32 %v258, %v259
      %s261 = vtos %v260
      %v262 = vstv %s261
      %v263 = vmul.f32 %v262, 0.125
      %vm264 = vcmask 0
      %265 = vst.msk [vmem:[%s172] sm:$0x1] %vm264, %v263
      %v266 = vld [vmem:[%s169] sm:$0xff]
      %v268 = vsel %vm188, %v266, 0
      %270 = vmatpush.msra.mxu0 0.0
      %271 = vmatpush.msra.mxu0 0.0
      %272 = vmatpush.msra.mxu0 0.0
      %273 = vmatpush.msra.mxu0 0.0
      %274 = vmatpush.msra.mxu0 0.0
      %275 = vmatpush.msra.mxu0 0.0
      %276 = vmatpush.msra.mxu0 0.0
      %277 = vmatpush.msra.mxu0 0.0
      %278 = vmatpush.msra.mxu0 0.0
      %279 = vmatpush.msra.mxu0 0.0
      %280 = vmatpush.msra.mxu0 0.0
      %281 = vmatpush.msra.mxu0 0.0
      %282 = vmatpush.msra.mxu0 0.0
      %283 = vmatpush.msra.mxu0 0.0
      %284 = vmatpush.msra.mxu0 %v177
      %285 = vmatpush.msra.mxu0 %v176
      %286 = vmatmul.f32.gmra.mxu0 %v268
      %v287 = vpop.f32.mrf.mxu0
      %v288 = vadd.f32 %v187, %v287
      %289 = vdwg.mxu0
      %v290 = vmax.f32 %v288, 0.0
      %v292 = vsel %vm214, %v290, 0
      %294 = vmatpush.msra.mxu0 0.0
      %295 = vmatpush.msra.mxu0 0.0
      %296 = vmatpush.msra.mxu0 0.0
      %297 = vmatpush.msra.mxu0 0.0
      %298 = vmatpush.msra.mxu0 0.0
      %299 = vmatpush.msra.mxu0 0.0
      %300 = vmatpush.msra.mxu0 0.0
      %301 = vmatpush.msra.mxu0 0.0
      %302 = vmatpush.msra.mxu0 0.0
      %303 = vmatpush.msra.mxu0 0.0
      %304 = vmatpush.msra.mxu0 0.0
      %305 = vmatpush.msra.mxu0 0.0
      %306 = vmatpush.msra.mxu0 %v182
      %307 = vmatpush.msra.mxu0 %v181
      %308 = vmatpush.msra.mxu0 %v180
      %309 = vmatpush.msra.mxu0 %v179
      %310 = vmatmul.f32.gmra.mxu0 %v292
      %v311 = vpop.f32.mrf.mxu0
      %v312 = vadd.f32 %v213, %v311
      %313 = vdwg.mxu0
      %v314 = vmax.f32 %v312, 0.0
      %v315 = vmul.f32 %v314, %v239
      %v316 = vsel %vm214, %v315, 0.0
      %317 = vadd.xlane.f32.xlu0 %v316
      %v318 = vpop.xlane.xlu0 %317
      %v319 = vadd.f32 %v318, %v244
      %320 = vrot.lane.b32.xlu0 %v266, 112
      %v321 = vpop.permute.xlu0 %320
      %v323 = vsub.f32 %v319, %v321
      %v324 = vmul.f32 %v323, 0.25
      %326 = vset.pattern.permute.xlu0 0
      %327 = vperm.xlu0 %326, %v324
      %v328 = vpop.permute.xlu0 %327
      %v330 = vmul.f32 %v328, %v314
      %v331 = vsel %vm214, %v330, 0.0
      %v332 = vrot.slane %v331, 4
      %v333 = vadd.f32 %v331, %v332
      %v334 = vrot.slane %v333, 2
      %v335 = vadd.f32 %v333, %v334
      %v336 = vrot.slane %v335, 1
      %v337 = vadd.f32 %v335, %v336
      %v338 = vsel %vm251, %v324, 0.0
      %v339 = vrot.slane %v338, 4
      %v340 = vadd.f32 %v338, %v339
      %v341 = vrot.slane %v340, 2
      %v342 = vadd.f32 %v340, %v341
      %v343 = vrot.slane %v342, 1
      %v344 = vadd.f32 %v342, %v343
      %v345 = vmul.f32 %v328, %v239
      %vm346 = vcmp.gt.f32.partialorder %v312, 0.0
      %v347 = vsel %vm346, %v345, 0.0
      %348 = vxpose.xlu0.b32.start [1/16] %v290, 128
      %349 = vxpose.xlu0.b32.cont [2/16] 0.0, 128
      %350 = vxpose.xlu0.b32.cont [3/16] 0.0, 128
      %351 = vxpose.xlu0.b32.cont [4/16] 0.0, 128
      %352 = vxpose.xlu0.b32.cont [5/16] 0.0, 128
      %353 = vxpose.xlu0.b32.cont [6/16] 0.0, 128
      %354 = vxpose.xlu0.b32.cont [7/16] 0.0, 128
      %355 = vxpose.xlu0.b32.cont [8/16] 0.0, 128
      %356 = vxpose.xlu0.b32.cont [9/16] 0.0, 128
      %357 = vxpose.xlu0.b32.cont [10/16] 0.0, 128
      %358 = vxpose.xlu0.b32.cont [11/16] 0.0, 128
      %359 = vxpose.xlu0.b32.cont [12/16] 0.0, 128
      %360 = vxpose.xlu0.b32.cont [13/16] 0.0, 128
      %361 = vxpose.xlu0.b32.cont [14/16] 0.0, 128
      %362 = vxpose.xlu0.b32.cont [15/16] 0.0, 128
      %363 = vxpose.xlu0.b32.end [16/16] 0.0, 128
      %v364 = vpop.trf.xlu0
      %v365 = vpop.trf.xlu0
      %v366 = vpop.trf.xlu0
      %v367 = vpop.trf.xlu0
      %v368 = vpop.trf.xlu0
      %v369 = vpop.trf.xlu0
      %v370 = vpop.trf.xlu0
      %v371 = vpop.trf.xlu0
      %v372 = vpop.trf.xlu0
      %v373 = vpop.trf.xlu0
      %v374 = vpop.trf.xlu0
      %v375 = vpop.trf.xlu0
      %v376 = vpop.trf.xlu0
      %v377 = vpop.trf.xlu0
      %v378 = vpop.trf.xlu0
      %v379 = vpop.trf.xlu0
      %vm380 = vcmask 64512
      %v382 = vsel %vm380, %v364, 0
      %v385 = vsel %vm380, %v365, 0
      %v388 = vsel %vm380, %v366, 0
      %v391 = vsel %vm380, %v367, 0
      %393 = vmatpush.msra.mxu0 0.0
      %394 = vmatpush.msra.mxu0 0.0
      %395 = vmatpush.msra.mxu0 0.0
      %396 = vmatpush.msra.mxu0 0.0
      %397 = vmatpush.msra.mxu0 0.0
      %398 = vmatpush.msra.mxu0 0.0
      %399 = vmatpush.msra.mxu0 0.0
      %400 = vmatpush.msra.mxu0 0.0
      %401 = vmatpush.msra.mxu0 0.0
      %402 = vmatpush.msra.mxu0 0.0
      %403 = vmatpush.msra.mxu0 0.0
      %404 = vmatpush.msra.mxu0 0.0
      %405 = vmatpush.msra.mxu0 0.0
      %406 = vmatpush.msra.mxu0 0.0
      %407 = vmatpush.msra.mxu0 0.0
      %408 = vmatpush.msra.mxu0 %v347
      %409 = vmatmul.f32.gmra.mxu0 %v382
      %v410 = vpop.f32.mrf.mxu0
      %v411 = vadd.f32 0.0, %v410
      %412 = vmatmul.f32.gmra.mxu0 %v385
      %v413 = vpop.f32.mrf.mxu0
      %v414 = vadd.f32 0.0, %v413
      %415 = vmatmul.f32.gmra.mxu0 %v388
      %v416 = vpop.f32.mrf.mxu0
      %v417 = vadd.f32 0.0, %v416
      %418 = vmatmul.f32.gmra.mxu0 %v391
      %v419 = vpop.f32.mrf.mxu0
      %v420 = vadd.f32 0.0, %v419
      %421 = vdwg.mxu0
      %v422 = vsel %vm214, %v347, 0.0
      %v423 = vrot.slane %v422, 4
      %v424 = vadd.f32 %v422, %v423
      %v425 = vrot.slane %v424, 2
      %v426 = vadd.f32 %v424, %v425
      %v427 = vrot.slane %v426, 1
      %v428 = vadd.f32 %v426, %v427
      %v430 = vsel %vm214, %v347, 0
      %v433 = vsel %vm214, %v179, 0
      %v436 = vsel %vm214, %v180, 0
      %v439 = vsel %vm214, %v181, 0
      %v442 = vsel %vm214, %v182, 0
      %444 = vmatpush.xpose.msra.mxu0 0.0
      %445 = vmatpush.xpose.msra.mxu0 0.0
      %446 = vmatpush.xpose.msra.mxu0 0.0
      %447 = vmatpush.xpose.msra.mxu0 0.0
      %448 = vmatpush.xpose.msra.mxu0 0.0
      %449 = vmatpush.xpose.msra.mxu0 0.0
      %450 = vmatpush.xpose.msra.mxu0 0.0
      %451 = vmatpush.xpose.msra.mxu0 0.0
      %452 = vmatpush.xpose.msra.mxu0 0.0
      %453 = vmatpush.xpose.msra.mxu0 0.0
      %454 = vmatpush.xpose.msra.mxu0 0.0
      %455 = vmatpush.xpose.msra.mxu0 0.0
      %456 = vmatpush.xpose.msra.mxu0 %v442
      %457 = vmatpush.xpose.msra.mxu0 %v439
      %458 = vmatpush.xpose.msra.mxu0 %v436
      %459 = vmatpush.xpose.msra.mxu0 %v433
      %460 = vmatmul.f32.gmra.mxu0 %v430
      %v461 = vpop.f32.mrf.mxu0
      %v462 = vadd.f32 0.0, %v461
      %463 = vdwg.mxu0
      %vm464 = vcmp.gt.f32.partialorder %v288, 0.0
      %v465 = vsel %vm464, %v462, 0.0
      %466 = vxpose.xlu0.b32.start [1/16] %v266, 128
      %467 = vxpose.xlu0.b32.cont [2/16] 0.0, 128
      %468 = vxpose.xlu0.b32.cont [3/16] 0.0, 128
      %469 = vxpose.xlu0.b32.cont [4/16] 0.0, 128
      %470 = vxpose.xlu0.b32.cont [5/16] 0.0, 128
      %471 = vxpose.xlu0.b32.cont [6/16] 0.0, 128
      %472 = vxpose.xlu0.b32.cont [7/16] 0.0, 128
      %473 = vxpose.xlu0.b32.cont [8/16] 0.0, 128
      %474 = vxpose.xlu0.b32.cont [9/16] 0.0, 128
      %475 = vxpose.xlu0.b32.cont [10/16] 0.0, 128
      %476 = vxpose.xlu0.b32.cont [11/16] 0.0, 128
      %477 = vxpose.xlu0.b32.cont [12/16] 0.0, 128
      %478 = vxpose.xlu0.b32.cont [13/16] 0.0, 128
      %479 = vxpose.xlu0.b32.cont [14/16] 0.0, 128
      %480 = vxpose.xlu0.b32.cont [15/16] 0.0, 128
      %481 = vxpose.xlu0.b32.end [16/16] 0.0, 128
      %v482 = vpop.trf.xlu0
      %v483 = vpop.trf.xlu0
      %v484 = vpop.trf.xlu0
      %v485 = vpop.trf.xlu0
      %v486 = vpop.trf.xlu0
      %v487 = vpop.trf.xlu0
      %v488 = vpop.trf.xlu0
      %v489 = vpop.trf.xlu0
      %v490 = vpop.trf.xlu0
      %v491 = vpop.trf.xlu0
      %v492 = vpop.trf.xlu0
      %v493 = vpop.trf.xlu0
      %v494 = vpop.trf.xlu0
      %v495 = vpop.trf.xlu0
      %v496 = vpop.trf.xlu0
      %v497 = vpop.trf.xlu0
      %v499 = vsel %vm380, %v482, 0
      %v502 = vsel %vm380, %v483, 0
      %504 = vmatpush.msra.mxu0 0.0
      %505 = vmatpush.msra.mxu0 0.0
      %506 = vmatpush.msra.mxu0 0.0
      %507 = vmatpush.msra.mxu0 0.0
      %508 = vmatpush.msra.mxu0 0.0
      %509 = vmatpush.msra.mxu0 0.0
      %510 = vmatpush.msra.mxu0 0.0
      %511 = vmatpush.msra.mxu0 0.0
      %512 = vmatpush.msra.mxu0 0.0
      %513 = vmatpush.msra.mxu0 0.0
      %514 = vmatpush.msra.mxu0 0.0
      %515 = vmatpush.msra.mxu0 0.0
      %516 = vmatpush.msra.mxu0 0.0
      %517 = vmatpush.msra.mxu0 0.0
      %518 = vmatpush.msra.mxu0 0.0
      %519 = vmatpush.msra.mxu0 %v465
      %520 = vmatmul.f32.gmra.mxu0 %v499
      %v521 = vpop.f32.mrf.mxu0
      %v522 = vadd.f32 0.0, %v521
      %523 = vmatmul.f32.gmra.mxu0 %v502
      %v524 = vpop.f32.mrf.mxu0
      %v525 = vadd.f32 0.0, %v524
      %526 = vdwg.mxu0
      %v527 = vsel %vm214, %v465, 0.0
      %v528 = vrot.slane %v527, 4
      %v529 = vadd.f32 %v527, %v528
      %v530 = vrot.slane %v529, 2
      %v531 = vadd.f32 %v529, %v530
      %v532 = vrot.slane %v531, 1
      %v533 = vadd.f32 %v531, %v532
      %vm534 = vcmp.lt.f32.partialorder %v522, 10.0
      %vm535 = vcmp.lt.f32.partialorder %v525, 10.0
      %vm536 = vcmp.gt.f32.partialorder %v522, 10.0
      %vm537 = vcmp.gt.f32.partialorder %v525, 10.0
      %v538 = vsel %vm536, 10.0, 0.0
      %v539 = vsel %vm537, 10.0, 0.0
      %v540 = vsel %vm534, %v522, %v538
      %v541 = vsel %vm535, %v525, %v539
      %vm542 = vcmp.gt.f32.partialorder %v540, -10.0
      %vm543 = vcmp.gt.f32.partialorder %v541, -10.0
      %vm544 = vcmp.lt.f32.partialorder %v540, -10.0
      %vm545 = vcmp.lt.f32.partialorder %v541, -10.0
      %v546 = vsel %vm544, -10.0, 0.0
      %v547 = vsel %vm545, -10.0, 0.0
      %v548 = vsel %vm542, %v540, %v546
      %v549 = vsel %vm543, %v541, %v547
      %v550 = vmul.f32 %v548, 0.01
      %v551 = vmul.f32 %v549, 0.01
      %v552 = vsub.f32 %v176, %v550
      %v553 = vsub.f32 %v177, %v551
      %vm554 = vcmp.lt.f32.partialorder %v533, 10.0
      %vm555 = vcmp.gt.f32.partialorder %v533, 10.0
      %v556 = vsel %vm555, 10.0, 0.0
      %v557 = vsel %vm554, %v533, %v556
      %vm558 = vcmp.gt.f32.partialorder %v557, -10.0
      %vm559 = vcmp.lt.f32.partialorder %v557, -10.0
      %v560 = vsel %vm559, -10.0, 0.0
      %v561 = vsel %vm558, %v557, %v560
      %v562 = vmul.f32 %v561, 0.01
      %v563 = vsub.f32 %v178, %v562
      %vm564 = vcmp.lt.f32.partialorder %v411, 10.0
      %vm565 = vcmp.lt.f32.partialorder %v414, 10.0
      %vm566 = vcmp.lt.f32.partialorder %v417, 10.0
      %vm567 = vcmp.lt.f32.partialorder %v420, 10.0
      %vm568 = vcmp.gt.f32.partialorder %v411, 10.0
      %vm569 = vcmp.gt.f32.partialorder %v414, 10.0
      %vm570 = vcmp.gt.f32.partialorder %v417, 10.0
      %vm571 = vcmp.gt.f32.partialorder %v420, 10.0
      %v572 = vsel %vm568, 10.0, 0.0
      %v573 = vsel %vm569, 10.0, 0.0
      %v574 = vsel %vm570, 10.0, 0.0
      %v575 = vsel %vm571, 10.0, 0.0
      %v576 = vsel %vm564, %v411, %v572
      %v577 = vsel %vm565, %v414, %v573
      %v578 = vsel %vm566, %v417, %v574
      %v579 = vsel %vm567, %v420, %v575
      %vm580 = vcmp.gt.f32.partialorder %v576, -10.0
      %vm581 = vcmp.gt.f32.partialorder %v577, -10.0
      %vm582 = vcmp.gt.f32.partialorder %v578, -10.0
      %vm583 = vcmp.gt.f32.partialorder %v579, -10.0
      %vm584 = vcmp.lt.f32.partialorder %v576, -10.0
      %vm585 = vcmp.lt.f32.partialorder %v577, -10.0
      %vm586 = vcmp.lt.f32.partialorder %v578, -10.0
      %vm587 = vcmp.lt.f32.partialorder %v579, -10.0
      %v588 = vsel %vm584, -10.0, 0.0
      %v589 = vsel %vm585, -10.0, 0.0
      %v590 = vsel %vm586, -10.0, 0.0
      %v591 = vsel %vm587, -10.0, 0.0
      %v592 = vsel %vm580, %v576, %v588
      %v593 = vsel %vm581, %v577, %v589
      %v594 = vsel %vm582, %v578, %v590
      %v595 = vsel %vm583, %v579, %v591
      %v596 = vmul.f32 %v592, 0.01
      %v597 = vmul.f32 %v593, 0.01
      %v598 = vmul.f32 %v594, 0.01
      %v599 = vmul.f32 %v595, 0.01
      %v600 = vsub.f32 %v179, %v596
      %v601 = vsub.f32 %v180, %v597
      %v602 = vsub.f32 %v181, %v598
      %v603 = vsub.f32 %v182, %v599
      %vm604 = vcmp.lt.f32.partialorder %v428, 10.0
      %vm605 = vcmp.gt.f32.partialorder %v428, 10.0
      %v606 = vsel %vm605, 10.0, 0.0
      %v607 = vsel %vm604, %v428, %v606
      %vm608 = vcmp.gt.f32.partialorder %v607, -10.0
      %vm609 = vcmp.lt.f32.partialorder %v607, -10.0
      %v610 = vsel %vm609, -10.0, 0.0
      %v611 = vsel %vm608, %v607, %v610
      %v612 = vmul.f32 %v611, 0.01
      %v613 = vsub.f32 %v183, %v612
      %vm614 = vcmp.lt.f32.partialorder %v337, 10.0
      %vm615 = vcmp.gt.f32.partialorder %v337, 10.0
      %v616 = vsel %vm615, 10.0, 0.0
      %v617 = vsel %vm614, %v337, %v616
      %vm618 = vcmp.gt.f32.partialorder %v617, -10.0
      %vm619 = vcmp.lt.f32.partialorder %v617, -10.0
      %v620 = vsel %vm619, -10.0, 0.0
      %v621 = vsel %vm618, %v617, %v620
      %v622 = vmul.f32 %v621, 0.01
      %v623 = vsub.f32 %v184, %v622
      %vm624 = vcmp.lt.f32.partialorder %v344, 10.0
      %vm625 = vcmp.gt.f32.partialorder %v344, 10.0
      %v626 = vsel %vm625, 10.0, 0.0
      %v627 = vsel %vm624, %v344, %v626
      %vm628 = vcmp.gt.f32.partialorder %v627, -10.0
      %vm629 = vcmp.lt.f32.partialorder %v627, -10.0
      %v630 = vsel %vm629, -10.0, 0.0
      %v631 = vsel %vm628, %v627, %v630
      %v632 = vmul.f32 %v631, 0.01
      %v633 = vsub.f32 %v185, %v632
      %v634 = vld [vmem:[%s169 + $0x8] sm:$0xff]
      %v635 = vperm.slane %v563, 0
      %v637 = vsel %vm188, %v634, 0
      %639 = vmatpush.msra.mxu0 0.0
      %640 = vmatpush.msra.mxu0 0.0
      %641 = vmatpush.msra.mxu0 0.0
      %642 = vmatpush.msra.mxu0 0.0
      %643 = vmatpush.msra.mxu0 0.0
      %644 = vmatpush.msra.mxu0 0.0
      %645 = vmatpush.msra.mxu0 0.0
      %646 = vmatpush.msra.mxu0 0.0
      %647 = vmatpush.msra.mxu0 0.0
      %648 = vmatpush.msra.mxu0 0.0
      %649 = vmatpush.msra.mxu0 0.0
      %650 = vmatpush.msra.mxu0 0.0
      %651 = vmatpush.msra.mxu0 0.0
      %652 = vmatpush.msra.mxu0 0.0
      %653 = vmatpush.msra.mxu0 %v553
      %654 = vmatpush.msra.mxu0 %v552
      %655 = vmatmul.f32.gmra.mxu0 %v637
      %v656 = vpop.f32.mrf.mxu0
      %v657 = vadd.f32 %v635, %v656
      %658 = vdwg.mxu0
      %v659 = vmax.f32 %v657, 0.0
      %v660 = vperm.slane %v613, 0
      %v662 = vsel %vm214, %v659, 0
      %664 = vmatpush.msra.mxu0 0.0
      %665 = vmatpush.msra.mxu0 0.0
      %666 = vmatpush.msra.mxu0 0.0
      %667 = vmatpush.msra.mxu0 0.0
      %668 = vmatpush.msra.mxu0 0.0
      %669 = vmatpush.msra.mxu0 0.0
      %670 = vmatpush.msra.mxu0 0.0
      %671 = vmatpush.msra.mxu0 0.0
      %672 = vmatpush.msra.mxu0 0.0
      %673 = vmatpush.msra.mxu0 0.0
      %674 = vmatpush.msra.mxu0 0.0
      %675 = vmatpush.msra.mxu0 0.0
      %676 = vmatpush.msra.mxu0 %v603
      %677 = vmatpush.msra.mxu0 %v602
      %678 = vmatpush.msra.mxu0 %v601
      %679 = vmatpush.msra.mxu0 %v600
      %680 = vmatmul.f32.gmra.mxu0 %v662
      %v681 = vpop.f32.mrf.mxu0
      %v682 = vadd.f32 %v660, %v681
      %683 = vdwg.mxu0
      %v684 = vmax.f32 %v682, 0.0
      %v685 = vperm.slane %v623, 0
      %v686 = vmul.f32 %v684, %v685
      %v687 = vsel %vm214, %v686, 0.0
      %688 = vadd.xlane.f32.xlu0 %v687
      %v689 = vpop.xlane.xlu0 %688
      %v690 = vperm.slane %v633, 0
      %v691 = vadd.f32 %v689, %v690
      %692 = vrot.lane.b32.xlu0 %v634, 112
      %v693 = vpop.permute.xlu0 %692
      %v695 = vsub.f32 %v691, %v693
      %v696 = vmul.f32 %v695, 0.25
      %698 = vset.pattern.permute.xlu0 0
      %699 = vperm.xlu0 %698, %v696
      %v700 = vpop.permute.xlu0 %699
      %v702 = vmul.f32 %v700, %v684
      %v703 = vsel %vm214, %v702, 0.0
      %v704 = vrot.slane %v703, 4
      %v705 = vadd.f32 %v703, %v704
      %v706 = vrot.slane %v705, 2
      %v707 = vadd.f32 %v705, %v706
      %v708 = vrot.slane %v707, 1
      %v709 = vadd.f32 %v707, %v708
      %v710 = vsel %vm251, %v696, 0.0
      %v711 = vrot.slane %v710, 4
      %v712 = vadd.f32 %v710, %v711
      %v713 = vrot.slane %v712, 2
      %v714 = vadd.f32 %v712, %v713
      %v715 = vrot.slane %v714, 1
      %v716 = vadd.f32 %v714, %v715
      %v717 = vmul.f32 %v700, %v685
      %vm718 = vcmp.gt.f32.partialorder %v682, 0.0
      %v719 = vsel %vm718, %v717, 0.0
      %720 = vxpose.xlu0.b32.start [1/16] %v659, 128
      %721 = vxpose.xlu0.b32.cont [2/16] 0.0, 128
      %722 = vxpose.xlu0.b32.cont [3/16] 0.0, 128
      %723 = vxpose.xlu0.b32.cont [4/16] 0.0, 128
      %724 = vxpose.xlu0.b32.cont [5/16] 0.0, 128
      %725 = vxpose.xlu0.b32.cont [6/16] 0.0, 128
      %726 = vxpose.xlu0.b32.cont [7/16] 0.0, 128
      %727 = vxpose.xlu0.b32.cont [8/16] 0.0, 128
      %728 = vxpose.xlu0.b32.cont [9/16] 0.0, 128
      %729 = vxpose.xlu0.b32.cont [10/16] 0.0, 128
      %730 = vxpose.xlu0.b32.cont [11/16] 0.0, 128
      %731 = vxpose.xlu0.b32.cont [12/16] 0.0, 128
      %732 = vxpose.xlu0.b32.cont [13/16] 0.0, 128
      %733 = vxpose.xlu0.b32.cont [14/16] 0.0, 128
      %734 = vxpose.xlu0.b32.cont [15/16] 0.0, 128
      %735 = vxpose.xlu0.b32.end [16/16] 0.0, 128
      %v736 = vpop.trf.xlu0
      %v737 = vpop.trf.xlu0
      %v738 = vpop.trf.xlu0
      %v739 = vpop.trf.xlu0
      %v740 = vpop.trf.xlu0
      %v741 = vpop.trf.xlu0
      %v742 = vpop.trf.xlu0
      %v743 = vpop.trf.xlu0
      %v744 = vpop.trf.xlu0
      %v745 = vpop.trf.xlu0
      %v746 = vpop.trf.xlu0
      %v747 = vpop.trf.xlu0
      %v748 = vpop.trf.xlu0
      %v749 = vpop.trf.xlu0
      %v750 = vpop.trf.xlu0
      %v751 = vpop.trf.xlu0
      %v753 = vsel %vm380, %v736, 0
      %v756 = vsel %vm380, %v737, 0
      %v759 = vsel %vm380, %v738, 0
      %v762 = vsel %vm380, %v739, 0
      %764 = vmatpush.msra.mxu0 0.0
      %765 = vmatpush.msra.mxu0 0.0
      %766 = vmatpush.msra.mxu0 0.0
      %767 = vmatpush.msra.mxu0 0.0
      %768 = vmatpush.msra.mxu0 0.0
      %769 = vmatpush.msra.mxu0 0.0
      %770 = vmatpush.msra.mxu0 0.0
      %771 = vmatpush.msra.mxu0 0.0
      %772 = vmatpush.msra.mxu0 0.0
      %773 = vmatpush.msra.mxu0 0.0
      %774 = vmatpush.msra.mxu0 0.0
      %775 = vmatpush.msra.mxu0 0.0
      %776 = vmatpush.msra.mxu0 0.0
      %777 = vmatpush.msra.mxu0 0.0
      %778 = vmatpush.msra.mxu0 0.0
      %779 = vmatpush.msra.mxu0 %v719
      %780 = vmatmul.f32.gmra.mxu0 %v753
      %v781 = vpop.f32.mrf.mxu0
      %v782 = vadd.f32 0.0, %v781
      %783 = vmatmul.f32.gmra.mxu0 %v756
      %v784 = vpop.f32.mrf.mxu0
      %v785 = vadd.f32 0.0, %v784
      %786 = vmatmul.f32.gmra.mxu0 %v759
      %v787 = vpop.f32.mrf.mxu0
      %v788 = vadd.f32 0.0, %v787
      %789 = vmatmul.f32.gmra.mxu0 %v762
      %v790 = vpop.f32.mrf.mxu0
      %v791 = vadd.f32 0.0, %v790
      %792 = vdwg.mxu0
      %v793 = vsel %vm214, %v719, 0.0
      %v794 = vrot.slane %v793, 4
      %v795 = vadd.f32 %v793, %v794
      %v796 = vrot.slane %v795, 2
      %v797 = vadd.f32 %v795, %v796
      %v798 = vrot.slane %v797, 1
      %v799 = vadd.f32 %v797, %v798
      %v801 = vsel %vm214, %v719, 0
      %v804 = vsel %vm214, %v600, 0
      %v807 = vsel %vm214, %v601, 0
      %v810 = vsel %vm214, %v602, 0
      %v813 = vsel %vm214, %v603, 0
      %815 = vmatpush.xpose.msra.mxu0 0.0
      %816 = vmatpush.xpose.msra.mxu0 0.0
      %817 = vmatpush.xpose.msra.mxu0 0.0
      %818 = vmatpush.xpose.msra.mxu0 0.0
      %819 = vmatpush.xpose.msra.mxu0 0.0
      %820 = vmatpush.xpose.msra.mxu0 0.0
      %821 = vmatpush.xpose.msra.mxu0 0.0
      %822 = vmatpush.xpose.msra.mxu0 0.0
      %823 = vmatpush.xpose.msra.mxu0 0.0
      %824 = vmatpush.xpose.msra.mxu0 0.0
      %825 = vmatpush.xpose.msra.mxu0 0.0
      %826 = vmatpush.xpose.msra.mxu0 0.0
      %827 = vmatpush.xpose.msra.mxu0 %v813
      %828 = vmatpush.xpose.msra.mxu0 %v810
      %829 = vmatpush.xpose.msra.mxu0 %v807
      %830 = vmatpush.xpose.msra.mxu0 %v804
      %831 = vmatmul.f32.gmra.mxu0 %v801
      %v832 = vpop.f32.mrf.mxu0
      %v833 = vadd.f32 0.0, %v832
      %834 = vdwg.mxu0
      %vm835 = vcmp.gt.f32.partialorder %v657, 0.0
      %v836 = vsel %vm835, %v833, 0.0
      %837 = vxpose.xlu0.b32.start [1/16] %v634, 128
      %838 = vxpose.xlu0.b32.cont [2/16] 0.0, 128
      %839 = vxpose.xlu0.b32.cont [3/16] 0.0, 128
      %840 = vxpose.xlu0.b32.cont [4/16] 0.0, 128
      %841 = vxpose.xlu0.b32.cont [5/16] 0.0, 128
      %842 = vxpose.xlu0.b32.cont [6/16] 0.0, 128
      %843 = vxpose.xlu0.b32.cont [7/16] 0.0, 128
      %844 = vxpose.xlu0.b32.cont [8/16] 0.0, 128
      %845 = vxpose.xlu0.b32.cont [9/16] 0.0, 128
      %846 = vxpose.xlu0.b32.cont [10/16] 0.0, 128
      %847 = vxpose.xlu0.b32.cont [11/16] 0.0, 128
      %848 = vxpose.xlu0.b32.cont [12/16] 0.0, 128
      %849 = vxpose.xlu0.b32.cont [13/16] 0.0, 128
      %850 = vxpose.xlu0.b32.cont [14/16] 0.0, 128
      %851 = vxpose.xlu0.b32.cont [15/16] 0.0, 128
      %852 = vxpose.xlu0.b32.end [16/16] 0.0, 128
      %v853 = vpop.trf.xlu0
      %v854 = vpop.trf.xlu0
      %v855 = vpop.trf.xlu0
      %v856 = vpop.trf.xlu0
      %v857 = vpop.trf.xlu0
      %v858 = vpop.trf.xlu0
      %v859 = vpop.trf.xlu0
      %v860 = vpop.trf.xlu0
      %v861 = vpop.trf.xlu0
      %v862 = vpop.trf.xlu0
      %v863 = vpop.trf.xlu0
      %v864 = vpop.trf.xlu0
      %v865 = vpop.trf.xlu0
      %v866 = vpop.trf.xlu0
      %v867 = vpop.trf.xlu0
      %v868 = vpop.trf.xlu0
      %v870 = vsel %vm380, %v853, 0
      %v873 = vsel %vm380, %v854, 0
      %875 = vmatpush.msra.mxu0 0.0
      %876 = vmatpush.msra.mxu0 0.0
      %877 = vmatpush.msra.mxu0 0.0
      %878 = vmatpush.msra.mxu0 0.0
      %879 = vmatpush.msra.mxu0 0.0
      %880 = vmatpush.msra.mxu0 0.0
      %881 = vmatpush.msra.mxu0 0.0
      %882 = vmatpush.msra.mxu0 0.0
      %883 = vmatpush.msra.mxu0 0.0
      %884 = vmatpush.msra.mxu0 0.0
      %885 = vmatpush.msra.mxu0 0.0
      %886 = vmatpush.msra.mxu0 0.0
      %887 = vmatpush.msra.mxu0 0.0
      %888 = vmatpush.msra.mxu0 0.0
      %889 = vmatpush.msra.mxu0 0.0
      %890 = vmatpush.msra.mxu0 %v836
      %891 = vmatmul.f32.gmra.mxu0 %v870
      %v892 = vpop.f32.mrf.mxu0
      %v893 = vadd.f32 0.0, %v892
      %894 = vmatmul.f32.gmra.mxu0 %v873
      %v895 = vpop.f32.mrf.mxu0
      %v896 = vadd.f32 0.0, %v895
      %897 = vdwg.mxu0
      %v898 = vsel %vm214, %v836, 0.0
      %v899 = vrot.slane %v898, 4
      %v900 = vadd.f32 %v898, %v899
      %v901 = vrot.slane %v900, 2
      %v902 = vadd.f32 %v900, %v901
      %v903 = vrot.slane %v902, 1
      %v904 = vadd.f32 %v902, %v903
      %vm905 = vcmp.lt.f32.partialorder %v893, 10.0
      %vm906 = vcmp.lt.f32.partialorder %v896, 10.0
      %vm907 = vcmp.gt.f32.partialorder %v893, 10.0
      %vm908 = vcmp.gt.f32.partialorder %v896, 10.0
      %v909 = vsel %vm907, 10.0, 0.0
      %v910 = vsel %vm908, 10.0, 0.0
      %v911 = vsel %vm905, %v893, %v909
      %v912 = vsel %vm906, %v896, %v910
      %vm913 = vcmp.gt.f32.partialorder %v911, -10.0
      %vm914 = vcmp.gt.f32.partialorder %v912, -10.0
      %vm915 = vcmp.lt.f32.partialorder %v911, -10.0
      %vm916 = vcmp.lt.f32.partialorder %v912, -10.0
      %v917 = vsel %vm915, -10.0, 0.0
      %v918 = vsel %vm916, -10.0, 0.0
      %v919 = vsel %vm913, %v911, %v917
      %v920 = vsel %vm914, %v912, %v918
      %v921 = vmul.f32 %v919, 0.01
      %v922 = vmul.f32 %v920, 0.01
      %v923 = vsub.f32 %v552, %v921
      %v924 = vsub.f32 %v553, %v922
      %vm925 = vcmp.lt.f32.partialorder %v904, 10.0
      %vm926 = vcmp.gt.f32.partialorder %v904, 10.0
      %v927 = vsel %vm926, 10.0, 0.0
      %v928 = vsel %vm925, %v904, %v927
      %vm929 = vcmp.gt.f32.partialorder %v928, -10.0
      %vm930 = vcmp.lt.f32.partialorder %v928, -10.0
      %v931 = vsel %vm930, -10.0, 0.0
      %v932 = vsel %vm929, %v928, %v931
      %v933 = vmul.f32 %v932, 0.01
      %v934 = vsub.f32 %v563, %v933
      %vm935 = vcmp.lt.f32.partialorder %v782, 10.0
      %vm936 = vcmp.lt.f32.partialorder %v785, 10.0
      %vm937 = vcmp.lt.f32.partialorder %v788, 10.0
      %vm938 = vcmp.lt.f32.partialorder %v791, 10.0
      %vm939 = vcmp.gt.f32.partialorder %v782, 10.0
      %vm940 = vcmp.gt.f32.partialorder %v785, 10.0
      %vm941 = vcmp.gt.f32.partialorder %v788, 10.0
      %vm942 = vcmp.gt.f32.partialorder %v791, 10.0
      %v943 = vsel %vm939, 10.0, 0.0
      %v944 = vsel %vm940, 10.0, 0.0
      %v945 = vsel %vm941, 10.0, 0.0
      %v946 = vsel %vm942, 10.0, 0.0
      %v947 = vsel %vm935, %v782, %v943
      %v948 = vsel %vm936, %v785, %v944
      %v949 = vsel %vm937, %v788, %v945
      %v950 = vsel %vm938, %v791, %v946
      %vm951 = vcmp.gt.f32.partialorder %v947, -10.0
      %vm952 = vcmp.gt.f32.partialorder %v948, -10.0
      %vm953 = vcmp.gt.f32.partialorder %v949, -10.0
      %vm954 = vcmp.gt.f32.partialorder %v950, -10.0
      %vm955 = vcmp.lt.f32.partialorder %v947, -10.0
      %vm956 = vcmp.lt.f32.partialorder %v948, -10.0
      %vm957 = vcmp.lt.f32.partialorder %v949, -10.0
      %vm958 = vcmp.lt.f32.partialorder %v950, -10.0
      %v959 = vsel %vm955, -10.0, 0.0
      %v960 = vsel %vm956, -10.0, 0.0
      %v961 = vsel %vm957, -10.0, 0.0
      %v962 = vsel %vm958, -10.0, 0.0
      %v963 = vsel %vm951, %v947, %v959
      %v964 = vsel %vm952, %v948, %v960
      %v965 = vsel %vm953, %v949, %v961
      %v966 = vsel %vm954, %v950, %v962
      %v967 = vmul.f32 %v963, 0.01
      %v968 = vmul.f32 %v964, 0.01
      %v969 = vmul.f32 %v965, 0.01
      %v970 = vmul.f32 %v966, 0.01
      %v971 = vsub.f32 %v600, %v967
      %v972 = vsub.f32 %v601, %v968
      %v973 = vsub.f32 %v602, %v969
      %v974 = vsub.f32 %v603, %v970
      %vm975 = vcmp.lt.f32.partialorder %v799, 10.0
      %vm976 = vcmp.gt.f32.partialorder %v799, 10.0
      %v977 = vsel %vm976, 10.0, 0.0
      %v978 = vsel %vm975, %v799, %v977
      %vm979 = vcmp.gt.f32.partialorder %v978, -10.0
      %vm980 = vcmp.lt.f32.partialorder %v978, -10.0
      %v981 = vsel %vm980, -10.0, 0.0
      %v982 = vsel %vm979, %v978, %v981
      %v983 = vmul.f32 %v982, 0.01
      %v984 = vsub.f32 %v613, %v983
      %vm985 = vcmp.lt.f32.partialorder %v709, 10.0
      %vm986 = vcmp.gt.f32.partialorder %v709, 10.0
      %v987 = vsel %vm986, 10.0, 0.0
      %v988 = vsel %vm985, %v709, %v987
      %vm989 = vcmp.gt.f32.partialorder %v988, -10.0
      %vm990 = vcmp.lt.f32.partialorder %v988, -10.0
      %v991 = vsel %vm990, -10.0, 0.0
      %v992 = vsel %vm989, %v988, %v991
      %v993 = vmul.f32 %v992, 0.01
      %v994 = vsub.f32 %v623, %v993
      %vm995 = vcmp.lt.f32.partialorder %v716, 10.0
      %vm996 = vcmp.gt.f32.partialorder %v716, 10.0
      %v997 = vsel %vm996, 10.0, 0.0
      %v998 = vsel %vm995, %v716, %v997
      %vm999 = vcmp.gt.f32.partialorder %v998, -10.0
      %vm1000 = vcmp.lt.f32.partialorder %v998, -10.0
      %v1001 = vsel %vm1000, -10.0, 0.0
      %v1002 = vsel %vm999, %v998, %v1001
      %v1003 = vmul.f32 %v1002, 0.01
      %v1004 = vsub.f32 %v633, %v1003
      %v1005 = vld [vmem:[%s169 + $0x10] sm:$0xff]
      %v1006 = vperm.slane %v934, 0
      %v1008 = vsel %vm188, %v1005, 0
      %1010 = vmatpush.msra.mxu0 0.0
      %1011 = vmatpush.msra.mxu0 0.0
      %1012 = vmatpush.msra.mxu0 0.0
      %1013 = vmatpush.msra.mxu0 0.0
      %1014 = vmatpush.msra.mxu0 0.0
      %1015 = vmatpush.msra.mxu0 0.0
      %1016 = vmatpush.msra.mxu0 0.0
      %1017 = vmatpush.msra.mxu0 0.0
      %1018 = vmatpush.msra.mxu0 0.0
      %1019 = vmatpush.msra.mxu0 0.0
      %1020 = vmatpush.msra.mxu0 0.0
      %1021 = vmatpush.msra.mxu0 0.0
      %1022 = vmatpush.msra.mxu0 0.0
      %1023 = vmatpush.msra.mxu0 0.0
      %1024 = vmatpush.msra.mxu0 %v924
      %1025 = vmatpush.msra.mxu0 %v923
      %1026 = vmatmul.f32.gmra.mxu0 %v1008
      %v1027 = vpop.f32.mrf.mxu0
      %v1028 = vadd.f32 %v1006, %v1027
      %1029 = vdwg.mxu0
      %v1030 = vmax.f32 %v1028, 0.0
      %v1031 = vperm.slane %v984, 0
      %v1033 = vsel %vm214, %v1030, 0
      %1035 = vmatpush.msra.mxu0 0.0
      %1036 = vmatpush.msra.mxu0 0.0
      %1037 = vmatpush.msra.mxu0 0.0
      %1038 = vmatpush.msra.mxu0 0.0
      %1039 = vmatpush.msra.mxu0 0.0
      %1040 = vmatpush.msra.mxu0 0.0
      %1041 = vmatpush.msra.mxu0 0.0
      %1042 = vmatpush.msra.mxu0 0.0
      %1043 = vmatpush.msra.mxu0 0.0
      %1044 = vmatpush.msra.mxu0 0.0
      %1045 = vmatpush.msra.mxu0 0.0
      %1046 = vmatpush.msra.mxu0 0.0
      %1047 = vmatpush.msra.mxu0 %v974
      %1048 = vmatpush.msra.mxu0 %v973
      %1049 = vmatpush.msra.mxu0 %v972
      %1050 = vmatpush.msra.mxu0 %v971
      %1051 = vmatmul.f32.gmra.mxu0 %v1033
      %v1052 = vpop.f32.mrf.mxu0
      %v1053 = vadd.f32 %v1031, %v1052
      %1054 = vdwg.mxu0
      %v1055 = vmax.f32 %v1053, 0.0
      %v1056 = vperm.slane %v994, 0
      %v1057 = vmul.f32 %v1055, %v1056
      %v1058 = vsel %vm214, %v1057, 0.0
      %1059 = vadd.xlane.f32.xlu0 %v1058
      %v1060 = vpop.xlane.xlu0 %1059
      %v1061 = vperm.slane %v1004, 0
      %v1062 = vadd.f32 %v1060, %v1061
      %1063 = vrot.lane.b32.xlu0 %v1005, 112
      %v1064 = vpop.permute.xlu0 %1063
      %v1066 = vsub.f32 %v1062, %v1064
      %v1067 = vmul.f32 %v1066, 0.25
      %1069 = vset.pattern.permute.xlu0 0
      %1070 = vperm.xlu0 %1069, %v1067
      %v1071 = vpop.permute.xlu0 %1070
      %v1073 = vmul.f32 %v1071, %v1055
      %v1074 = vsel %vm214, %v1073, 0.0
      %v1075 = vrot.slane %v1074, 4
      %v1076 = vadd.f32 %v1074, %v1075
      %v1077 = vrot.slane %v1076, 2
      %v1078 = vadd.f32 %v1076, %v1077
      %v1079 = vrot.slane %v1078, 1
      %v1080 = vadd.f32 %v1078, %v1079
      %v1081 = vsel %vm251, %v1067, 0.0
      %v1082 = vrot.slane %v1081, 4
      %v1083 = vadd.f32 %v1081, %v1082
      %v1084 = vrot.slane %v1083, 2
      %v1085 = vadd.f32 %v1083, %v1084
      %v1086 = vrot.slane %v1085, 1
      %v1087 = vadd.f32 %v1085, %v1086
      %v1088 = vmul.f32 %v1071, %v1056
      %vm1089 = vcmp.gt.f32.partialorder %v1053, 0.0
      %v1090 = vsel %vm1089, %v1088, 0.0
      %1091 = vxpose.xlu0.b32.start [1/16] %v1030, 128
      %1092 = vxpose.xlu0.b32.cont [2/16] 0.0, 128
      %1093 = vxpose.xlu0.b32.cont [3/16] 0.0, 128
      %1094 = vxpose.xlu0.b32.cont [4/16] 0.0, 128
      %1095 = vxpose.xlu0.b32.cont [5/16] 0.0, 128
      %1096 = vxpose.xlu0.b32.cont [6/16] 0.0, 128
      %1097 = vxpose.xlu0.b32.cont [7/16] 0.0, 128
      %1098 = vxpose.xlu0.b32.cont [8/16] 0.0, 128
      %1099 = vxpose.xlu0.b32.cont [9/16] 0.0, 128
      %1100 = vxpose.xlu0.b32.cont [10/16] 0.0, 128
      %1101 = vxpose.xlu0.b32.cont [11/16] 0.0, 128
      %1102 = vxpose.xlu0.b32.cont [12/16] 0.0, 128
      %1103 = vxpose.xlu0.b32.cont [13/16] 0.0, 128
      %1104 = vxpose.xlu0.b32.cont [14/16] 0.0, 128
      %1105 = vxpose.xlu0.b32.cont [15/16] 0.0, 128
      %1106 = vxpose.xlu0.b32.end [16/16] 0.0, 128
      %v1107 = vpop.trf.xlu0
      %v1108 = vpop.trf.xlu0
      %v1109 = vpop.trf.xlu0
      %v1110 = vpop.trf.xlu0
      %v1111 = vpop.trf.xlu0
      %v1112 = vpop.trf.xlu0
      %v1113 = vpop.trf.xlu0
      %v1114 = vpop.trf.xlu0
      %v1115 = vpop.trf.xlu0
      %v1116 = vpop.trf.xlu0
      %v1117 = vpop.trf.xlu0
      %v1118 = vpop.trf.xlu0
      %v1119 = vpop.trf.xlu0
      %v1120 = vpop.trf.xlu0
      %v1121 = vpop.trf.xlu0
      %v1122 = vpop.trf.xlu0
      %v1124 = vsel %vm380, %v1107, 0
      %v1127 = vsel %vm380, %v1108, 0
      %v1130 = vsel %vm380, %v1109, 0
      %v1133 = vsel %vm380, %v1110, 0
      %1135 = vmatpush.msra.mxu0 0.0
      %1136 = vmatpush.msra.mxu0 0.0
      %1137 = vmatpush.msra.mxu0 0.0
      %1138 = vmatpush.msra.mxu0 0.0
      %1139 = vmatpush.msra.mxu0 0.0
      %1140 = vmatpush.msra.mxu0 0.0
      %1141 = vmatpush.msra.mxu0 0.0
      %1142 = vmatpush.msra.mxu0 0.0
      %1143 = vmatpush.msra.mxu0 0.0
      %1144 = vmatpush.msra.mxu0 0.0
      %1145 = vmatpush.msra.mxu0 0.0
      %1146 = vmatpush.msra.mxu0 0.0
      %1147 = vmatpush.msra.mxu0 0.0
      %1148 = vmatpush.msra.mxu0 0.0
      %1149 = vmatpush.msra.mxu0 0.0
      %1150 = vmatpush.msra.mxu0 %v1090
      %1151 = vmatmul.f32.gmra.mxu0 %v1124
      %v1152 = vpop.f32.mrf.mxu0
      %v1153 = vadd.f32 0.0, %v1152
      %1154 = vmatmul.f32.gmra.mxu0 %v1127
      %v1155 = vpop.f32.mrf.mxu0
      %v1156 = vadd.f32 0.0, %v1155
      %1157 = vmatmul.f32.gmra.mxu0 %v1130
      %v1158 = vpop.f32.mrf.mxu0
      %v1159 = vadd.f32 0.0, %v1158
      %1160 = vmatmul.f32.gmra.mxu0 %v1133
      %v1161 = vpop.f32.mrf.mxu0
      %v1162 = vadd.f32 0.0, %v1161
      %1163 = vdwg.mxu0
      %v1164 = vsel %vm214, %v1090, 0.0
      %v1165 = vrot.slane %v1164, 4
      %v1166 = vadd.f32 %v1164, %v1165
      %v1167 = vrot.slane %v1166, 2
      %v1168 = vadd.f32 %v1166, %v1167
      %v1169 = vrot.slane %v1168, 1
      %v1170 = vadd.f32 %v1168, %v1169
      %v1172 = vsel %vm214, %v1090, 0
      %v1175 = vsel %vm214, %v971, 0
      %v1178 = vsel %vm214, %v972, 0
      %v1181 = vsel %vm214, %v973, 0
      %v1184 = vsel %vm214, %v974, 0
      %1186 = vmatpush.xpose.msra.mxu0 0.0
      %1187 = vmatpush.xpose.msra.mxu0 0.0
      %1188 = vmatpush.xpose.msra.mxu0 0.0
      %1189 = vmatpush.xpose.msra.mxu0 0.0
      %1190 = vmatpush.xpose.msra.mxu0 0.0
      %1191 = vmatpush.xpose.msra.mxu0 0.0
      %1192 = vmatpush.xpose.msra.mxu0 0.0
      %1193 = vmatpush.xpose.msra.mxu0 0.0
      %1194 = vmatpush.xpose.msra.mxu0 0.0
      %1195 = vmatpush.xpose.msra.mxu0 0.0
      %1196 = vmatpush.xpose.msra.mxu0 0.0
      %1197 = vmatpush.xpose.msra.mxu0 0.0
      %1198 = vmatpush.xpose.msra.mxu0 %v1184
      %1199 = vmatpush.xpose.msra.mxu0 %v1181
      %1200 = vmatpush.xpose.msra.mxu0 %v1178
      %1201 = vmatpush.xpose.msra.mxu0 %v1175
      %1202 = vmatmul.f32.gmra.mxu0 %v1172
      %v1203 = vpop.f32.mrf.mxu0
      %v1204 = vadd.f32 0.0, %v1203
      %1205 = vdwg.mxu0
      %vm1206 = vcmp.gt.f32.partialorder %v1028, 0.0
      %v1207 = vsel %vm1206, %v1204, 0.0
      %1208 = vxpose.xlu0.b32.start [1/16] %v1005, 128
      %1209 = vxpose.xlu0.b32.cont [2/16] 0.0, 128
      %1210 = vxpose.xlu0.b32.cont [3/16] 0.0, 128
      %1211 = vxpose.xlu0.b32.cont [4/16] 0.0, 128
      %1212 = vxpose.xlu0.b32.cont [5/16] 0.0, 128
      %1213 = vxpose.xlu0.b32.cont [6/16] 0.0, 128
      %1214 = vxpose.xlu0.b32.cont [7/16] 0.0, 128
      %1215 = vxpose.xlu0.b32.cont [8/16] 0.0, 128
      %1216 = vxpose.xlu0.b32.cont [9/16] 0.0, 128
      %1217 = vxpose.xlu0.b32.cont [10/16] 0.0, 128
      %1218 = vxpose.xlu0.b32.cont [11/16] 0.0, 128
      %1219 = vxpose.xlu0.b32.cont [12/16] 0.0, 128
      %1220 = vxpose.xlu0.b32.cont [13/16] 0.0, 128
      %1221 = vxpose.xlu0.b32.cont [14/16] 0.0, 128
      %1222 = vxpose.xlu0.b32.cont [15/16] 0.0, 128
      %1223 = vxpose.xlu0.b32.end [16/16] 0.0, 128
      %v1224 = vpop.trf.xlu0
      %v1225 = vpop.trf.xlu0
      %v1226 = vpop.trf.xlu0
      %v1227 = vpop.trf.xlu0
      %v1228 = vpop.trf.xlu0
      %v1229 = vpop.trf.xlu0
      %v1230 = vpop.trf.xlu0
      %v1231 = vpop.trf.xlu0
      %v1232 = vpop.trf.xlu0
      %v1233 = vpop.trf.xlu0
      %v1234 = vpop.trf.xlu0
      %v1235 = vpop.trf.xlu0
      %v1236 = vpop.trf.xlu0
      %v1237 = vpop.trf.xlu0
      %v1238 = vpop.trf.xlu0
      %v1239 = vpop.trf.xlu0
      %v1241 = vsel %vm380, %v1224, 0
      %v1244 = vsel %vm380, %v1225, 0
      %1246 = vmatpush.msra.mxu0 0.0
      %1247 = vmatpush.msra.mxu0 0.0
      %1248 = vmatpush.msra.mxu0 0.0
      %1249 = vmatpush.msra.mxu0 0.0
      %1250 = vmatpush.msra.mxu0 0.0
      %1251 = vmatpush.msra.mxu0 0.0
      %1252 = vmatpush.msra.mxu0 0.0
      %1253 = vmatpush.msra.mxu0 0.0
      %1254 = vmatpush.msra.mxu0 0.0
      %1255 = vmatpush.msra.mxu0 0.0
      %1256 = vmatpush.msra.mxu0 0.0
      %1257 = vmatpush.msra.mxu0 0.0
      %1258 = vmatpush.msra.mxu0 0.0
      %1259 = vmatpush.msra.mxu0 0.0
      %1260 = vmatpush.msra.mxu0 0.0
      %1261 = vmatpush.msra.mxu0 %v1207
      %1262 = vmatmul.f32.gmra.mxu0 %v1241
      %v1263 = vpop.f32.mrf.mxu0
      %v1264 = vadd.f32 0.0, %v1263
      %1265 = vmatmul.f32.gmra.mxu0 %v1244
      %v1266 = vpop.f32.mrf.mxu0
      %v1267 = vadd.f32 0.0, %v1266
      %1268 = vdwg.mxu0
      %v1269 = vsel %vm214, %v1207, 0.0
      %v1270 = vrot.slane %v1269, 4
      %v1271 = vadd.f32 %v1269, %v1270
      %v1272 = vrot.slane %v1271, 2
      %v1273 = vadd.f32 %v1271, %v1272
      %v1274 = vrot.slane %v1273, 1
      %v1275 = vadd.f32 %v1273, %v1274
      %vm1276 = vcmp.lt.f32.partialorder %v1264, 10.0
      %vm1277 = vcmp.lt.f32.partialorder %v1267, 10.0
      %vm1278 = vcmp.gt.f32.partialorder %v1264, 10.0
      %vm1279 = vcmp.gt.f32.partialorder %v1267, 10.0
      %v1280 = vsel %vm1278, 10.0, 0.0
      %v1281 = vsel %vm1279, 10.0, 0.0
      %v1282 = vsel %vm1276, %v1264, %v1280
      %v1283 = vsel %vm1277, %v1267, %v1281
      %vm1284 = vcmp.gt.f32.partialorder %v1282, -10.0
      %vm1285 = vcmp.gt.f32.partialorder %v1283, -10.0
      %vm1286 = vcmp.lt.f32.partialorder %v1282, -10.0
      %vm1287 = vcmp.lt.f32.partialorder %v1283, -10.0
      %v1288 = vsel %vm1286, -10.0, 0.0
      %v1289 = vsel %vm1287, -10.0, 0.0
      %v1290 = vsel %vm1284, %v1282, %v1288
      %v1291 = vsel %vm1285, %v1283, %v1289
      %v1292 = vmul.f32 %v1290, 0.01
      %v1293 = vmul.f32 %v1291, 0.01
      %v1294 = vsub.f32 %v923, %v1292
      %v1295 = vsub.f32 %v924, %v1293
      %vm1296 = vcmp.lt.f32.partialorder %v1275, 10.0
      %vm1297 = vcmp.gt.f32.partialorder %v1275, 10.0
      %v1298 = vsel %vm1297, 10.0, 0.0
      %v1299 = vsel %vm1296, %v1275, %v1298
      %vm1300 = vcmp.gt.f32.partialorder %v1299, -10.0
      %vm1301 = vcmp.lt.f32.partialorder %v1299, -10.0
      %v1302 = vsel %vm1301, -10.0, 0.0
      %v1303 = vsel %vm1300, %v1299, %v1302
      %v1304 = vmul.f32 %v1303, 0.01
      %v1305 = vsub.f32 %v934, %v1304
      %vm1306 = vcmp.lt.f32.partialorder %v1153, 10.0
      %vm1307 = vcmp.lt.f32.partialorder %v1156, 10.0
      %vm1308 = vcmp.lt.f32.partialorder %v1159, 10.0
      %vm1309 = vcmp.lt.f32.partialorder %v1162, 10.0
      %vm1310 = vcmp.gt.f32.partialorder %v1153, 10.0
      %vm1311 = vcmp.gt.f32.partialorder %v1156, 10.0
      %vm1312 = vcmp.gt.f32.partialorder %v1159, 10.0
      %vm1313 = vcmp.gt.f32.partialorder %v1162, 10.0
      %v1314 = vsel %vm1310, 10.0, 0.0
      %v1315 = vsel %vm1311, 10.0, 0.0
      %v1316 = vsel %vm1312, 10.0, 0.0
      %v1317 = vsel %vm1313, 10.0, 0.0
      %v1318 = vsel %vm1306, %v1153, %v1314
      %v1319 = vsel %vm1307, %v1156, %v1315
      %v1320 = vsel %vm1308, %v1159, %v1316
      %v1321 = vsel %vm1309, %v1162, %v1317
      %vm1322 = vcmp.gt.f32.partialorder %v1318, -10.0
      %vm1323 = vcmp.gt.f32.partialorder %v1319, -10.0
      %vm1324 = vcmp.gt.f32.partialorder %v1320, -10.0
      %vm1325 = vcmp.gt.f32.partialorder %v1321, -10.0
      %vm1326 = vcmp.lt.f32.partialorder %v1318, -10.0
      %vm1327 = vcmp.lt.f32.partialorder %v1319, -10.0
      %vm1328 = vcmp.lt.f32.partialorder %v1320, -10.0
      %vm1329 = vcmp.lt.f32.partialorder %v1321, -10.0
      %v1330 = vsel %vm1326, -10.0, 0.0
      %v1331 = vsel %vm1327, -10.0, 0.0
      %v1332 = vsel %vm1328, -10.0, 0.0
      %v1333 = vsel %vm1329, -10.0, 0.0
      %v1334 = vsel %vm1322, %v1318, %v1330
      %v1335 = vsel %vm1323, %v1319, %v1331
      %v1336 = vsel %vm1324, %v1320, %v1332
      %v1337 = vsel %vm1325, %v1321, %v1333
      %v1338 = vmul.f32 %v1334, 0.01
      %v1339 = vmul.f32 %v1335, 0.01
      %v1340 = vmul.f32 %v1336, 0.01
      %v1341 = vmul.f32 %v1337, 0.01
      %v1342 = vsub.f32 %v971, %v1338
      %v1343 = vsub.f32 %v972, %v1339
      %v1344 = vsub.f32 %v973, %v1340
      %v1345 = vsub.f32 %v974, %v1341
      %vm1346 = vcmp.lt.f32.partialorder %v1170, 10.0
      %vm1347 = vcmp.gt.f32.partialorder %v1170, 10.0
      %v1348 = vsel %vm1347, 10.0, 0.0
      %v1349 = vsel %vm1346, %v1170, %v1348
      %vm1350 = vcmp.gt.f32.partialorder %v1349, -10.0
      %vm1351 = vcmp.lt.f32.partialorder %v1349, -10.0
      %v1352 = vsel %vm1351, -10.0, 0.0
      %v1353 = vsel %vm1350, %v1349, %v1352
      %v1354 = vmul.f32 %v1353, 0.01
      %v1355 = vsub.f32 %v984, %v1354
      %vm1356 = vcmp.lt.f32.partialorder %v1080, 10.0
      %vm1357 = vcmp.gt.f32.partialorder %v1080, 10.0
      %v1358 = vsel %vm1357, 10.0, 0.0
      %v1359 = vsel %vm1356, %v1080, %v1358
      %vm1360 = vcmp.gt.f32.partialorder %v1359, -10.0
      %vm1361 = vcmp.lt.f32.partialorder %v1359, -10.0
      %v1362 = vsel %vm1361, -10.0, 0.0
      %v1363 = vsel %vm1360, %v1359, %v1362
      %v1364 = vmul.f32 %v1363, 0.01
      %v1365 = vsub.f32 %v994, %v1364
      %vm1366 = vcmp.lt.f32.partialorder %v1087, 10.0
      %vm1367 = vcmp.gt.f32.partialorder %v1087, 10.0
      %v1368 = vsel %vm1367, 10.0, 0.0
      %v1369 = vsel %vm1366, %v1087, %v1368
      %vm1370 = vcmp.gt.f32.partialorder %v1369, -10.0
      %vm1371 = vcmp.lt.f32.partialorder %v1369, -10.0
      %v1372 = vsel %vm1371, -10.0, 0.0
      %v1373 = vsel %vm1370, %v1369, %v1372
      %v1374 = vmul.f32 %v1373, 0.01
      %v1375 = vsub.f32 %v1004, %v1374
      %v1376 = vld [vmem:[%s169 + $0x18] sm:$0xff]
      %v1377 = vperm.slane %v1305, 0
      %v1379 = vsel %vm188, %v1376, 0
      %1381 = vmatpush.msra.mxu0 0.0
      %1382 = vmatpush.msra.mxu0 0.0
      %1383 = vmatpush.msra.mxu0 0.0
      %1384 = vmatpush.msra.mxu0 0.0
      %1385 = vmatpush.msra.mxu0 0.0
      %1386 = vmatpush.msra.mxu0 0.0
      %1387 = vmatpush.msra.mxu0 0.0
      %1388 = vmatpush.msra.mxu0 0.0
      %1389 = vmatpush.msra.mxu0 0.0
      %1390 = vmatpush.msra.mxu0 0.0
      %1391 = vmatpush.msra.mxu0 0.0
      %1392 = vmatpush.msra.mxu0 0.0
      %1393 = vmatpush.msra.mxu0 0.0
      %1394 = vmatpush.msra.mxu0 0.0
      %1395 = vmatpush.msra.mxu0 %v1295
      %1396 = vmatpush.msra.mxu0 %v1294
      %1397 = vmatmul.f32.gmra.mxu0 %v1379
      %v1398 = vpop.f32.mrf.mxu0
      %v1399 = vadd.f32 %v1377, %v1398
      %1400 = vdwg.mxu0
      %v1401 = vmax.f32 %v1399, 0.0
      %v1402 = vperm.slane %v1355, 0
      %v1404 = vsel %vm214, %v1401, 0
      %1406 = vmatpush.msra.mxu0 0.0
      %1407 = vmatpush.msra.mxu0 0.0
      %1408 = vmatpush.msra.mxu0 0.0
      %1409 = vmatpush.msra.mxu0 0.0
      %1410 = vmatpush.msra.mxu0 0.0
      %1411 = vmatpush.msra.mxu0 0.0
      %1412 = vmatpush.msra.mxu0 0.0
      %1413 = vmatpush.msra.mxu0 0.0
      %1414 = vmatpush.msra.mxu0 0.0
      %1415 = vmatpush.msra.mxu0 0.0
      %1416 = vmatpush.msra.mxu0 0.0
      %1417 = vmatpush.msra.mxu0 0.0
      %1418 = vmatpush.msra.mxu0 %v1345
      %1419 = vmatpush.msra.mxu0 %v1344
      %1420 = vmatpush.msra.mxu0 %v1343
      %1421 = vmatpush.msra.mxu0 %v1342
      %1422 = vmatmul.f32.gmra.mxu0 %v1404
      %v1423 = vpop.f32.mrf.mxu0
      %v1424 = vadd.f32 %v1402, %v1423
      %1425 = vdwg.mxu0
      %v1426 = vmax.f32 %v1424, 0.0
      %v1427 = vperm.slane %v1365, 0
      %v1428 = vmul.f32 %v1426, %v1427
      %v1429 = vsel %vm214, %v1428, 0.0
      %1430 = vadd.xlane.f32.xlu0 %v1429
      %v1431 = vpop.xlane.xlu0 %1430
      %v1432 = vperm.slane %v1375, 0
      %v1433 = vadd.f32 %v1431, %v1432
      %1434 = vrot.lane.b32.xlu0 %v1376, 112
      %v1435 = vpop.permute.xlu0 %1434
      %v1437 = vsub.f32 %v1433, %v1435
      %v1438 = vmul.f32 %v1437, 0.25
      %1440 = vset.pattern.permute.xlu0 0
      %1441 = vperm.xlu0 %1440, %v1438
      %v1442 = vpop.permute.xlu0 %1441
      %v1444 = vmul.f32 %v1442, %v1426
      %v1445 = vsel %vm214, %v1444, 0.0
      %v1446 = vrot.slane %v1445, 4
      %v1447 = vadd.f32 %v1445, %v1446
      %v1448 = vrot.slane %v1447, 2
      %v1449 = vadd.f32 %v1447, %v1448
      %v1450 = vrot.slane %v1449, 1
      %v1451 = vadd.f32 %v1449, %v1450
      %v1452 = vsel %vm251, %v1438, 0.0
      %v1453 = vrot.slane %v1452, 4
      %v1454 = vadd.f32 %v1452, %v1453
      %v1455 = vrot.slane %v1454, 2
      %v1456 = vadd.f32 %v1454, %v1455
      %v1457 = vrot.slane %v1456, 1
      %v1458 = vadd.f32 %v1456, %v1457
      %v1459 = vmul.f32 %v1442, %v1427
      %vm1460 = vcmp.gt.f32.partialorder %v1424, 0.0
      %v1461 = vsel %vm1460, %v1459, 0.0
      %1462 = vxpose.xlu0.b32.start [1/16] %v1401, 128
      %1463 = vxpose.xlu0.b32.cont [2/16] 0.0, 128
      %1464 = vxpose.xlu0.b32.cont [3/16] 0.0, 128
      %1465 = vxpose.xlu0.b32.cont [4/16] 0.0, 128
      %1466 = vxpose.xlu0.b32.cont [5/16] 0.0, 128
      %1467 = vxpose.xlu0.b32.cont [6/16] 0.0, 128
      %1468 = vxpose.xlu0.b32.cont [7/16] 0.0, 128
      %1469 = vxpose.xlu0.b32.cont [8/16] 0.0, 128
      %1470 = vxpose.xlu0.b32.cont [9/16] 0.0, 128
      %1471 = vxpose.xlu0.b32.cont [10/16] 0.0, 128
      %1472 = vxpose.xlu0.b32.cont [11/16] 0.0, 128
      %1473 = vxpose.xlu0.b32.cont [12/16] 0.0, 128
      %1474 = vxpose.xlu0.b32.cont [13/16] 0.0, 128
      %1475 = vxpose.xlu0.b32.cont [14/16] 0.0, 128
      %1476 = vxpose.xlu0.b32.cont [15/16] 0.0, 128
      %1477 = vxpose.xlu0.b32.end [16/16] 0.0, 128
      %v1478 = vpop.trf.xlu0
      %v1479 = vpop.trf.xlu0
      %v1480 = vpop.trf.xlu0
      %v1481 = vpop.trf.xlu0
      %v1482 = vpop.trf.xlu0
      %v1483 = vpop.trf.xlu0
      %v1484 = vpop.trf.xlu0
      %v1485 = vpop.trf.xlu0
      %v1486 = vpop.trf.xlu0
      %v1487 = vpop.trf.xlu0
      %v1488 = vpop.trf.xlu0
      %v1489 = vpop.trf.xlu0
      %v1490 = vpop.trf.xlu0
      %v1491 = vpop.trf.xlu0
      %v1492 = vpop.trf.xlu0
      %v1493 = vpop.trf.xlu0
      %v1495 = vsel %vm380, %v1478, 0
      %v1498 = vsel %vm380, %v1479, 0
      %v1501 = vsel %vm380, %v1480, 0
      %v1504 = vsel %vm380, %v1481, 0
      %1506 = vmatpush.msra.mxu0 0.0
      %1507 = vmatpush.msra.mxu0 0.0
      %1508 = vmatpush.msra.mxu0 0.0
      %1509 = vmatpush.msra.mxu0 0.0
      %1510 = vmatpush.msra.mxu0 0.0
      %1511 = vmatpush.msra.mxu0 0.0
      %1512 = vmatpush.msra.mxu0 0.0
      %1513 = vmatpush.msra.mxu0 0.0
      %1514 = vmatpush.msra.mxu0 0.0
      %1515 = vmatpush.msra.mxu0 0.0
      %1516 = vmatpush.msra.mxu0 0.0
      %1517 = vmatpush.msra.mxu0 0.0
      %1518 = vmatpush.msra.mxu0 0.0
      %1519 = vmatpush.msra.mxu0 0.0
      %1520 = vmatpush.msra.mxu0 0.0
      %1521 = vmatpush.msra.mxu0 %v1461
      %1522 = vmatmul.f32.gmra.mxu0 %v1495
      %v1523 = vpop.f32.mrf.mxu0
      %v1524 = vadd.f32 0.0, %v1523
      %1525 = vmatmul.f32.gmra.mxu0 %v1498
      %v1526 = vpop.f32.mrf.mxu0
      %v1527 = vadd.f32 0.0, %v1526
      %1528 = vmatmul.f32.gmra.mxu0 %v1501
      %v1529 = vpop.f32.mrf.mxu0
      %v1530 = vadd.f32 0.0, %v1529
      %1531 = vmatmul.f32.gmra.mxu0 %v1504
      %v1532 = vpop.f32.mrf.mxu0
      %v1533 = vadd.f32 0.0, %v1532
      %1534 = vdwg.mxu0
      %v1535 = vsel %vm214, %v1461, 0.0
      %v1536 = vrot.slane %v1535, 4
      %v1537 = vadd.f32 %v1535, %v1536
      %v1538 = vrot.slane %v1537, 2
      %v1539 = vadd.f32 %v1537, %v1538
      %v1540 = vrot.slane %v1539, 1
      %v1541 = vadd.f32 %v1539, %v1540
      %v1543 = vsel %vm214, %v1461, 0
      %v1546 = vsel %vm214, %v1342, 0
      %v1549 = vsel %vm214, %v1343, 0
      %v1552 = vsel %vm214, %v1344, 0
      %v1555 = vsel %vm214, %v1345, 0
      %1557 = vmatpush.xpose.msra.mxu0 0.0
      %1558 = vmatpush.xpose.msra.mxu0 0.0
      %1559 = vmatpush.xpose.msra.mxu0 0.0
      %1560 = vmatpush.xpose.msra.mxu0 0.0
      %1561 = vmatpush.xpose.msra.mxu0 0.0
      %1562 = vmatpush.xpose.msra.mxu0 0.0
      %1563 = vmatpush.xpose.msra.mxu0 0.0
      %1564 = vmatpush.xpose.msra.mxu0 0.0
      %1565 = vmatpush.xpose.msra.mxu0 0.0
      %1566 = vmatpush.xpose.msra.mxu0 0.0
      %1567 = vmatpush.xpose.msra.mxu0 0.0
      %1568 = vmatpush.xpose.msra.mxu0 0.0
      %1569 = vmatpush.xpose.msra.mxu0 %v1555
      %1570 = vmatpush.xpose.msra.mxu0 %v1552
      %1571 = vmatpush.xpose.msra.mxu0 %v1549
      %1572 = vmatpush.xpose.msra.mxu0 %v1546
      %1573 = vmatmul.f32.gmra.mxu0 %v1543
      %v1574 = vpop.f32.mrf.mxu0
      %v1575 = vadd.f32 0.0, %v1574
      %1576 = vdwg.mxu0
      %vm1577 = vcmp.gt.f32.partialorder %v1399, 0.0
      %v1578 = vsel %vm1577, %v1575, 0.0
      %1579 = vxpose.xlu0.b32.start [1/16] %v1376, 128
      %1580 = vxpose.xlu0.b32.cont [2/16] 0.0, 128
      %1581 = vxpose.xlu0.b32.cont [3/16] 0.0, 128
      %1582 = vxpose.xlu0.b32.cont [4/16] 0.0, 128
      %1583 = vxpose.xlu0.b32.cont [5/16] 0.0, 128
      %1584 = vxpose.xlu0.b32.cont [6/16] 0.0, 128
      %1585 = vxpose.xlu0.b32.cont [7/16] 0.0, 128
      %1586 = vxpose.xlu0.b32.cont [8/16] 0.0, 128
      %1587 = vxpose.xlu0.b32.cont [9/16] 0.0, 128
      %1588 = vxpose.xlu0.b32.cont [10/16] 0.0, 128
      %1589 = vxpose.xlu0.b32.cont [11/16] 0.0, 128
      %1590 = vxpose.xlu0.b32.cont [12/16] 0.0, 128
      %1591 = vxpose.xlu0.b32.cont [13/16] 0.0, 128
      %1592 = vxpose.xlu0.b32.cont [14/16] 0.0, 128
      %1593 = vxpose.xlu0.b32.cont [15/16] 0.0, 128
      %1594 = vxpose.xlu0.b32.end [16/16] 0.0, 128
      %v1595 = vpop.trf.xlu0
      %v1596 = vpop.trf.xlu0
      %v1597 = vpop.trf.xlu0
      %v1598 = vpop.trf.xlu0
      %v1599 = vpop.trf.xlu0
      %v1600 = vpop.trf.xlu0
      %v1601 = vpop.trf.xlu0
      %v1602 = vpop.trf.xlu0
      %v1603 = vpop.trf.xlu0
      %v1604 = vpop.trf.xlu0
      %v1605 = vpop.trf.xlu0
      %v1606 = vpop.trf.xlu0
      %v1607 = vpop.trf.xlu0
      %v1608 = vpop.trf.xlu0
      %v1609 = vpop.trf.xlu0
      %v1610 = vpop.trf.xlu0
      %v1612 = vsel %vm380, %v1595, 0
      %v1615 = vsel %vm380, %v1596, 0
      %1617 = vmatpush.msra.mxu0 0.0
      %1618 = vmatpush.msra.mxu0 0.0
      %1619 = vmatpush.msra.mxu0 0.0
      %1620 = vmatpush.msra.mxu0 0.0
      %1621 = vmatpush.msra.mxu0 0.0
      %1622 = vmatpush.msra.mxu0 0.0
      %1623 = vmatpush.msra.mxu0 0.0
      %1624 = vmatpush.msra.mxu0 0.0
      %1625 = vmatpush.msra.mxu0 0.0
      %1626 = vmatpush.msra.mxu0 0.0
      %1627 = vmatpush.msra.mxu0 0.0
      %1628 = vmatpush.msra.mxu0 0.0
      %1629 = vmatpush.msra.mxu0 0.0
      %1630 = vmatpush.msra.mxu0 0.0
      %1631 = vmatpush.msra.mxu0 0.0
      %1632 = vmatpush.msra.mxu0 %v1578
      %1633 = vmatmul.f32.gmra.mxu0 %v1612
      %v1634 = vpop.f32.mrf.mxu0
      %v1635 = vadd.f32 0.0, %v1634
      %1636 = vmatmul.f32.gmra.mxu0 %v1615
      %v1637 = vpop.f32.mrf.mxu0
      %v1638 = vadd.f32 0.0, %v1637
      %1639 = vdwg.mxu0
      %v1640 = vsel %vm214, %v1578, 0.0
      %v1641 = vrot.slane %v1640, 4
      %v1642 = vadd.f32 %v1640, %v1641
      %v1643 = vrot.slane %v1642, 2
      %v1644 = vadd.f32 %v1642, %v1643
      %v1645 = vrot.slane %v1644, 1
      %v1646 = vadd.f32 %v1644, %v1645
      %vm1647 = vcmp.lt.f32.partialorder %v1635, 10.0
      %vm1648 = vcmp.lt.f32.partialorder %v1638, 10.0
      %vm1649 = vcmp.gt.f32.partialorder %v1635, 10.0
      %vm1650 = vcmp.gt.f32.partialorder %v1638, 10.0
      %v1651 = vsel %vm1649, 10.0, 0.0
      %v1652 = vsel %vm1650, 10.0, 0.0
      %v1653 = vsel %vm1647, %v1635, %v1651
      %v1654 = vsel %vm1648, %v1638, %v1652
      %vm1655 = vcmp.gt.f32.partialorder %v1653, -10.0
      %vm1656 = vcmp.gt.f32.partialorder %v1654, -10.0
      %vm1657 = vcmp.lt.f32.partialorder %v1653, -10.0
      %vm1658 = vcmp.lt.f32.partialorder %v1654, -10.0
      %v1659 = vsel %vm1657, -10.0, 0.0
      %v1660 = vsel %vm1658, -10.0, 0.0
      %v1661 = vsel %vm1655, %v1653, %v1659
      %v1662 = vsel %vm1656, %v1654, %v1660
      %v1663 = vmul.f32 %v1661, 0.01
      %v1664 = vmul.f32 %v1662, 0.01
      %v1665 = vsub.f32 %v1294, %v1663
      %v1666 = vsub.f32 %v1295, %v1664
      %vm1667 = vcmp.lt.f32.partialorder %v1646, 10.0
      %vm1668 = vcmp.gt.f32.partialorder %v1646, 10.0
      %v1669 = vsel %vm1668, 10.0, 0.0
      %v1670 = vsel %vm1667, %v1646, %v1669
      %vm1671 = vcmp.gt.f32.partialorder %v1670, -10.0
      %vm1672 = vcmp.lt.f32.partialorder %v1670, -10.0
      %v1673 = vsel %vm1672, -10.0, 0.0
      %v1674 = vsel %vm1671, %v1670, %v1673
      %v1675 = vmul.f32 %v1674, 0.01
      %v1676 = vsub.f32 %v1305, %v1675
      %vm1677 = vcmp.lt.f32.partialorder %v1524, 10.0
      %vm1678 = vcmp.lt.f32.partialorder %v1527, 10.0
      %vm1679 = vcmp.lt.f32.partialorder %v1530, 10.0
      %vm1680 = vcmp.lt.f32.partialorder %v1533, 10.0
      %vm1681 = vcmp.gt.f32.partialorder %v1524, 10.0
      %vm1682 = vcmp.gt.f32.partialorder %v1527, 10.0
      %vm1683 = vcmp.gt.f32.partialorder %v1530, 10.0
      %vm1684 = vcmp.gt.f32.partialorder %v1533, 10.0
      %v1685 = vsel %vm1681, 10.0, 0.0
      %v1686 = vsel %vm1682, 10.0, 0.0
      %v1687 = vsel %vm1683, 10.0, 0.0
      %v1688 = vsel %vm1684, 10.0, 0.0
      %v1689 = vsel %vm1677, %v1524, %v1685
      %v1690 = vsel %vm1678, %v1527, %v1686
      %v1691 = vsel %vm1679, %v1530, %v1687
      %v1692 = vsel %vm1680, %v1533, %v1688
      %vm1693 = vcmp.gt.f32.partialorder %v1689, -10.0
      %vm1694 = vcmp.gt.f32.partialorder %v1690, -10.0
      %vm1695 = vcmp.gt.f32.partialorder %v1691, -10.0
      %vm1696 = vcmp.gt.f32.partialorder %v1692, -10.0
      %vm1697 = vcmp.lt.f32.partialorder %v1689, -10.0
      %vm1698 = vcmp.lt.f32.partialorder %v1690, -10.0
      %vm1699 = vcmp.lt.f32.partialorder %v1691, -10.0
      %vm1700 = vcmp.lt.f32.partialorder %v1692, -10.0
      %v1701 = vsel %vm1697, -10.0, 0.0
      %v1702 = vsel %vm1698, -10.0, 0.0
      %v1703 = vsel %vm1699, -10.0, 0.0
      %v1704 = vsel %vm1700, -10.0, 0.0
      %v1705 = vsel %vm1693, %v1689, %v1701
      %v1706 = vsel %vm1694, %v1690, %v1702
      %v1707 = vsel %vm1695, %v1691, %v1703
      %v1708 = vsel %vm1696, %v1692, %v1704
      %v1709 = vmul.f32 %v1705, 0.01
      %v1710 = vmul.f32 %v1706, 0.01
      %v1711 = vmul.f32 %v1707, 0.01
      %v1712 = vmul.f32 %v1708, 0.01
      %v1713 = vsub.f32 %v1342, %v1709
      %v1714 = vsub.f32 %v1343, %v1710
      %v1715 = vsub.f32 %v1344, %v1711
      %v1716 = vsub.f32 %v1345, %v1712
      %vm1717 = vcmp.lt.f32.partialorder %v1541, 10.0
      %vm1718 = vcmp.gt.f32.partialorder %v1541, 10.0
      %v1719 = vsel %vm1718, 10.0, 0.0
      %v1720 = vsel %vm1717, %v1541, %v1719
      %vm1721 = vcmp.gt.f32.partialorder %v1720, -10.0
      %vm1722 = vcmp.lt.f32.partialorder %v1720, -10.0
      %v1723 = vsel %vm1722, -10.0, 0.0
      %v1724 = vsel %vm1721, %v1720, %v1723
      %v1725 = vmul.f32 %v1724, 0.01
      %v1726 = vsub.f32 %v1355, %v1725
      %vm1727 = vcmp.lt.f32.partialorder %v1451, 10.0
      %vm1728 = vcmp.gt.f32.partialorder %v1451, 10.0
      %v1729 = vsel %vm1728, 10.0, 0.0
      %v1730 = vsel %vm1727, %v1451, %v1729
      %vm1731 = vcmp.gt.f32.partialorder %v1730, -10.0
      %vm1732 = vcmp.lt.f32.partialorder %v1730, -10.0
      %v1733 = vsel %vm1732, -10.0, 0.0
      %v1734 = vsel %vm1731, %v1730, %v1733
      %v1735 = vmul.f32 %v1734, 0.01
      %v1736 = vsub.f32 %v1365, %v1735
      %vm1737 = vcmp.lt.f32.partialorder %v1458, 10.0
      %vm1738 = vcmp.gt.f32.partialorder %v1458, 10.0
      %v1739 = vsel %vm1738, 10.0, 0.0
      %v1740 = vsel %vm1737, %v1458, %v1739
      %vm1741 = vcmp.gt.f32.partialorder %v1740, -10.0
      %vm1742 = vcmp.lt.f32.partialorder %v1740, -10.0
      %v1743 = vsel %vm1742, -10.0, 0.0
      %v1744 = vsel %vm1741, %v1740, %v1743
      %v1745 = vmul.f32 %v1744, 0.01
      %v1746 = vsub.f32 %v1375, %v1745
      %v1747 = vperm.slane %v1676, 0
      %1748 = vmatpush.msra.mxu0 0.0
      %1749 = vmatpush.msra.mxu0 0.0
      %1750 = vmatpush.msra.mxu0 0.0
      %1751 = vmatpush.msra.mxu0 0.0
      %1752 = vmatpush.msra.mxu0 0.0
      %1753 = vmatpush.msra.mxu0 0.0
      %1754 = vmatpush.msra.mxu0 0.0
      %1755 = vmatpush.msra.mxu0 0.0
      %1756 = vmatpush.msra.mxu0 0.0
      %1757 = vmatpush.msra.mxu0 0.0
      %1758 = vmatpush.msra.mxu0 0.0
      %1759 = vmatpush.msra.mxu0 0.0
      %1760 = vmatpush.msra.mxu0 0.0
      %1761 = vmatpush.msra.mxu0 0.0
      %1762 = vmatpush.msra.mxu0 %v1666
      %1763 = vmatpush.msra.mxu0 %v1665
      %1764 = vmatmul.f32.gmra.mxu0 %v190
      %v1765 = vpop.f32.mrf.mxu0
      %v1766 = vadd.f32 %v1747, %v1765
      %1767 = vdwg.mxu0
      %v1768 = vmax.f32 %v1766, 0.0
      %v1769 = vperm.slane %v1726, 0
      %v1771 = vsel %vm214, %v1768, 0
      %1773 = vmatpush.msra.mxu0 0.0
      %1774 = vmatpush.msra.mxu0 0.0
      %1775 = vmatpush.msra.mxu0 0.0
      %1776 = vmatpush.msra.mxu0 0.0
      %1777 = vmatpush.msra.mxu0 0.0
      %1778 = vmatpush.msra.mxu0 0.0
      %1779 = vmatpush.msra.mxu0 0.0
      %1780 = vmatpush.msra.mxu0 0.0
      %1781 = vmatpush.msra.mxu0 0.0
      %1782 = vmatpush.msra.mxu0 0.0
      %1783 = vmatpush.msra.mxu0 0.0
      %1784 = vmatpush.msra.mxu0 0.0
      %1785 = vmatpush.msra.mxu0 %v1716
      %1786 = vmatpush.msra.mxu0 %v1715
      %1787 = vmatpush.msra.mxu0 %v1714
      %1788 = vmatpush.msra.mxu0 %v1713
      %1789 = vmatmul.f32.gmra.mxu0 %v1771
      %v1790 = vpop.f32.mrf.mxu0
      %v1791 = vadd.f32 %v1769, %v1790
      %1792 = vdwg.mxu0
      %v1793 = vmax.f32 %v1791, 0.0
      %v1794 = vperm.slane %v1736, 0
      %v1795 = vmul.f32 %v1793, %v1794
      %v1796 = vsel %vm214, %v1795, 0.0
      %1797 = vadd.xlane.f32.xlu0 %v1796
      %v1798 = vpop.xlane.xlu0 %1797
      %v1799 = vperm.slane %v1746, 0
      %v1800 = vadd.f32 %v1798, %v1799
      %v1801 = vsub.f32 %v1800, %v247
      %v1802 = vmul.f32 %v1801, %v1801
      %v1803 = vsel %vm251, %v1802, 0.0
      %1804 = vadd.xlane.f32.xlu0 %v1803
      %v1805 = vpop.xlane.xlu0 %1804
      %v1806 = vrot.slane %v1805, 4
      %v1807 = vadd.f32 %v1805, %v1806
      %v1808 = vrot.slane %v1807, 2
      %v1809 = vadd.f32 %v1807, %v1808
      %v1810 = vrot.slane %v1809, 1
      %v1811 = vadd.f32 %v1809, %v1810
      %s1812 = vtos %v1811
      %v1813 = vstv %s1812
      %v1814 = vmul.f32 %v1813, 0.125
      %1815 = vst.msk [vmem:[%s175] sm:$0x1] %vm264, %v1814
      %p1816 = scmp.lt.s32.totalorder %s15, 7
      %s1817 = scalar_select %p1816, %s15, 7
      %s1818 = scalar_lea.vmem %s2, %s1817
      %p1819 = scmp.lt.s32.totalorder %s15, 7
      %s1820 = scalar_select %p1819, %s15, 7
      %s1821 = scalar_lea.vmem %s3, %s1820
      // Predicated region
      $region29: #{meta_learner_regression_forward.1} parent=27 // pred_check
        %p1822 = pneg %p80
      $region30: #{meta_learner_regression_forward.1} parent=27 // pred_check_branch
        %1824 = sbr.rel (%p1822) target = $region32
      $region31: #{meta_learner_regression_forward.1} parent=27 // pred_region
        _
      $region32: #{meta_learner_regression_forward.1} parent=27 // pred_fallthru
        _
      // Predicated region
      $region33: #{meta_learner_regression_forward.1} parent=27 // pred_check
        %p1825 = pneg %p106
      $region34: #{meta_learner_regression_forward.1} parent=27 // pred_check_branch
        %1827 = sbr.rel (%p1825) target = $region36
      $region35: #{meta_learner_regression_forward.1} parent=27 // pred_region
        _
      $region36: #{meta_learner_regression_forward.1} parent=27 // pred_fallthru
        _
    $region28: #{meta_learner_regression_forward.1} parent=5 // pred_fallthru
      _
    %p1828 = scmp.le.s32.totalorder 2, %s10
    // Predicated region
    $region37: #{meta_learner_regression_forward.1} parent=5 // pred_check
      %p1829 = pneg %p1828
    $region38: #{meta_learner_regression_forward.1} parent=5 // pred_check_branch
      %1831 = sbr.rel (%p1829) target = $region40
    $region39: #{meta_learner_regression_forward.1} parent=5 // pred_region
      %s1832 = ssub.s32 %s10, 2
      // Predicated region
      $region41: #{meta_learner_regression_forward.1} parent=39 // pred_check
        %p1833 = pneg %p86
      $region42: #{meta_learner_regression_forward.1} parent=39 // pred_check_branch
        %1835 = sbr.rel (%p1833) target = $region44
      $region43: #{meta_learner_regression_forward.1} parent=39 // pred_region
        %p1836 = scmp.lt.s32.totalorder %s16, 7
        %s1837 = scalar_select %p1836, %s16, 7
        %s1838 = scalar_lea.vmem %s2, %s1837
      $region44: #{meta_learner_regression_forward.1} parent=39 // pred_fallthru
        _
      // Predicated region
      $region45: #{meta_learner_regression_forward.1} parent=39 // pred_check
        %p1839 = pneg %p112
      $region46: #{meta_learner_regression_forward.1} parent=39 // pred_check_branch
        %1841 = sbr.rel (%p1839) target = $region48
      $region47: #{meta_learner_regression_forward.1} parent=39 // pred_region
        %p1842 = scmp.lt.s32.totalorder %s16, 7
        %s1843 = scalar_select %p1842, %s16, 7
        %s1844 = scalar_lea.vmem %s3, %s1843
      $region48: #{meta_learner_regression_forward.1} parent=39 // pred_fallthru
        _
    $region40: #{meta_learner_regression_forward.1} parent=5 // pred_fallthru
      _
  $region6: #{meta_learner_regression_forward.1} parent=0 // loop_footer
    %s14 = sadd.s32 1, %s10
  $region7: #{meta_learner_regression_forward.1} parent=0 // loop_footer_branch
    %9 = sbr.rel target = $region3
  $region8: #{meta_learner_regression_forward.1} parent=0 // loop_exit
    _

</llo_original>
